<compile_context>
chip_gen: v6e
topology: v6e:2x2x1
jax: 0.10.0
libtpu: 0.0.40
codegen_flags: <defaults>
</compile_context>

<pallas_src>
import numpy as np
import jax
import jax.numpy as jnp
from jax import lax
from jax.experimental import pallas as pl
from jax.experimental.pallas import tpu as pltpu

EPS = 1e-5
K = 7          # triplet-attention conv kernel size
PAD = K // 2


# ---------------------------------- fused kernel ----------------------------------
def _fused_kernel(bias_ref, jblk_ref, mcw_ref, mhc_ref, rcw_ref, rhc_ref,
                  thw_ref, tcw_ref, thc_ref, w1_ref, b1_ref, x_ref,
                  o_ref, out_s):
    C, HW = out_s.shape
    H = rhc_ref.shape[0]
    W = rcw_ref.shape[0]
    inv_c = 1.0 / C

    # ---- flip-subtract: one full-width matmul with the block-diagonal lane-reversal ----
    x = x_ref[0]                                                          # (C, HW)
    d = x - jnp.dot(x, jblk_ref[...], preferred_element_type=jnp.float32)
    out_s[...] = d                                                        # single unmasked store

    # ---------------------------------- ZPools ----------------------------------
    # HW gate (pool over C), kept in flattened (1, HW) layout -> no in-kernel reshapes.
    max_hw = jnp.max(d, axis=0, keepdims=True)                            # (1, HW)
    mean_hw = jnp.sum(d, axis=0, keepdims=True) * inv_c                   # (1, HW)
    pooled_hw = jnp.concatenate([max_hw, mean_hw], axis=1)                # (1, 2*HW)

    # CW / HC mean pools as full-width matmuls with 0/1 operators.
    mean_cw = jnp.dot(d, mcw_ref[...], preferred_element_type=jnp.float32)    # (C, W)
    mean_hc = jnp.dot(d, mhc_ref[...], preferred_element_type=jnp.float32)    # (C, H)

    # CW / HC max pools: a single pass of loads over the h-blocks (no stores).
    lane_h = lax.broadcasted_iota(jnp.int32, (1, H), 1)
    blk0 = out_s[:, 0:W]
    max_cw = blk0
    max_hc = jnp.where(lane_h == 0, jnp.max(blk0, axis=1, keepdims=True), 0.0)
    for h in range(1, H):
        blk = out_s[:, h * W:(h + 1) * W]
        max_cw = jnp.maximum(max_cw, blk)
        max_hc = jnp.where(lane_h == h, jnp.max(blk, axis=1, keepdims=True), max_hc)

    pooled_cw = jnp.concatenate([max_cw, mean_cw], axis=1)                # (C, 2W)
    pooled_hc = jnp.concatenate([max_hc, mean_hc], axis=1)                # (C, 2H)

    # ------------------- 7x7 "same" convs (BN folded) + sigmoid -------------------
    # HW gate: flattened pooled map @ dense conv operator -> one matmul.
    pre_hw = jnp.dot(jnp.broadcast_to(pooled_hw, (8, 2 * HW)), thw_ref[...],
                     preferred_element_type=jnp.float32)
    s_hw = jax.nn.sigmoid(pre_hw[0:1, :] + bias_ref[0])                   # (1, HW)

    # CW / HC gates: zero-pad + 7 shifted copies stacked along lanes, then ONE matmul
    # against the stacked Toeplitz operator (contraction depth 14*Q).
    def gate_conv(pooled, t_ref, bias):
        P, two_q = pooled.shape
        zpad = jnp.zeros((PAD, two_q), jnp.float32)
        padded = jnp.concatenate([zpad, pooled, zpad], axis=0)            # (P + 6, 2Q)
        big = jnp.concatenate([padded[k:k + P, :] for k in range(K)], axis=1)  # (P, 14Q)
        return jax.nn.sigmoid(
            jnp.dot(big, t_ref[...], preferred_element_type=jnp.float32) + bias)

    s_cw = gate_conv(pooled_cw, tcw_ref, bias_ref[1])                     # (C, W)
    s_hc = gate_conv(pooled_hc, thc_ref, bias_ref[2])                     # (C, H)

    # ---------------- full-width gating (1/3 average folded into w1) ----------------
    g = (s_hw
         + jnp.dot(s_cw, rcw_ref[...], preferred_element_type=jnp.float32)
         + jnp.dot(s_hc, rhc_ref[...], preferred_element_type=jnp.float32))   # (C, HW)
    att = out_s[...] * g

    # -------------- 1x1 conv (BN1 scale folded) + bias + ReLU + residual --------------
    y = jnp.dot(w1_ref[...], att, preferred_element_type=jnp.float32) + b1_ref[...]
    o_ref[0] = (x_ref[0] + jnp.maximum(y, 0.0)).astype(o_ref.dtype)


# ------------------------------- operator construction -------------------------------
def _toeplitz_stack(w_rows, Q):
    # T[k][j, q] = w_rows[k, j - q + PAD] inside the kernel support, 0 outside (== zero pad).
    q = np.arange(Q)
    dmat = q[:, None] - q[None, :] + PAD
    valid = jnp.asarray((dmat >= 0) & (dmat < K))
    dc = np.clip(dmat, 0, K - 1)
    return jnp.where(valid[None, :, :], w_rows[:, dc], 0.0).astype(jnp.float32)


def _fold_gate_bn(gate_params):
    w, gamma, beta, rm, rv = gate_params
    s = gamma / jnp.sqrt(rv + EPS)                         # BN fold (single output channel)
    w_eff = (w[0] * s).astype(jnp.float32)                 # (2, K, K): [max-ch, mean-ch]
    b_eff = (beta - rm * s)[0].astype(jnp.float32)
    return w_eff, b_eff


def _stacked_gate_operator(gate_params, Q, transpose_kernel):
    # Stacked Toeplitz operator (K*2Q, Q); rows grouped by tap k, within a tap [max; mean].
    w_eff, b_eff = _fold_gate_bn(gate_params)
    if transpose_kernel:                                   # HC gate works in (C, H) orientation
        w_eff = jnp.transpose(w_eff, (0, 2, 1))
    tmax = _toeplitz_stack(w_eff[0], Q)                    # (K, Q, Q)
    tmean = _toeplitz_stack(w_eff[1], Q)
    t_full = jnp.concatenate([tmax, tmean], axis=1).reshape(K * 2 * Q, Q)
    return t_full, b_eff


def _hw_gate_operator(gate_params, H, W):
    # Dense operator for the full 7x7 "same" conv on the (H, W) map, acting on the
    # flattened pooled map [max | mean] of shape (1, 2*H*W):
    #   T[ch*HW + h'*W + w', h*W + w] = w_eff[ch, h'-h+PAD, w'-w+PAD]   (0 outside support)
    w_eff, b_eff = _fold_gate_bn(gate_params)
    HW = H * W
    hh, ww = np.arange(H), np.arange(W)
    dp = hh[:, None] - hh[None, :] + PAD                   # (h', h)
    dq = ww[:, None] - ww[None, :] + PAD                   # (w', w)
    vp = (dp >= 0) & (dp < K)
    vq = (dq >= 0) & (dq < K)
    dpc, dqc = np.clip(dp, 0, K - 1), np.clip(dq, 0, K - 1)
    flat_idx = (dpc[:, None, :, None] * K
                + dqc[None, :, None, :]).reshape(HW, HW).astype(np.int32)
    valid = jnp.asarray((vp[:, None, :, None] & vq[None, :, None, :]).reshape(HW, HW))
    ops = [jnp.where(valid, w_eff[ch].reshape(-1)[flat_idx], 0.0) for ch in range(2)]
    return jnp.concatenate(ops, axis=0).astype(jnp.float32), b_eff


# ---------------------------------- full forward ----------------------------------
def res_ta_forward(x, params):
    B, C, H, W = x.shape
    HW = H * W

    # structural 0/1 operators (constants)
    eye_w = np.eye(W, dtype=np.float32)
    eye_h = np.eye(H, dtype=np.float32)
    jblk = jnp.asarray(np.kron(eye_h, eye_w[::-1].copy()))                # (HW, HW) W-flip
    mcw = jnp.asarray(np.tile(eye_w, (H, 1)) / H)                         # (HW, W) mean over H
    mhc = jnp.asarray(np.kron(eye_h, np.ones((W, 1), np.float32)) / W)    # (HW, H) mean over W
    rcw = jnp.asarray(np.tile(eye_w, (1, H)))                             # (W, HW) replicate H
    rhc = jnp.asarray(np.kron(eye_h, np.ones((1, W), np.float32)))        # (H, HW) replicate W

    # gate conv operators (conv + BN folded)
    thw, b_hw = _hw_gate_operator(params["hw"], H, W)                     # (2HW, HW)
    tcw, b_cw = _stacked_gate_operator(params["cw"], W, False)            # (14W, W)
    thc, b_hc = _stacked_gate_operator(params["hc"], H, True)             # (14H, H)
    bias = jnp.stack([b_hw, b_cw, b_hc]).astype(jnp.float32)              # (3,)

    # 1x1 conv with BN1 scale and the 1/3 gate average folded in
    g1, bt1, rm1, rv1 = params["bn1"]
    s1 = g1 / jnp.sqrt(rv1 + EPS)
    w1 = (params["conv1_w"] * (s1 / 3.0)[:, None]).astype(jnp.float32)    # (C, C)
    b1 = (bt1 - rm1 * s1).reshape(C, 1).astype(jnp.float32)

    x2 = x.reshape(B, C, HW)                                              # lane-dense view

    out2 = pl.pallas_call(
        _fused_kernel,
        out_shape=jax.ShapeDtypeStruct((B, C, HW), x.dtype),
        grid=(B,),
        in_specs=[
            pl.BlockSpec(memory_space=pltpu.MemorySpace.SMEM),            # gate biases (3,)
            pl.BlockSpec((HW, HW), lambda b: (0, 0)),                     # flip matrix
            pl.BlockSpec((HW, W), lambda b: (0, 0)),                      # mean-over-H operator
            pl.BlockSpec((HW, H), lambda b: (0, 0)),                      # mean-over-W operator
            pl.BlockSpec((W, HW), lambda b: (0, 0)),                      # replicate-over-H op
            pl.BlockSpec((H, HW), lambda b: (0, 0)),                      # replicate-over-W op
            pl.BlockSpec((2 * HW, HW), lambda b: (0, 0)),                 # HW-gate conv operator
            pl.BlockSpec((K * 2 * W, W), lambda b: (0, 0)),               # CW-gate stacked Toeplitz
            pl.BlockSpec((K * 2 * H, H), lambda b: (0, 0)),               # HC-gate stacked Toeplitz
            pl.BlockSpec((C, C), lambda b: (0, 0)),                       # folded 1x1 weight
            pl.BlockSpec((C, 1), lambda b: (0, 0)),                       # folded BN1 bias
            pl.BlockSpec((1, C, HW), lambda b: (b, 0, 0)),                # x (lane-dense)
        ],
        out_specs=pl.BlockSpec((1, C, HW), lambda b: (b, 0, 0)),
        scratch_shapes=[pltpu.VMEM((C, HW), jnp.float32)],                # flip-diff buffer
        compiler_params=pltpu.CompilerParams(dimension_semantics=("parallel",)),
    )(bias, jblk, mcw, mhc, rcw, rhc, thw, tcw, thc, w1, b1, x2)
    # TODO(synk): DropPath(p=0.2) and BatchNorm batch-statistics are training-time stochastic;
    # implemented with inference semantics (DropPath = identity, BN uses running stats).
    return out2.reshape(B, C, H, W)


# ---------------------------- deterministic parameter init ----------------------------
def init_params(key, C):
    ks = jax.random.split(key, 8)

    def gate_params(k):
        k1, k2, k3, k4, k5 = jax.random.split(k, 5)
        w = jax.random.normal(k1, (1, 2, 7, 7), jnp.float32) * 0.1
        gamma = 1.0 + 0.1 * jax.random.normal(k2, (1,), jnp.float32)
        beta = 0.1 * jax.random.normal(k3, (1,), jnp.float32)
        rm = 0.1 * jax.random.normal(k4, (1,), jnp.float32)
        rv = 1.0 + 0.1 * jax.random.uniform(k5, (1,), jnp.float32)
        return (w, gamma, beta, rm, rv)

    conv1_w = jax.random.normal(ks[0], (C, C), jnp.float32) * (1.0 / np.sqrt(C))
    g1 = 1.0 + 0.1 * jax.random.normal(ks[1], (C,), jnp.float32)
    b1 = 0.1 * jax.random.normal(ks[2], (C,), jnp.float32)
    rm1 = 0.1 * jax.random.normal(ks[3], (C,), jnp.float32)
    rv1 = 1.0 + 0.1 * jax.random.uniform(ks[4], (C,), jnp.float32)
    return dict(hw=gate_params(ks[5]), cw=gate_params(ks[6]), hc=gate_params(ks[7]),
                conv1_w=conv1_w, bn1=(g1, b1, rm1, rv1))


# ---------------------------- pure-JAX reference (correctness) ----------------------------
def reference_forward(x, params):
    out = x - x[:, :, :, ::-1]

    def gate(z, w, gamma, beta, rm, rv):
        pool = jnp.concatenate([jnp.max(z, axis=1, keepdims=True),
                                jnp.mean(z, axis=1, keepdims=True)], axis=1)
        y = lax.conv_general_dilated(pool, w, (1, 1), ((3, 3), (3, 3)),
                                     dimension_numbers=("NCHW", "OIHW", "NCHW"))
        y = gamma.reshape(1, 1, 1, 1) * (y - rm.reshape(1, 1, 1, 1)) \
            / jnp.sqrt(rv.reshape(1, 1, 1, 1) + EPS) + beta.reshape(1, 1, 1, 1)
        return z * jax.nn.sigmoid(y)

    o_hw = gate(out, *params["hw"])
    o_cw = jnp.transpose(gate(jnp.transpose(out, (0, 2, 1, 3)), *params["cw"]), (0, 2, 1, 3))
    o_hc = jnp.transpose(gate(jnp.transpose(out, (0, 3, 2, 1)), *params["hc"]), (0, 3, 2, 1))
    att = (o_hw + o_cw + o_hc) / 3.0
    g1, b1, rm1, rv1 = params["bn1"]
    y = jnp.einsum("nchw,oc->nohw", att, params["conv1_w"])
    y = (g1 / jnp.sqrt(rv1 + EPS))[None, :, None, None] * (y - rm1[None, :, None, None]) \
        + b1[None, :, None, None]
    y = jnp.maximum(y, 0.0)
    return x + y


if __name__ == "__main__":
    B, C, H, W = 2, 32, 16, 16
    key = jax.random.PRNGKey(0)
    kx, kp = jax.random.split(key)
    x = jax.random.normal(kx, (B, C, H, W), jnp.float32)
    params = init_params(kp, C)

    out = jax.jit(res_ta_forward)(x, params)
    out = jax.block_until_ready(out)

    ref = reference_forward(x, params)
    np.testing.assert_allclose(np.asarray(out), np.asarray(ref), rtol=1e-4, atol=1e-4)
    print("KERNEL_OK")
</pallas_src>

<mosaic_0001>
module attributes {stable_mosaic.version = 11 : i64} {
  func.func @_fused_kernel(%arg0: i32, %arg1: memref<3xf32, #tpu.memory_space<smem>>, %arg2: memref<256x256xf32, #tpu.memory_space<vmem>>, %arg3: memref<256x16xf32, #tpu.memory_space<vmem>>, %arg4: memref<256x16xf32, #tpu.memory_space<vmem>>, %arg5: memref<16x256xf32, #tpu.memory_space<vmem>>, %arg6: memref<16x256xf32, #tpu.memory_space<vmem>>, %arg7: memref<512x256xf32, #tpu.memory_space<vmem>>, %arg8: memref<224x16xf32, #tpu.memory_space<vmem>>, %arg9: memref<224x16xf32, #tpu.memory_space<vmem>>, %arg10: memref<32x32xf32, #tpu.memory_space<vmem>>, %arg11: memref<32x1xf32, #tpu.memory_space<vmem>>, %arg12: memref<1x32x256xf32, #tpu.memory_space<vmem>>, %arg13: memref<1x32x256xf32, #tpu.memory_space<vmem>>, %arg14: memref<32x256xf32, #tpu.memory_space<vmem>>) attributes {dimension_semantics = [#tpu.dimension_semantics<parallel>], iteration_bounds = array<i64: 2>, scalar_prefetch = 0 : i64, scratch_operands = 1 : i64, tpu.core_type = #tpu.core_type<tc>, window_params = [{transform_indices = @transform_0, window_bounds = array<i64: 3>}, {pipeline_mode = #tpu.pipeline_mode<synchronous>, transform_indices = @transform_1, window_bounds = array<i64: 256, 256>}, {pipeline_mode = #tpu.pipeline_mode<synchronous>, transform_indices = @transform_2, window_bounds = array<i64: 256, 16>}, {pipeline_mode = #tpu.pipeline_mode<synchronous>, transform_indices = @transform_3, window_bounds = array<i64: 256, 16>}, {pipeline_mode = #tpu.pipeline_mode<synchronous>, transform_indices = @transform_4, window_bounds = array<i64: 16, 256>}, {pipeline_mode = #tpu.pipeline_mode<synchronous>, transform_indices = @transform_5, window_bounds = array<i64: 16, 256>}, {pipeline_mode = #tpu.pipeline_mode<synchronous>, transform_indices = @transform_6, window_bounds = array<i64: 512, 256>}, {pipeline_mode = #tpu.pipeline_mode<synchronous>, transform_indices = @transform_7, window_bounds = array<i64: 224, 16>}, {pipeline_mode = #tpu.pipeline_mode<synchronous>, transform_indices = @transform_8, window_bounds = array<i64: 224, 16>}, {pipeline_mode = #tpu.pipeline_mode<synchronous>, transform_indices = @transform_9, window_bounds = array<i64: 32, 32>}, {pipeline_mode = #tpu.pipeline_mode<synchronous>, transform_indices = @transform_10, window_bounds = array<i64: 32, 1>}, {transform_indices = @transform_11, window_bounds = array<i64: 1, 32, 256>}, {transform_indices = @transform_12, window_bounds = array<i64: 1, 32, 256>}]} {
    %c0 = arith.constant 0 : index
    %c0_0 = arith.constant 0 : index
    %c0_1 = arith.constant 0 : index
    %0 = vector.load %arg12[%c0, %c0_0, %c0_1] : memref<1x32x256xf32, #tpu.memory_space<vmem>>, vector<1x32x256xf32>
    %1 = vector.shape_cast %0 : vector<1x32x256xf32> to vector<32x256xf32>
    %c0_2 = arith.constant 0 : index
    %c0_3 = arith.constant 0 : index
    %2 = vector.load %arg2[%c0_2, %c0_3] : memref<256x256xf32, #tpu.memory_space<vmem>>, vector<256x256xf32>
    %cst = arith.constant dense<0.000000e+00> : vector<32x256xf32>
    %3 = tpu.matmul %1, %2, %cst {dimension_numbers = #tpu.dot_dimension_numbers<[1], [0], [0], [1], [0, 0, 1, 1], [], []>} : vector<32x256xf32>, vector<256x256xf32>, vector<32x256xf32> -> vector<32x256xf32>
    %4 = arith.subf %1, %3 : vector<32x256xf32>
    %c0_4 = arith.constant 0 : index
    %c0_5 = arith.constant 0 : index
    %5 = vector.load %arg14[%c0_4, %c0_5] : memref<32x256xf32, #tpu.memory_space<vmem>>, vector<32x256xf32>
    tpu.vector_store %arg14[%c0_4, %c0_5], %4 {strides = array<i32>} : memref<32x256xf32, #tpu.memory_space<vmem>>, vector<32x256xf32>,
    %cst_6 = arith.constant dense<0xFF800000> : vector<256xf32>
    %6 = vector.multi_reduction <maximumf>, %4, %cst_6 [0] : vector<32x256xf32> to vector<256xf32>
    %7 = vector.shape_cast %6 : vector<256xf32> to vector<1x256xf32>
    %cst_7 = arith.constant dense<0.000000e+00> : vector<256xf32>
    %8 = vector.multi_reduction <add>, %4, %cst_7 [0] : vector<32x256xf32> to vector<256xf32>
    %9 = vector.shape_cast %8 : vector<256xf32> to vector<1x256xf32>
    %cst_8 = arith.constant 3.125000e-02 : f32
    %10 = vector.broadcast %cst_8 : f32 to vector<1x256xf32>
    %11 = arith.mulf %9, %10 : vector<1x256xf32>
    %12 = tpu.concatenate %7, %11 in 1 : vector<1x256xf32>, vector<1x256xf32> -> vector<1x512xf32>
    %c0_9 = arith.constant 0 : index
    %c0_10 = arith.constant 0 : index
    %13 = vector.load %arg3[%c0_9, %c0_10] : memref<256x16xf32, #tpu.memory_space<vmem>>, vector<256x16xf32>
    %cst_11 = arith.constant dense<0.000000e+00> : vector<32x16xf32>
    %14 = tpu.matmul %4, %13, %cst_11 {dimension_numbers = #tpu.dot_dimension_numbers<[1], [0], [0], [1], [0, 0, 1, 1], [], []>} : vector<32x256xf32>, vector<256x16xf32>, vector<32x16xf32> -> vector<32x16xf32>
    %c0_12 = arith.constant 0 : index
    %c0_13 = arith.constant 0 : index
    %15 = vector.load %arg4[%c0_12, %c0_13] : memref<256x16xf32, #tpu.memory_space<vmem>>, vector<256x16xf32>
    %cst_14 = arith.constant dense<0.000000e+00> : vector<32x16xf32>
    %16 = tpu.matmul %4, %15, %cst_14 {dimension_numbers = #tpu.dot_dimension_numbers<[1], [0], [0], [1], [0, 0, 1, 1], [], []>} : vector<32x256xf32>, vector<256x16xf32>, vector<32x16xf32> -> vector<32x16xf32>
    %17 = tpu.iota {dimensions = array<i32: 1>} : vector<1x16xi32>
    %c0_15 = arith.constant 0 : index
    %c0_16 = arith.constant 0 : index
    %18 = vector.load %arg14[%c0_15, %c0_16] : memref<32x256xf32, #tpu.memory_space<vmem>>, vector<32x16xf32>
    %c0_i32 = arith.constant 0 : i32
    %19 = vector.broadcast %c0_i32 : i32 to vector<1x16xi32>
    %20 = arith.cmpi eq, %17, %19 : vector<1x16xi32>
    %cst_17 = arith.constant dense<0xFF800000> : vector<32xf32>
    %21 = vector.multi_reduction <maximumf>, %18, %cst_17 [1] : vector<32x16xf32> to vector<32xf32>
    %22 = vector.shape_cast %21 : vector<32xf32> to vector<32x1xf32>
    %cst_18 = arith.constant 0.000000e+00 : f32
    %23 = vector.shape_cast %20 : vector<1x16xi1> to vector<1x16xi1>
    %24 = vector.broadcast %23 : vector<1x16xi1> to vector<32x16xi1>
    %25 = vector.shape_cast %22 : vector<32x1xf32> to vector<32x1xf32>
    %26 = vector.broadcast %25 : vector<32x1xf32> to vector<32x16xf32>
    %27 = vector.broadcast %cst_18 : f32 to vector<32x16xf32>
    %28 = arith.select %24, %26, %27 : vector<32x16xi1>, vector<32x16xf32>
    %c0_19 = arith.constant 0 : index
    %c16 = arith.constant 16 : index
    %29 = vector.load %arg14[%c0_19, %c16] : memref<32x256xf32, #tpu.memory_space<vmem>>, vector<32x16xf32>
    %30 = arith.maximumf %18, %29 : vector<32x16xf32>
    %c1_i32 = arith.constant 1 : i32
    %31 = vector.broadcast %c1_i32 : i32 to vector<1x16xi32>
    %32 = arith.cmpi eq, %17, %31 : vector<1x16xi32>
    %cst_20 = arith.constant dense<0xFF800000> : vector<32xf32>
    %33 = vector.multi_reduction <maximumf>, %29, %cst_20 [1] : vector<32x16xf32> to vector<32xf32>
    %34 = vector.shape_cast %33 : vector<32xf32> to vector<32x1xf32>
    %35 = vector.shape_cast %32 : vector<1x16xi1> to vector<1x16xi1>
    %36 = vector.broadcast %35 : vector<1x16xi1> to vector<32x16xi1>
    %37 = vector.shape_cast %34 : vector<32x1xf32> to vector<32x1xf32>
    %38 = vector.broadcast %37 : vector<32x1xf32> to vector<32x16xf32>
    %39 = arith.select %36, %38, %28 : vector<32x16xi1>, vector<32x16xf32>
    %c0_21 = arith.constant 0 : index
    %c32 = arith.constant 32 : index
    %40 = vector.load %arg14[%c0_21, %c32] : memref<32x256xf32, #tpu.memory_space<vmem>>, vector<32x16xf32>
    %41 = arith.maximumf %30, %40 : vector<32x16xf32>
    %c2_i32 = arith.constant 2 : i32
    %42 = vector.broadcast %c2_i32 : i32 to vector<1x16xi32>
    %43 = arith.cmpi eq, %17, %42 : vector<1x16xi32>
    %cst_22 = arith.constant dense<0xFF800000> : vector<32xf32>
    %44 = vector.multi_reduction <maximumf>, %40, %cst_22 [1] : vector<32x16xf32> to vector<32xf32>
    %45 = vector.shape_cast %44 : vector<32xf32> to vector<32x1xf32>
    %46 = vector.shape_cast %43 : vector<1x16xi1> to vector<1x16xi1>
    %47 = vector.broadcast %46 : vector<1x16xi1> to vector<32x16xi1>
    %48 = vector.shape_cast %45 : vector<32x1xf32> to vector<32x1xf32>
    %49 = vector.broadcast %48 : vector<32x1xf32> to vector<32x16xf32>
    %50 = arith.select %47, %49, %39 : vector<32x16xi1>, vector<32x16xf32>
    %c0_23 = arith.constant 0 : index
    %c48 = arith.constant 48 : index
    %51 = vector.load %arg14[%c0_23, %c48] : memref<32x256xf32, #tpu.memory_space<vmem>>, vector<32x16xf32>
    %52 = arith.maximumf %41, %51 : vector<32x16xf32>
    %c3_i32 = arith.constant 3 : i32
    %53 = vector.broadcast %c3_i32 : i32 to vector<1x16xi32>
    %54 = arith.cmpi eq, %17, %53 : vector<1x16xi32>
    %cst_24 = arith.constant dense<0xFF800000> : vector<32xf32>
    %55 = vector.multi_reduction <maximumf>, %51, %cst_24 [1] : vector<32x16xf32> to vector<32xf32>
    %56 = vector.shape_cast %55 : vector<32xf32> to vector<32x1xf32>
    %57 = vector.shape_cast %54 : vector<1x16xi1> to vector<1x16xi1>
    %58 = vector.broadcast %57 : vector<1x16xi1> to vector<32x16xi1>
    %59 = vector.shape_cast %56 : vector<32x1xf32> to vector<32x1xf32>
    %60 = vector.broadcast %59 : vector<32x1xf32> to vector<32x16xf32>
    %61 = arith.select %58, %60, %50 : vector<32x16xi1>, vector<32x16xf32>
    %c0_25 = arith.constant 0 : index
    %c64 = arith.constant 64 : index
    %62 = vector.load %arg14[%c0_25, %c64] : memref<32x256xf32, #tpu.memory_space<vmem>>, vector<32x16xf32>
    %63 = arith.maximumf %52, %62 : vector<32x16xf32>
    %c4_i32 = arith.constant 4 : i32
    %64 = vector.broadcast %c4_i32 : i32 to vector<1x16xi32>
    %65 = arith.cmpi eq, %17, %64 : vector<1x16xi32>
    %cst_26 = arith.constant dense<0xFF800000> : vector<32xf32>
    %66 = vector.multi_reduction <maximumf>, %62, %cst_26 [1] : vector<32x16xf32> to vector<32xf32>
    %67 = vector.shape_cast %66 : vector<32xf32> to vector<32x1xf32>
    %68 = vector.shape_cast %65 : vector<1x16xi1> to vector<1x16xi1>
    %69 = vector.broadcast %68 : vector<1x16xi1> to vector<32x16xi1>
    %70 = vector.shape_cast %67 : vector<32x1xf32> to vector<32x1xf32>
    %71 = vector.broadcast %70 : vector<32x1xf32> to vector<32x16xf32>
    %72 = arith.select %69, %71, %61 : vector<32x16xi1>, vector<32x16xf32>
    %c0_27 = arith.constant 0 : index
    %c80 = arith.constant 80 : index
    %73 = vector.load %arg14[%c0_27, %c80] : memref<32x256xf32, #tpu.memory_space<vmem>>, vector<32x16xf32>
    %74 = arith.maximumf %63, %73 : vector<32x16xf32>
    %c5_i32 = arith.constant 5 : i32
    %75 = vector.broadcast %c5_i32 : i32 to vector<1x16xi32>
    %76 = arith.cmpi eq, %17, %75 : vector<1x16xi32>
    %cst_28 = arith.constant dense<0xFF800000> : vector<32xf32>
    %77 = vector.multi_reduction <maximumf>, %73, %cst_28 [1] : vector<32x16xf32> to vector<32xf32>
    %78 = vector.shape_cast %77 : vector<32xf32> to vector<32x1xf32>
    %79 = vector.shape_cast %76 : vector<1x16xi1> to vector<1x16xi1>
    %80 = vector.broadcast %79 : vector<1x16xi1> to vector<32x16xi1>
    %81 = vector.shape_cast %78 : vector<32x1xf32> to vector<32x1xf32>
    %82 = vector.broadcast %81 : vector<32x1xf32> to vector<32x16xf32>
    %83 = arith.select %80, %82, %72 : vector<32x16xi1>, vector<32x16xf32>
    %c0_29 = arith.constant 0 : index
    %c96 = arith.constant 96 : index
    %84 = vector.load %arg14[%c0_29, %c96] : memref<32x256xf32, #tpu.memory_space<vmem>>, vector<32x16xf32>
    %85 = arith.maximumf %74, %84 : vector<32x16xf32>
    %c6_i32 = arith.constant 6 : i32
    %86 = vector.broadcast %c6_i32 : i32 to vector<1x16xi32>
    %87 = arith.cmpi eq, %17, %86 : vector<1x16xi32>
    %cst_30 = arith.constant dense<0xFF800000> : vector<32xf32>
    %88 = vector.multi_reduction <maximumf>, %84, %cst_30 [1] : vector<32x16xf32> to vector<32xf32>
    %89 = vector.shape_cast %88 : vector<32xf32> to vector<32x1xf32>
    %90 = vector.shape_cast %87 : vector<1x16xi1> to vector<1x16xi1>
    %91 = vector.broadcast %90 : vector<1x16xi1> to vector<32x16xi1>
    %92 = vector.shape_cast %89 : vector<32x1xf32> to vector<32x1xf32>
    %93 = vector.broadcast %92 : vector<32x1xf32> to vector<32x16xf32>
    %94 = arith.select %91, %93, %83 : vector<32x16xi1>, vector<32x16xf32>
    %c0_31 = arith.constant 0 : index
    %c112 = arith.constant 112 : index
    %95 = vector.load %arg14[%c0_31, %c112] : memref<32x256xf32, #tpu.memory_space<vmem>>, vector<32x16xf32>
    %96 = arith.maximumf %85, %95 : vector<32x16xf32>
    %c7_i32 = arith.constant 7 : i32
    %97 = vector.broadcast %c7_i32 : i32 to vector<1x16xi32>
    %98 = arith.cmpi eq, %17, %97 : vector<1x16xi32>
    %cst_32 = arith.constant dense<0xFF800000> : vector<32xf32>
    %99 = vector.multi_reduction <maximumf>, %95, %cst_32 [1] : vector<32x16xf32> to vector<32xf32>
    %100 = vector.shape_cast %99 : vector<32xf32> to vector<32x1xf32>
    %101 = vector.shape_cast %98 : vector<1x16xi1> to vector<1x16xi1>
    %102 = vector.broadcast %101 : vector<1x16xi1> to vector<32x16xi1>
    %103 = vector.shape_cast %100 : vector<32x1xf32> to vector<32x1xf32>
    %104 = vector.broadcast %103 : vector<32x1xf32> to vector<32x16xf32>
    %105 = arith.select %102, %104, %94 : vector<32x16xi1>, vector<32x16xf32>
    %c0_33 = arith.constant 0 : index
    %c128 = arith.constant 128 : index
    %106 = vector.load %arg14[%c0_33, %c128] : memref<32x256xf32, #tpu.memory_space<vmem>>, vector<32x16xf32>
    %107 = arith.maximumf %96, %106 : vector<32x16xf32>
    %c8_i32 = arith.constant 8 : i32
    %108 = vector.broadcast %c8_i32 : i32 to vector<1x16xi32>
    %109 = arith.cmpi eq, %17, %108 : vector<1x16xi32>
    %cst_34 = arith.constant dense<0xFF800000> : vector<32xf32>
    %110 = vector.multi_reduction <maximumf>, %106, %cst_34 [1] : vector<32x16xf32> to vector<32xf32>
    %111 = vector.shape_cast %110 : vector<32xf32> to vector<32x1xf32>
    %112 = vector.shape_cast %109 : vector<1x16xi1> to vector<1x16xi1>
    %113 = vector.broadcast %112 : vector<1x16xi1> to vector<32x16xi1>
    %114 = vector.shape_cast %111 : vector<32x1xf32> to vector<32x1xf32>
    %115 = vector.broadcast %114 : vector<32x1xf32> to vector<32x16xf32>
    %116 = arith.select %113, %115, %105 : vector<32x16xi1>, vector<32x16xf32>
    %c0_35 = arith.constant 0 : index
    %c144 = arith.constant 144 : index
    %117 = vector.load %arg14[%c0_35, %c144] : memref<32x256xf32, #tpu.memory_space<vmem>>, vector<32x16xf32>
    %118 = arith.maximumf %107, %117 : vector<32x16xf32>
    %c9_i32 = arith.constant 9 : i32
    %119 = vector.broadcast %c9_i32 : i32 to vector<1x16xi32>
    %120 = arith.cmpi eq, %17, %119 : vector<1x16xi32>
    %cst_36 = arith.constant dense<0xFF800000> : vector<32xf32>
    %121 = vector.multi_reduction <maximumf>, %117, %cst_36 [1] : vector<32x16xf32> to vector<32xf32>
    %122 = vector.shape_cast %121 : vector<32xf32> to vector<32x1xf32>
    %123 = vector.shape_cast %120 : vector<1x16xi1> to vector<1x16xi1>
    %124 = vector.broadcast %123 : vector<1x16xi1> to vector<32x16xi1>
    %125 = vector.shape_cast %122 : vector<32x1xf32> to vector<32x1xf32>
    %126 = vector.broadcast %125 : vector<32x1xf32> to vector<32x16xf32>
    %127 = arith.select %124, %126, %116 : vector<32x16xi1>, vector<32x16xf32>
    %c0_37 = arith.constant 0 : index
    %c160 = arith.constant 160 : index
    %128 = vector.load %arg14[%c0_37, %c160] : memref<32x256xf32, #tpu.memory_space<vmem>>, vector<32x16xf32>
    %129 = arith.maximumf %118, %128 : vector<32x16xf32>
    %c10_i32 = arith.constant 10 : i32
    %130 = vector.broadcast %c10_i32 : i32 to vector<1x16xi32>
    %131 = arith.cmpi eq, %17, %130 : vector<1x16xi32>
    %cst_38 = arith.constant dense<0xFF800000> : vector<32xf32>
    %132 = vector.multi_reduction <maximumf>, %128, %cst_38 [1] : vector<32x16xf32> to vector<32xf32>
    %133 = vector.shape_cast %132 : vector<32xf32> to vector<32x1xf32>
    %134 = vector.shape_cast %131 : vector<1x16xi1> to vector<1x16xi1>
    %135 = vector.broadcast %134 : vector<1x16xi1> to vector<32x16xi1>
    %136 = vector.shape_cast %133 : vector<32x1xf32> to vector<32x1xf32>
    %137 = vector.broadcast %136 : vector<32x1xf32> to vector<32x16xf32>
    %138 = arith.select %135, %137, %127 : vector<32x16xi1>, vector<32x16xf32>
    %c0_39 = arith.constant 0 : index
    %c176 = arith.constant 176 : index
    %139 = vector.load %arg14[%c0_39, %c176] : memref<32x256xf32, #tpu.memory_space<vmem>>, vector<32x16xf32>
    %140 = arith.maximumf %129, %139 : vector<32x16xf32>
    %c11_i32 = arith.constant 11 : i32
    %141 = vector.broadcast %c11_i32 : i32 to vector<1x16xi32>
    %142 = arith.cmpi eq, %17, %141 : vector<1x16xi32>
    %cst_40 = arith.constant dense<0xFF800000> : vector<32xf32>
    %143 = vector.multi_reduction <maximumf>, %139, %cst_40 [1] : vector<32x16xf32> to vector<32xf32>
    %144 = vector.shape_cast %143 : vector<32xf32> to vector<32x1xf32>
    %145 = vector.shape_cast %142 : vector<1x16xi1> to vector<1x16xi1>
    %146 = vector.broadcast %145 : vector<1x16xi1> to vector<32x16xi1>
    %147 = vector.shape_cast %144 : vector<32x1xf32> to vector<32x1xf32>
    %148 = vector.broadcast %147 : vector<32x1xf32> to vector<32x16xf32>
    %149 = arith.select %146, %148, %138 : vector<32x16xi1>, vector<32x16xf32>
    %c0_41 = arith.constant 0 : index
    %c192 = arith.constant 192 : index
    %150 = vector.load %arg14[%c0_41, %c192] : memref<32x256xf32, #tpu.memory_space<vmem>>, vector<32x16xf32>
    %151 = arith.maximumf %140, %150 : vector<32x16xf32>
    %c12_i32 = arith.constant 12 : i32
    %152 = vector.broadcast %c12_i32 : i32 to vector<1x16xi32>
    %153 = arith.cmpi eq, %17, %152 : vector<1x16xi32>
    %cst_42 = arith.constant dense<0xFF800000> : vector<32xf32>
    %154 = vector.multi_reduction <maximumf>, %150, %cst_42 [1] : vector<32x16xf32> to vector<32xf32>
    %155 = vector.shape_cast %154 : vector<32xf32> to vector<32x1xf32>
    %156 = vector.shape_cast %153 : vector<1x16xi1> to vector<1x16xi1>
    %157 = vector.broadcast %156 : vector<1x16xi1> to vector<32x16xi1>
    %158 = vector.shape_cast %155 : vector<32x1xf32> to vector<32x1xf32>
    %159 = vector.broadcast %158 : vector<32x1xf32> to vector<32x16xf32>
    %160 = arith.select %157, %159, %149 : vector<32x16xi1>, vector<32x16xf32>
    %c0_43 = arith.constant 0 : index
    %c208 = arith.constant 208 : index
    %161 = vector.load %arg14[%c0_43, %c208] : memref<32x256xf32, #tpu.memory_space<vmem>>, vector<32x16xf32>
    %162 = arith.maximumf %151, %161 : vector<32x16xf32>
    %c13_i32 = arith.constant 13 : i32
    %163 = vector.broadcast %c13_i32 : i32 to vector<1x16xi32>
    %164 = arith.cmpi eq, %17, %163 : vector<1x16xi32>
    %cst_44 = arith.constant dense<0xFF800000> : vector<32xf32>
    %165 = vector.multi_reduction <maximumf>, %161, %cst_44 [1] : vector<32x16xf32> to vector<32xf32>
    %166 = vector.shape_cast %165 : vector<32xf32> to vector<32x1xf32>
    %167 = vector.shape_cast %164 : vector<1x16xi1> to vector<1x16xi1>
    %168 = vector.broadcast %167 : vector<1x16xi1> to vector<32x16xi1>
    %169 = vector.shape_cast %166 : vector<32x1xf32> to vector<32x1xf32>
    %170 = vector.broadcast %169 : vector<32x1xf32> to vector<32x16xf32>
    %171 = arith.select %168, %170, %160 : vector<32x16xi1>, vector<32x16xf32>
    %c0_45 = arith.constant 0 : index
    %c224 = arith.constant 224 : index
    %172 = vector.load %arg14[%c0_45, %c224] : memref<32x256xf32, #tpu.memory_space<vmem>>, vector<32x16xf32>
    %173 = arith.maximumf %162, %172 : vector<32x16xf32>
    %c14_i32 = arith.constant 14 : i32
    %174 = vector.broadcast %c14_i32 : i32 to vector<1x16xi32>
    %175 = arith.cmpi eq, %17, %174 : vector<1x16xi32>
    %cst_46 = arith.constant dense<0xFF800000> : vector<32xf32>
    %176 = vector.multi_reduction <maximumf>, %172, %cst_46 [1] : vector<32x16xf32> to vector<32xf32>
    %177 = vector.shape_cast %176 : vector<32xf32> to vector<32x1xf32>
    %178 = vector.shape_cast %175 : vector<1x16xi1> to vector<1x16xi1>
    %179 = vector.broadcast %178 : vector<1x16xi1> to vector<32x16xi1>
    %180 = vector.shape_cast %177 : vector<32x1xf32> to vector<32x1xf32>
    %181 = vector.broadcast %180 : vector<32x1xf32> to vector<32x16xf32>
    %182 = arith.select %179, %181, %171 : vector<32x16xi1>, vector<32x16xf32>
    %c0_47 = arith.constant 0 : index
    %c240 = arith.constant 240 : index
    %183 = vector.load %arg14[%c0_47, %c240] : memref<32x256xf32, #tpu.memory_space<vmem>>, vector<32x16xf32>
    %184 = arith.maximumf %173, %183 : vector<32x16xf32>
    %c15_i32 = arith.constant 15 : i32
    %185 = vector.broadcast %c15_i32 : i32 to vector<1x16xi32>
    %186 = arith.cmpi eq, %17, %185 : vector<1x16xi32>
    %cst_48 = arith.constant dense<0xFF800000> : vector<32xf32>
    %187 = vector.multi_reduction <maximumf>, %183, %cst_48 [1] : vector<32x16xf32> to vector<32xf32>
    %188 = vector.shape_cast %187 : vector<32xf32> to vector<32x1xf32>
    %189 = vector.shape_cast %186 : vector<1x16xi1> to vector<1x16xi1>
    %190 = vector.broadcast %189 : vector<1x16xi1> to vector<32x16xi1>
    %191 = vector.shape_cast %188 : vector<32x1xf32> to vector<32x1xf32>
    %192 = vector.broadcast %191 : vector<32x1xf32> to vector<32x16xf32>
    %193 = arith.select %190, %192, %182 : vector<32x16xi1>, vector<32x16xf32>
    %194 = tpu.concatenate %184, %14 in 1 : vector<32x16xf32>, vector<32x16xf32> -> vector<32x32xf32>
    %195 = tpu.concatenate %193, %16 in 1 : vector<32x16xf32>, vector<32x16xf32> -> vector<32x32xf32>
    %196 = vector.shape_cast %12 : vector<1x512xf32> to vector<1x512xf32>
    %197 = vector.broadcast %196 : vector<1x512xf32> to vector<8x512xf32>
    %c0_49 = arith.constant 0 : index
    %c0_50 = arith.constant 0 : index
    %198 = vector.load %arg7[%c0_49, %c0_50] : memref<512x256xf32, #tpu.memory_space<vmem>>, vector<512x256xf32>
    %cst_51 = arith.constant dense<0.000000e+00> : vector<8x256xf32>
    %199 = tpu.matmul %197, %198, %cst_51 {dimension_numbers = #tpu.dot_dimension_numbers<[1], [0], [0], [1], [0, 0, 1, 1], [], []>} : vector<8x512xf32>, vector<512x256xf32>, vector<8x256xf32> -> vector<8x256xf32>
    %200 = vector.extract_strided_slice %199 {offsets = [0, 0], sizes = [1, 256], strides = [1, 1]} : vector<8x256xf32> to vector<1x256xf32>
    %c0_52 = arith.constant 0 : index
    %201 = memref.load %arg1[%c0_52] : memref<3xf32, #tpu.memory_space<smem>>
    %202 = vector.broadcast %201 : f32 to vector<1x256xf32>
    %203 = arith.addf %200, %202 : vector<1x256xf32>
    %204 = arith.negf %203 : vector<1x256xf32>
    %205 = math.exp %204 : vector<1x256xf32>
    %cst_53 = arith.constant 1.000000e+00 : f32
    %206 = vector.broadcast %cst_53 : f32 to vector<1x256xf32>
    %207 = arith.addf %206, %205 : vector<1x256xf32>
    %208 = arith.divf %206, %207 : vector<1x256xf32>
    %c1 = arith.constant 1 : index
    %209 = memref.load %arg1[%c1] : memref<3xf32, #tpu.memory_space<smem>>
    %cst_54 = arith.constant 0.000000e+00 : f32
    %210 = vector.broadcast %cst_54 : f32 to vector<3x32xf32>
    %211 = tpu.concatenate %210, %194, %210 in 0 : vector<3x32xf32>, vector<32x32xf32>, vector<3x32xf32> -> vector<38x32xf32>
    %212 = vector.extract_strided_slice %211 {offsets = [0, 0], sizes = [32, 32], strides = [1, 1]} : vector<38x32xf32> to vector<32x32xf32>
    %213 = vector.extract_strided_slice %211 {offsets = [1, 0], sizes = [32, 32], strides = [1, 1]} : vector<38x32xf32> to vector<32x32xf32>
    %214 = vector.extract_strided_slice %211 {offsets = [2, 0], sizes = [32, 32], strides = [1, 1]} : vector<38x32xf32> to vector<32x32xf32>
    %215 = vector.extract_strided_slice %211 {offsets = [3, 0], sizes = [32, 32], strides = [1, 1]} : vector<38x32xf32> to vector<32x32xf32>
    %216 = vector.extract_strided_slice %211 {offsets = [4, 0], sizes = [32, 32], strides = [1, 1]} : vector<38x32xf32> to vector<32x32xf32>
    %217 = vector.extract_strided_slice %211 {offsets = [5, 0], sizes = [32, 32], strides = [1, 1]} : vector<38x32xf32> to vector<32x32xf32>
    %218 = vector.extract_strided_slice %211 {offsets = [6, 0], sizes = [32, 32], strides = [1, 1]} : vector<38x32xf32> to vector<32x32xf32>
    %219 = tpu.concatenate %212, %213, %214, %215, %216, %217, %218 in 1 : vector<32x32xf32>, vector<32x32xf32>, vector<32x32xf32>, vector<32x32xf32>, vector<32x32xf32>, vector<32x32xf32>, vector<32x32xf32> -> vector<32x224xf32>
    %c0_55 = arith.constant 0 : index
    %c0_56 = arith.constant 0 : index
    %220 = vector.load %arg8[%c0_55, %c0_56] : memref<224x16xf32, #tpu.memory_space<vmem>>, vector<224x16xf32>
    %cst_57 = arith.constant dense<0.000000e+00> : vector<32x16xf32>
    %221 = tpu.matmul %219, %220, %cst_57 {dimension_numbers = #tpu.dot_dimension_numbers<[1], [0], [0], [1], [0, 0, 1, 1], [], []>} : vector<32x224xf32>, vector<224x16xf32>, vector<32x16xf32> -> vector<32x16xf32>
    %222 = vector.broadcast %209 : f32 to vector<32x16xf32>
    %223 = arith.addf %221, %222 : vector<32x16xf32>
    %224 = arith.negf %223 : vector<32x16xf32>
    %225 = math.exp %224 : vector<32x16xf32>
    %cst_58 = arith.constant 1.000000e+00 : f32
    %226 = vector.broadcast %cst_58 : f32 to vector<32x16xf32>
    %227 = arith.addf %226, %225 : vector<32x16xf32>
    %228 = arith.divf %226, %227 : vector<32x16xf32>
    %c2 = arith.constant 2 : index
    %229 = memref.load %arg1[%c2] : memref<3xf32, #tpu.memory_space<smem>>
    %cst_59 = arith.constant 0.000000e+00 : f32
    %230 = vector.broadcast %cst_59 : f32 to vector<3x32xf32>
    %231 = tpu.concatenate %230, %195, %230 in 0 : vector<3x32xf32>, vector<32x32xf32>, vector<3x32xf32> -> vector<38x32xf32>
    %232 = vector.extract_strided_slice %231 {offsets = [0, 0], sizes = [32, 32], strides = [1, 1]} : vector<38x32xf32> to vector<32x32xf32>
    %233 = vector.extract_strided_slice %231 {offsets = [1, 0], sizes = [32, 32], strides = [1, 1]} : vector<38x32xf32> to vector<32x32xf32>
    %234 = vector.extract_strided_slice %231 {offsets = [2, 0], sizes = [32, 32], strides = [1, 1]} : vector<38x32xf32> to vector<32x32xf32>
    %235 = vector.extract_strided_slice %231 {offsets = [3, 0], sizes = [32, 32], strides = [1, 1]} : vector<38x32xf32> to vector<32x32xf32>
    %236 = vector.extract_strided_slice %231 {offsets = [4, 0], sizes = [32, 32], strides = [1, 1]} : vector<38x32xf32> to vector<32x32xf32>
    %237 = vector.extract_strided_slice %231 {offsets = [5, 0], sizes = [32, 32], strides = [1, 1]} : vector<38x32xf32> to vector<32x32xf32>
    %238 = vector.extract_strided_slice %231 {offsets = [6, 0], sizes = [32, 32], strides = [1, 1]} : vector<38x32xf32> to vector<32x32xf32>
    %239 = tpu.concatenate %232, %233, %234, %235, %236, %237, %238 in 1 : vector<32x32xf32>, vector<32x32xf32>, vector<32x32xf32>, vector<32x32xf32>, vector<32x32xf32>, vector<32x32xf32>, vector<32x32xf32> -> vector<32x224xf32>
    %c0_60 = arith.constant 0 : index
    %c0_61 = arith.constant 0 : index
    %240 = vector.load %arg9[%c0_60, %c0_61] : memref<224x16xf32, #tpu.memory_space<vmem>>, vector<224x16xf32>
    %cst_62 = arith.constant dense<0.000000e+00> : vector<32x16xf32>
    %241 = tpu.matmul %239, %240, %cst_62 {dimension_numbers = #tpu.dot_dimension_numbers<[1], [0], [0], [1], [0, 0, 1, 1], [], []>} : vector<32x224xf32>, vector<224x16xf32>, vector<32x16xf32> -> vector<32x16xf32>
    %242 = vector.broadcast %229 : f32 to vector<32x16xf32>
    %243 = arith.addf %241, %242 : vector<32x16xf32>
    %244 = arith.negf %243 : vector<32x16xf32>
    %245 = math.exp %244 : vector<32x16xf32>
    %cst_63 = arith.constant 1.000000e+00 : f32
    %246 = vector.broadcast %cst_63 : f32 to vector<32x16xf32>
    %247 = arith.addf %246, %245 : vector<32x16xf32>
    %248 = arith.divf %246, %247 : vector<32x16xf32>
    %c0_64 = arith.constant 0 : index
    %c0_65 = arith.constant 0 : index
    %249 = vector.load %arg5[%c0_64, %c0_65] : memref<16x256xf32, #tpu.memory_space<vmem>>, vector<16x256xf32>
    %cst_66 = arith.constant dense<0.000000e+00> : vector<32x256xf32>
    %250 = tpu.matmul %228, %249, %cst_66 {dimension_numbers = #tpu.dot_dimension_numbers<[1], [0], [0], [1], [0, 0, 1, 1], [], []>} : vector<32x16xf32>, vector<16x256xf32>, vector<32x256xf32> -> vector<32x256xf32>
    %251 = vector.broadcast %208 : vector<1x256xf32> to vector<32x256xf32>
    %252 = arith.addf %251, %250 : vector<32x256xf32>
    %c0_67 = arith.constant 0 : index
    %c0_68 = arith.constant 0 : index
    %253 = vector.load %arg6[%c0_67, %c0_68] : memref<16x256xf32, #tpu.memory_space<vmem>>, vector<16x256xf32>
    %cst_69 = arith.constant dense<0.000000e+00> : vector<32x256xf32>
    %254 = tpu.matmul %248, %253, %cst_69 {dimension_numbers = #tpu.dot_dimension_numbers<[1], [0], [0], [1], [0, 0, 1, 1], [], []>} : vector<32x16xf32>, vector<16x256xf32>, vector<32x256xf32> -> vector<32x256xf32>
    %255 = arith.addf %252, %254 : vector<32x256xf32>
    %c0_70 = arith.constant 0 : index
    %c0_71 = arith.constant 0 : index
    %256 = vector.load %arg14[%c0_70, %c0_71] : memref<32x256xf32, #tpu.memory_space<vmem>>, vector<32x256xf32>
    %257 = arith.mulf %256, %255 : vector<32x256xf32>
    %c0_72 = arith.constant 0 : index
    %c0_73 = arith.constant 0 : index
    %258 = vector.load %arg10[%c0_72, %c0_73] : memref<32x32xf32, #tpu.memory_space<vmem>>, vector<32x32xf32>
    %cst_74 = arith.constant dense<0.000000e+00> : vector<32x256xf32>
    %259 = tpu.matmul %258, %257, %cst_74 {dimension_numbers = #tpu.dot_dimension_numbers<[1], [0], [0], [1], [0, 0, 1, 1], [], []>} : vector<32x32xf32>, vector<32x256xf32>, vector<32x256xf32> -> vector<32x256xf32>
    %c0_75 = arith.constant 0 : index
    %c0_76 = arith.constant 0 : index
    %260 = vector.load %arg11[%c0_75, %c0_76] : memref<32x1xf32, #tpu.memory_space<vmem>>, vector<32x1xf32>
    %261 = vector.broadcast %260 : vector<32x1xf32> to vector<32x256xf32>
    %262 = arith.addf %259, %261 : vector<32x256xf32>
    %c0_77 = arith.constant 0 : index
    %c0_78 = arith.constant 0 : index
    %c0_79 = arith.constant 0 : index
    %263 = vector.load %arg12[%c0_77, %c0_78, %c0_79] : memref<1x32x256xf32, #tpu.memory_space<vmem>>, vector<1x32x256xf32>
    %264 = vector.shape_cast %263 : vector<1x32x256xf32> to vector<32x256xf32>
    %cst_80 = arith.constant 0.000000e+00 : f32
    %265 = vector.broadcast %cst_80 : f32 to vector<32x256xf32>
    %266 = arith.maximumf %262, %265 : vector<32x256xf32>
    %267 = arith.addf %264, %266 : vector<32x256xf32>
    %c0_81 = arith.constant 0 : index
    %c0_82 = arith.constant 0 : index
    %c0_83 = arith.constant 0 : index
    %268 = vector.load %arg13[%c0_81, %c0_82, %c0_83] : memref<1x32x256xf32, #tpu.memory_space<vmem>>, vector<1x32x256xf32>
    %269 = vector.shape_cast %268 : vector<1x32x256xf32> to vector<32x256xf32>
    %270 = vector.shape_cast %267 : vector<32x256xf32> to vector<1x32x256xf32>
    tpu.vector_store %arg13[%c0_81, %c0_82, %c0_83], %270 {strides = array<i32>} : memref<1x32x256xf32, #tpu.memory_space<vmem>>, vector<1x32x256xf32>,
    return
  }
  func.func @transform_0(%arg0: i32) -> i32 {
    %c0_i32 = arith.constant 0 : i32
    %c0_i32_0 = arith.constant 0 : i32
    return %c0_i32 : i32
  }
  func.func @transform_1(%arg0: i32) -> (i32, i32) {
    %c0_i32 = arith.constant 0 : i32
    %c0_i32_0 = arith.constant 0 : i32
    %c0_i32_1 = arith.constant 0 : i32
    return %c0_i32, %c0_i32_0 : i32, i32
  }
  func.func @transform_2(%arg0: i32) -> (i32, i32) {
    %c0_i32 = arith.constant 0 : i32
    %c0_i32_0 = arith.constant 0 : i32
    %c0_i32_1 = arith.constant 0 : i32
    return %c0_i32, %c0_i32_0 : i32, i32
  }
  func.func @transform_3(%arg0: i32) -> (i32, i32) {
    %c0_i32 = arith.constant 0 : i32
    %c0_i32_0 = arith.constant 0 : i32
    %c0_i32_1 = arith.constant 0 : i32
    return %c0_i32, %c0_i32_0 : i32, i32
  }
  func.func @transform_4(%arg0: i32) -> (i32, i32) {
    %c0_i32 = arith.constant 0 : i32
    %c0_i32_0 = arith.constant 0 : i32
    %c0_i32_1 = arith.constant 0 : i32
    return %c0_i32, %c0_i32_0 : i32, i32
  }
  func.func @transform_5(%arg0: i32) -> (i32, i32) {
    %c0_i32 = arith.constant 0 : i32
    %c0_i32_0 = arith.constant 0 : i32
    %c0_i32_1 = arith.constant 0 : i32
    return %c0_i32, %c0_i32_0 : i32, i32
  }
  func.func @transform_6(%arg0: i32) -> (i32, i32) {
    %c0_i32 = arith.constant 0 : i32
    %c0_i32_0 = arith.constant 0 : i32
    %c0_i32_1 = arith.constant 0 : i32
    return %c0_i32, %c0_i32_0 : i32, i32
  }
  func.func @transform_7(%arg0: i32) -> (i32, i32) {
    %c0_i32 = arith.constant 0 : i32
    %c0_i32_0 = arith.constant 0 : i32
    %c0_i32_1 = arith.constant 0 : i32
    return %c0_i32, %c0_i32_0 : i32, i32
  }
  func.func @transform_8(%arg0: i32) -> (i32, i32) {
    %c0_i32 = arith.constant 0 : i32
    %c0_i32_0 = arith.constant 0 : i32
    %c0_i32_1 = arith.constant 0 : i32
    return %c0_i32, %c0_i32_0 : i32, i32
  }
  func.func @transform_9(%arg0: i32) -> (i32, i32) {
    %c0_i32 = arith.constant 0 : i32
    %c0_i32_0 = arith.constant 0 : i32
    %c0_i32_1 = arith.constant 0 : i32
    return %c0_i32, %c0_i32_0 : i32, i32
  }
  func.func @transform_10(%arg0: i32) -> (i32, i32) {
    %c0_i32 = arith.constant 0 : i32
    %c0_i32_0 = arith.constant 0 : i32
    %c0_i32_1 = arith.constant 0 : i32
    return %c0_i32, %c0_i32_0 : i32, i32
  }
  func.func @transform_11(%arg0: i32) -> (i32, i32, i32) {
    %c0_i32 = arith.constant 0 : i32
    %c0_i32_0 = arith.constant 0 : i32
    %c0_i32_1 = arith.constant 0 : i32
    return %arg0, %c0_i32, %c0_i32_0 : i32, i32, i32
  }
  func.func @transform_12(%arg0: i32) -> (i32, i32, i32) {
    %c0_i32 = arith.constant 0 : i32
    %c0_i32_0 = arith.constant 0 : i32
    %c0_i32_1 = arith.constant 0 : i32
    return %arg0, %c0_i32, %c0_i32_0 : i32, i32, i32
  }
}

</mosaic_0001>

<llo_original>
// kernel: squeeze.10
$region0: #{squeeze.10}
  %s0 = inlined_call_operand.vmem [shape: f32[7,7], index: 0, kind: input, shape index: {}]
  %s1 = inlined_call_operand.vmem [shape: f32[49], index: 1, kind: output, shape index: {}]
  $region1: #{squeeze.10} parent=0
    #allocation0 [shape = 'u8[4096]{0}', space=vmem, size = 0x1000, scoped, tag = 'scoped mem for output reshape']
    %v2 = vld [vmem:[%s0] sm:$0x1]
    %vm3 = vcmask 56320
    %4 = vst.msk [vmem:[#allocation0] sm:$0x1] %vm3, %v2
    %s5 = scalar_lea.vmem %s0, 6
    %v6 = vld [vmem:[%s5] sm:$0x1]
    %7 = vrot.lane.b32.xlu0 %v6, 42
    %v8 = vpop.permute.xlu0 %7
    %vm9 = vcmask 400720
    %10 = vst.msk [vmem:[#allocation0] sm:$0x1] %vm9, %v8
    %s11 = scalar_lea.vmem %s0, 5
    %v12 = vld [vmem:[%s11] sm:$0x1]
    %13 = vrot.lane.b32.xlu0 %v12, 35
    %v14 = vpop.permute.xlu0 %13
    %vm15 = vcmask 343320
    %16 = vst.msk [vmem:[#allocation0] sm:$0x1] %vm15, %v14
    %s17 = scalar_lea.vmem %s0, 4
    %v18 = vld [vmem:[%s17] sm:$0x1]
    %19 = vrot.lane.b32.xlu0 %v18, 28
    %v20 = vpop.permute.xlu0 %19
    %vm21 = vcmask 285920
    %22 = vst.msk [vmem:[#allocation0] sm:$0x1] %vm21, %v20
    %s23 = scalar_lea.vmem %s0, 3
    %v24 = vld [vmem:[%s23] sm:$0x1]
    %25 = vrot.lane.b32.xlu0 %v24, 21
    %v26 = vpop.permute.xlu0 %25
    %vm27 = vcmask 228520
    %28 = vst.msk [vmem:[#allocation0] sm:$0x1] %vm27, %v26
    %s29 = scalar_lea.vmem %s0, 2
    %v30 = vld [vmem:[%s29] sm:$0x1]
    %31 = vrot.lane.b32.xlu0 %v30, 14
    %v32 = vpop.permute.xlu0 %31
    %vm33 = vcmask 171120
    %34 = vst.msk [vmem:[#allocation0] sm:$0x1] %vm33, %v32
    %s35 = scalar_lea.vmem %s0, 1
    %v36 = vld [vmem:[%s35] sm:$0x1]
    %37 = vrot.lane.b32.xlu0 %v36, 7
    %v38 = vpop.permute.xlu0 %37
    %vm39 = vcmask 113720
    %40 = vst.msk [vmem:[#allocation0] sm:$0x1] %vm39, %v38
    %s42 = sshll.u32 1, 1
    %s43 = ssub.s32 %s42, 1
    %v45 = vld [vmem:[#allocation0] sm:%s43]
    %s46 = sshll.u32 1, 1
    %s47 = ssub.s32 %s46, 1
    %48 = vst [vmem:[%s1] sm:%s47] %v45

// kernel: res_ta_forward.1
$region0: #{res_ta_forward.1}
  #allocation0 [shape = 'u32[]', space=smem, size = 0x4, offset = 0x4, fixed_abs, tag = 'smem constant byte address 0x4 - core index']
  #allocation1 [shape = 'u32[144,128]{1,0:T(1,128)}', space=vmem, size = 0x12000, scoped, tag = 'internal scratch']
  #allocation2 [shape = 'f32[32,256]{1,0:T(8,128)}', space=vmem, size = 0x8000, scoped, tag = 'scratch operand']
  %s0 = inlined_call_operand.vmem [shape: f32[3], index: 0, kind: input, shape index: {}]
  %s1 = inlined_call_operand.vmem [shape: f32[256,256], index: 1, kind: input, shape index: {}]
  %s2 = inlined_call_operand.vmem [shape: f32[256,16], index: 2, kind: input, shape index: {}]
  %s3 = inlined_call_operand.vmem [shape: f32[256,16], index: 3, kind: input, shape index: {}]
  %s4 = inlined_call_operand.vmem [shape: f32[16,256], index: 4, kind: input, shape index: {}]
  %s5 = inlined_call_operand.vmem [shape: f32[16,256], index: 5, kind: input, shape index: {}]
  %s6 = inlined_call_operand.vmem [shape: f32[512,256], index: 6, kind: input, shape index: {}]
  %s7 = inlined_call_operand.vmem [shape: f32[224,16], index: 7, kind: input, shape index: {}]
  %s8 = inlined_call_operand.vmem [shape: f32[224,16], index: 8, kind: input, shape index: {}]
  %s9 = inlined_call_operand.vmem [shape: f32[32,32], index: 9, kind: input, shape index: {}]
  %s10 = inlined_call_operand.vmem [shape: f32[32,1], index: 10, kind: input, shape index: {}]
  %s11 = inlined_call_operand.vmem [shape: f32[2,32,256], index: 11, kind: input, shape index: {}]
  %s12 = inlined_call_operand.vmem [shape: f32[2,32,256], index: 12, kind: output, shape index: {}]
  %s13 = sld [smem:[#allocation0]]
  $region85: #{res_ta_forward.1} parent=0
    _
  %s15 = ssub.s32 1, %s13
  %s16 = scalar_select 0, %s15, %s13
  $region1: #{res_ta_forward.1} parent=0
    #allocation3 [shape = 'u8[512]{0}', space=smem, size = 0x200, scoped, tag = 'input window, operand 0, single buffered']
    #allocation4 [shape = 's32[2]{0}', space=sflag, size = 0x8, scoped, tag = 'scoped memory for res_ta_forward.1']
    %17 = vsyncpa [#allocation4], 0
    loop: start=0, step=1, limit=4
    $region2: #{res_ta_forward.1} parent=1 // loop_pre_header
      _
    $region3: #{res_ta_forward.1} parent=1 // loop_header
      %s19 = sphi 0, %s23
      %p20 = scmp.ge.s32.totalorder %s19, 4
      %s27 = sphi 0, %s27
      %s29 = sphi 0, %s27
      %s30 = sphi 0, %s29
      %s44 = sphi 0, %s30
      %s48 = sphi 0, %s48
      %s50 = sphi 0, %s48
      %s51 = sphi 0, %s50
      %s65 = sphi 0, %s51
      %s69 = sphi 0, %s69
      %s71 = sphi 0, %s69
      %s72 = sphi 0, %s71
      %s86 = sphi 0, %s72
      %s90 = sphi 0, %s90
      %s92 = sphi 0, %s90
      %s93 = sphi 0, %s92
      %s107 = sphi 0, %s93
      %s111 = sphi 0, %s111
      %s113 = sphi 0, %s111
      %s114 = sphi 0, %s113
      %s128 = sphi 0, %s114
      %s132 = sphi 0, %s132
      %s134 = sphi 0, %s132
      %s135 = sphi 0, %s134
      %s149 = sphi 0, %s135
      %s153 = sphi 0, %s153
      %s155 = sphi 0, %s153
      %s156 = sphi 0, %s155
      %s170 = sphi 0, %s156
      %s174 = sphi 0, %s174
      %s176 = sphi 0, %s174
      %s177 = sphi 0, %s176
      %s191 = sphi 0, %s177
      %s195 = sphi 0, %s195
      %s197 = sphi 0, %s195
      %s198 = sphi 0, %s197
      %s212 = sphi 0, %s198
      %s216 = sphi 0, %s216
      %s218 = sphi 0, %s216
      %s219 = sphi 0, %s218
      %s233 = sphi 0, %s219
      %s237 = sphi 0, %s237
      %s239 = sphi 0, %s237
      %s240 = sphi 0, %s239
      %s254 = sphi 0, %s240
      %s260 = sphi 0, %s262
      %s263 = sphi 0, %s260
      %s264 = sphi 0, %s263
      %s280 = sphi 0, %s264
      %s286 = sphi 0, %s288
      %s289 = sphi 0, %s286
      %s290 = sphi 0, %s289
      %s306 = sphi 0, %s290
    $region4: #{res_ta_forward.1} parent=1 // loop_header_branch
      %22 = sbr.rel (%p20) target = $region8
    $region5: #{res_ta_forward.1} parent=1 // loop_body
      %s24 = ssub.s32 %s19, 1
      %s25 = ssub.s32 %s19, 2
      %s26 = sadd.s32 %s19, 1
      %s28 = sadd.s32 %s27, 1
      %p31 = scmp.eq.s32.totalorder %s19, 1
      %p32 = scmp.ne.s32.totalorder %s27, %s29
      %p33 = scmp.eq.s32.totalorder %s19, 0
      %p34 = por %p32, %p33
      %p35 = scmp.ne.s32.totalorder %s27, %s29
      %p36 = scmp.eq.s32.totalorder %s24, 1
      %p37 = por %p35, %p36
      %p38 = scmp.ne.s32.totalorder %s29, %s30
      %p39 = scmp.eq.s32.totalorder %s24, 0
      %p40 = por %p38, %p39
      %p41 = scmp.ne.s32.totalorder %s29, %s30
      %p42 = scmp.eq.s32.totalorder %s25, 1
      %p43 = por %p41, %p42
      %p45 = scmp.ne.s32.totalorder %s30, %s44
      %p46 = scmp.eq.s32.totalorder %s25, 0
      %p47 = por %p45, %p46
      %s49 = sadd.s32 %s48, 1
      %p52 = scmp.eq.s32.totalorder %s19, 1
      %p53 = scmp.ne.s32.totalorder %s48, %s50
      %p54 = scmp.eq.s32.totalorder %s19, 0
      %p55 = por %p53, %p54
      %p56 = scmp.ne.s32.totalorder %s48, %s50
      %p57 = scmp.eq.s32.totalorder %s24, 1
      %p58 = por %p56, %p57
      %p59 = scmp.ne.s32.totalorder %s50, %s51
      %p60 = scmp.eq.s32.totalorder %s24, 0
      %p61 = por %p59, %p60
      %p62 = scmp.ne.s32.totalorder %s50, %s51
      %p63 = scmp.eq.s32.totalorder %s25, 1
      %p64 = por %p62, %p63
      %p66 = scmp.ne.s32.totalorder %s51, %s65
      %p67 = scmp.eq.s32.totalorder %s25, 0
      %p68 = por %p66, %p67
      %s70 = sadd.s32 %s69, 1
      %p73 = scmp.eq.s32.totalorder %s19, 1
      %p74 = scmp.ne.s32.totalorder %s69, %s71
      %p75 = scmp.eq.s32.totalorder %s19, 0
      %p76 = por %p74, %p75
      %p77 = scmp.ne.s32.totalorder %s69, %s71
      %p78 = scmp.eq.s32.totalorder %s24, 1
      %p79 = por %p77, %p78
      %p80 = scmp.ne.s32.totalorder %s71, %s72
      %p81 = scmp.eq.s32.totalorder %s24, 0
      %p82 = por %p80, %p81
      %p83 = scmp.ne.s32.totalorder %s71, %s72
      %p84 = scmp.eq.s32.totalorder %s25, 1
      %p85 = por %p83, %p84
      %p87 = scmp.ne.s32.totalorder %s72, %s86
      %p88 = scmp.eq.s32.totalorder %s25, 0
      %p89 = por %p87, %p88
      %s91 = sadd.s32 %s90, 1
      %p94 = scmp.eq.s32.totalorder %s19, 1
      %p95 = scmp.ne.s32.totalorder %s90, %s92
      %p96 = scmp.eq.s32.totalorder %s19, 0
      %p97 = por %p95, %p96
      %p98 = scmp.ne.s32.totalorder %s90, %s92
      %p99 = scmp.eq.s32.totalorder %s24, 1
      %p100 = por %p98, %p99
      %p101 = scmp.ne.s32.totalorder %s92, %s93
      %p102 = scmp.eq.s32.totalorder %s24, 0
      %p103 = por %p101, %p102
      %p104 = scmp.ne.s32.totalorder %s92, %s93
      %p105 = scmp.eq.s32.totalorder %s25, 1
      %p106 = por %p104, %p105
      %p108 = scmp.ne.s32.totalorder %s93, %s107
      %p109 = scmp.eq.s32.totalorder %s25, 0
      %p110 = por %p108, %p109
      %s112 = sadd.s32 %s111, 1
      %p115 = scmp.eq.s32.totalorder %s19, 1
      %p116 = scmp.ne.s32.totalorder %s111, %s113
      %p117 = scmp.eq.s32.totalorder %s19, 0
      %p118 = por %p116, %p117
      %p119 = scmp.ne.s32.totalorder %s111, %s113
      %p120 = scmp.eq.s32.totalorder %s24, 1
      %p121 = por %p119, %p120
      %p122 = scmp.ne.s32.totalorder %s113, %s114
      %p123 = scmp.eq.s32.totalorder %s24, 0
      %p124 = por %p122, %p123
      %p125 = scmp.ne.s32.totalorder %s113, %s114
      %p126 = scmp.eq.s32.totalorder %s25, 1
      %p127 = por %p125, %p126
      %p129 = scmp.ne.s32.totalorder %s114, %s128
      %p130 = scmp.eq.s32.totalorder %s25, 0
      %p131 = por %p129, %p130
      %s133 = sadd.s32 %s132, 1
      %p136 = scmp.eq.s32.totalorder %s19, 1
      %p137 = scmp.ne.s32.totalorder %s132, %s134
      %p138 = scmp.eq.s32.totalorder %s19, 0
      %p139 = por %p137, %p138
      %p140 = scmp.ne.s32.totalorder %s132, %s134
      %p141 = scmp.eq.s32.totalorder %s24, 1
      %p142 = por %p140, %p141
      %p143 = scmp.ne.s32.totalorder %s134, %s135
      %p144 = scmp.eq.s32.totalorder %s24, 0
      %p145 = por %p143, %p144
      %p146 = scmp.ne.s32.totalorder %s134, %s135
      %p147 = scmp.eq.s32.totalorder %s25, 1
      %p148 = por %p146, %p147
      %p150 = scmp.ne.s32.totalorder %s135, %s149
      %p151 = scmp.eq.s32.totalorder %s25, 0
      %p152 = por %p150, %p151
      %s154 = sadd.s32 %s153, 1
      %p157 = scmp.eq.s32.totalorder %s19, 1
      %p158 = scmp.ne.s32.totalorder %s153, %s155
      %p159 = scmp.eq.s32.totalorder %s19, 0
      %p160 = por %p158, %p159
      %p161 = scmp.ne.s32.totalorder %s153, %s155
      %p162 = scmp.eq.s32.totalorder %s24, 1
      %p163 = por %p161, %p162
      %p164 = scmp.ne.s32.totalorder %s155, %s156
      %p165 = scmp.eq.s32.totalorder %s24, 0
      %p166 = por %p164, %p165
      %p167 = scmp.ne.s32.totalorder %s155, %s156
      %p168 = scmp.eq.s32.totalorder %s25, 1
      %p169 = por %p167, %p168
      %p171 = scmp.ne.s32.totalorder %s156, %s170
      %p172 = scmp.eq.s32.totalorder %s25, 0
      %p173 = por %p171, %p172
      %s175 = sadd.s32 %s174, 1
      %p178 = scmp.eq.s32.totalorder %s19, 1
      %p179 = scmp.ne.s32.totalorder %s174, %s176
      %p180 = scmp.eq.s32.totalorder %s19, 0
      %p181 = por %p179, %p180
      %p182 = scmp.ne.s32.totalorder %s174, %s176
      %p183 = scmp.eq.s32.totalorder %s24, 1
      %p184 = por %p182, %p183
      %p185 = scmp.ne.s32.totalorder %s176, %s177
      %p186 = scmp.eq.s32.totalorder %s24, 0
      %p187 = por %p185, %p186
      %p188 = scmp.ne.s32.totalorder %s176, %s177
      %p189 = scmp.eq.s32.totalorder %s25, 1
      %p190 = por %p188, %p189
      %p192 = scmp.ne.s32.totalorder %s177, %s191
      %p193 = scmp.eq.s32.totalorder %s25, 0
      %p194 = por %p192, %p193
      %s196 = sadd.s32 %s195, 1
      %p199 = scmp.eq.s32.totalorder %s19, 1
      %p200 = scmp.ne.s32.totalorder %s195, %s197
      %p201 = scmp.eq.s32.totalorder %s19, 0
      %p202 = por %p200, %p201
      %p203 = scmp.ne.s32.totalorder %s195, %s197
      %p204 = scmp.eq.s32.totalorder %s24, 1
      %p205 = por %p203, %p204
      %p206 = scmp.ne.s32.totalorder %s197, %s198
      %p207 = scmp.eq.s32.totalorder %s24, 0
      %p208 = por %p206, %p207
      %p209 = scmp.ne.s32.totalorder %s197, %s198
      %p210 = scmp.eq.s32.totalorder %s25, 1
      %p211 = por %p209, %p210
      %p213 = scmp.ne.s32.totalorder %s198, %s212
      %p214 = scmp.eq.s32.totalorder %s25, 0
      %p215 = por %p213, %p214
      %s217 = sadd.s32 %s216, 1
      %p220 = scmp.eq.s32.totalorder %s19, 1
      %p221 = scmp.ne.s32.totalorder %s216, %s218
      %p222 = scmp.eq.s32.totalorder %s19, 0
      %p223 = por %p221, %p222
      %p224 = scmp.ne.s32.totalorder %s216, %s218
      %p225 = scmp.eq.s32.totalorder %s24, 1
      %p226 = por %p224, %p225
      %p227 = scmp.ne.s32.totalorder %s218, %s219
      %p228 = scmp.eq.s32.totalorder %s24, 0
      %p229 = por %p227, %p228
      %p230 = scmp.ne.s32.totalorder %s218, %s219
      %p231 = scmp.eq.s32.totalorder %s25, 1
      %p232 = por %p230, %p231
      %p234 = scmp.ne.s32.totalorder %s219, %s233
      %p235 = scmp.eq.s32.totalorder %s25, 0
      %p236 = por %p234, %p235
      %s238 = sadd.s32 %s237, 1
      %p241 = scmp.eq.s32.totalorder %s19, 1
      %p242 = scmp.ne.s32.totalorder %s237, %s239
      %p243 = scmp.eq.s32.totalorder %s19, 0
      %p244 = por %p242, %p243
      %p245 = scmp.ne.s32.totalorder %s237, %s239
      %p246 = scmp.eq.s32.totalorder %s24, 1
      %p247 = por %p245, %p246
      %p248 = scmp.ne.s32.totalorder %s239, %s240
      %p249 = scmp.eq.s32.totalorder %s24, 0
      %p250 = por %p248, %p249
      %p251 = scmp.ne.s32.totalorder %s239, %s240
      %p252 = scmp.eq.s32.totalorder %s25, 1
      %p253 = por %p251, %p252
      %p255 = scmp.ne.s32.totalorder %s240, %s254
      %p256 = scmp.eq.s32.totalorder %s25, 0
      %p257 = por %p255, %p256
      %s258 = ssub.s32 %s19, %s26
      %p259 = scmp.eq.s32.totalorder %s258, 0
      %s261 = sadd.s32 %s260, 1
      %s262 = scalar_select %p259, %s260, %s261
      %p265 = pneg %p259
      %p266 = scmp.eq.s32.totalorder %s19, 1
      %p267 = por %p265, %p266
      %p268 = scmp.ne.s32.totalorder %s260, %s263
      %p269 = scmp.eq.s32.totalorder %s19, 0
      %p270 = por %p268, %p269
      %p271 = scmp.ne.s32.totalorder %s260, %s263
      %p272 = scmp.eq.s32.totalorder %s24, 1
      %p273 = por %p271, %p272
      %p274 = scmp.ne.s32.totalorder %s263, %s264
      %p275 = scmp.eq.s32.totalorder %s24, 0
      %p276 = por %p274, %p275
      %p277 = scmp.ne.s32.totalorder %s263, %s264
      %p278 = scmp.eq.s32.totalorder %s25, 1
      %p279 = por %p277, %p278
      %p281 = scmp.ne.s32.totalorder %s264, %s280
      %p282 = scmp.eq.s32.totalorder %s25, 0
      %p283 = por %p281, %p282
      %s284 = ssub.s32 %s19, %s26
      %p285 = scmp.eq.s32.totalorder %s284, 0
      %s287 = sadd.s32 %s286, 1
      %s288 = scalar_select %p285, %s286, %s287
      %p291 = pneg %p285
      %p292 = scmp.eq.s32.totalorder %s19, 1
      %p293 = por %p291, %p292
      %p294 = scmp.ne.s32.totalorder %s286, %s289
      %p295 = scmp.eq.s32.totalorder %s19, 0
      %p296 = por %p294, %p295
      %p297 = scmp.ne.s32.totalorder %s286, %s289
      %p298 = scmp.eq.s32.totalorder %s24, 1
      %p299 = por %p297, %p298
      %p300 = scmp.ne.s32.totalorder %s289, %s290
      %p301 = scmp.eq.s32.totalorder %s24, 0
      %p302 = por %p300, %p301
      %p303 = scmp.ne.s32.totalorder %s289, %s290
      %p304 = scmp.eq.s32.totalorder %s25, 1
      %p305 = por %p303, %p304
      %p307 = scmp.ne.s32.totalorder %s290, %s306
      %p308 = scmp.eq.s32.totalorder %s25, 0
      %p309 = por %p307, %p308
      %p310 = scmp.le.s32.totalorder 1, %s19
      %p311 = scmp.lt.s32.totalorder %s19, 3
      %p312 = pnand %p310, %p311
      %p313 = pneg %p312
      // Predicated region
      $region9: #{res_ta_forward.1} parent=5 // pred_check
        _
      $region10: #{res_ta_forward.1} parent=5 // pred_check_branch
        %315 = sbr.rel (%p312) target = $region12
      $region11: #{res_ta_forward.1} parent=5 // pred_region
        %s316 = ssub.s32 %s19, 1
        // Predicated region
        $region13: #{res_ta_forward.1} parent=11 // pred_check
          %p317 = pneg %p40
        $region14: #{res_ta_forward.1} parent=11 // pred_check_branch
          %319 = sbr.rel (%p317) target = $region16
        $region15: #{res_ta_forward.1} parent=11 // pred_region
          %s321 = ssub.s32 16, 16
          %322 = vsyncadd [#allocation4], %s321
          %s324 = sshll.u32 %s0, 4
          %s325 = int_to_ptr.vmem [resolvable:$true] %s324
          %327 = dma.vmem_to_smem %s325, 16, [#allocation3], [#allocation4]
        $region16: #{res_ta_forward.1} parent=11 // pred_fallthru
          _
        // Predicated region
        $region17: #{res_ta_forward.1} parent=11 // pred_check
          %p328 = pneg %p61
        $region18: #{res_ta_forward.1} parent=11 // pred_check_branch
          %330 = sbr.rel (%p328) target = $region20
        $region19: #{res_ta_forward.1} parent=11 // pred_region
          _
        $region20: #{res_ta_forward.1} parent=11 // pred_fallthru
          _
        // Predicated region
        $region21: #{res_ta_forward.1} parent=11 // pred_check
          %p331 = pneg %p82
        $region22: #{res_ta_forward.1} parent=11 // pred_check_branch
          %333 = sbr.rel (%p331) target = $region24
        $region23: #{res_ta_forward.1} parent=11 // pred_region
          _
        $region24: #{res_ta_forward.1} parent=11 // pred_fallthru
          _
        // Predicated region
        $region25: #{res_ta_forward.1} parent=11 // pred_check
          %p334 = pneg %p103
        $region26: #{res_ta_forward.1} parent=11 // pred_check_branch
          %336 = sbr.rel (%p334) target = $region28
        $region27: #{res_ta_forward.1} parent=11 // pred_region
          _
        $region28: #{res_ta_forward.1} parent=11 // pred_fallthru
          _
        // Predicated region
        $region29: #{res_ta_forward.1} parent=11 // pred_check
          %p337 = pneg %p124
        $region30: #{res_ta_forward.1} parent=11 // pred_check_branch
          %339 = sbr.rel (%p337) target = $region32
        $region31: #{res_ta_forward.1} parent=11 // pred_region
          _
        $region32: #{res_ta_forward.1} parent=11 // pred_fallthru
          _
        // Predicated region
        $region33: #{res_ta_forward.1} parent=11 // pred_check
          %p340 = pneg %p145
        $region34: #{res_ta_forward.1} parent=11 // pred_check_branch
          %342 = sbr.rel (%p340) target = $region36
        $region35: #{res_ta_forward.1} parent=11 // pred_region
          _
        $region36: #{res_ta_forward.1} parent=11 // pred_fallthru
          _
        // Predicated region
        $region37: #{res_ta_forward.1} parent=11 // pred_check
          %p343 = pneg %p166
        $region38: #{res_ta_forward.1} parent=11 // pred_check_branch
          %345 = sbr.rel (%p343) target = $region40
        $region39: #{res_ta_forward.1} parent=11 // pred_region
          _
        $region40: #{res_ta_forward.1} parent=11 // pred_fallthru
          _
        // Predicated region
        $region41: #{res_ta_forward.1} parent=11 // pred_check
          %p346 = pneg %p187
        $region42: #{res_ta_forward.1} parent=11 // pred_check_branch
          %348 = sbr.rel (%p346) target = $region44
        $region43: #{res_ta_forward.1} parent=11 // pred_region
          _
        $region44: #{res_ta_forward.1} parent=11 // pred_fallthru
          _
        // Predicated region
        $region45: #{res_ta_forward.1} parent=11 // pred_check
          %p349 = pneg %p208
        $region46: #{res_ta_forward.1} parent=11 // pred_check_branch
          %351 = sbr.rel (%p349) target = $region48
        $region47: #{res_ta_forward.1} parent=11 // pred_region
          _
        $region48: #{res_ta_forward.1} parent=11 // pred_fallthru
          _
        // Predicated region
        $region49: #{res_ta_forward.1} parent=11 // pred_check
          %p352 = pneg %p229
        $region50: #{res_ta_forward.1} parent=11 // pred_check_branch
          %354 = sbr.rel (%p352) target = $region52
        $region51: #{res_ta_forward.1} parent=11 // pred_region
          _
        $region52: #{res_ta_forward.1} parent=11 // pred_fallthru
          _
        // Predicated region
        $region53: #{res_ta_forward.1} parent=11 // pred_check
          %p355 = pneg %p250
        $region54: #{res_ta_forward.1} parent=11 // pred_check_branch
          %357 = sbr.rel (%p355) target = $region56
        $region55: #{res_ta_forward.1} parent=11 // pred_region
          _
        $region56: #{res_ta_forward.1} parent=11 // pred_fallthru
          _
      $region12: #{res_ta_forward.1} parent=5 // pred_fallthru
        _
      %p358 = scmp.lt.s32.totalorder %s19, 2
      // Predicated region
      $region57: #{res_ta_forward.1} parent=5 // pred_check
        %p359 = pneg %p358
      $region58: #{res_ta_forward.1} parent=5 // pred_check_branch
        %361 = sbr.rel (%p359) target = $region60
      $region59: #{res_ta_forward.1} parent=5 // pred_region
        // Predicated region
        $region61: #{res_ta_forward.1} parent=59 // pred_check
          %p362 = pneg %p270
        $region62: #{res_ta_forward.1} parent=59 // pred_check_branch
          %364 = sbr.rel (%p362) target = $region64
        $region63: #{res_ta_forward.1} parent=59 // pred_region
          %p365 = scmp.lt.s32.totalorder %s19, 1
          %s366 = scalar_select %p365, %s19, 1
          %s367 = smul.addr %s366, 8
          %s368 = smul.addr %s367, 8
          %s369 = scalar_lea.vmem %s11, %s368
        $region64: #{res_ta_forward.1} parent=59 // pred_fallthru
          _
      $region60: #{res_ta_forward.1} parent=5 // pred_fallthru
        _
      %p370 = scmp.le.s32.totalorder 1, %s19
      %p371 = scmp.lt.s32.totalorder %s19, 3
      %p372 = pnand %p370, %p371
      %p373 = pneg %p372
      // Predicated region
      $region65: #{res_ta_forward.1} parent=5 // pred_check
        _
      $region66: #{res_ta_forward.1} parent=5 // pred_check_branch
        %375 = sbr.rel (%p372) target = $region68
      $region67: #{res_ta_forward.1} parent=5 // pred_region
        %s376 = ssub.s32 %s19, 1
        // Predicated region
        $region69: #{res_ta_forward.1} parent=67 // pred_check
          %p377 = pneg %p40
        $region70: #{res_ta_forward.1} parent=67 // pred_check_branch
          %379 = sbr.rel (%p377) target = $region72
        $region71: #{res_ta_forward.1} parent=67 // pred_region
          %380 = dma.done [#allocation4], 16
        $region72: #{res_ta_forward.1} parent=67 // pred_fallthru
          _
        %381 = sfence
        %p382 = pneg %p40
        %p383 = pneg %p37
        %p384 = pneg %p61
        %p385 = pneg %p58
        %p386 = pneg %p82
        %p387 = pneg %p79
        %p388 = pneg %p103
        %p389 = pneg %p100
        %p390 = pneg %p124
        %p391 = pneg %p121
        %p392 = pneg %p145
        %p393 = pneg %p142
        %p394 = pneg %p166
        %p395 = pneg %p163
        %p396 = pneg %p187
        %p397 = pneg %p184
        %p398 = pneg %p208
        %p399 = pneg %p205
        %p400 = pneg %p229
        %p401 = pneg %p226
        %p402 = pneg %p250
        %p403 = pneg %p247
        %p404 = scmp.lt.s32.totalorder %s24, 1
        %s405 = scalar_select %p404, %s24, 1
        %s406 = smul.addr %s405, 8
        %s407 = smul.addr %s406, 8
        %s408 = scalar_lea.vmem %s11, %s407
        %p409 = pneg %p276
        %p410 = pneg %p273
        %p411 = pneg %p302
        %p412 = pneg %p299
        %p413 = scmp.lt.s32.totalorder %s24, 1
        %s414 = scalar_select %p413, %s24, 1
        %s415 = smul.addr %s414, 8
        %s416 = smul.addr %s415, 8
        %s417 = scalar_lea.vmem %s12, %s416
        %p418 = scmp.lt.s32.totalorder %s24, 1
        %s419 = scalar_select %p418, %s24, 1
        %s420 = smul.addr %s419, 8
        %s421 = smul.addr %s420, 8
        %s422 = scalar_lea.vmem %s11, %s421
        %p423 = scmp.lt.s32.totalorder %s24, 1
        %s424 = scalar_select %p423, %s24, 1
        %s425 = smul.addr %s424, 8
        %s426 = smul.addr %s425, 8
        %s427 = scalar_lea.vmem %s12, %s426
        %v428 = vld [vmem:[%s422] sm:$0xff]
        %v429 = vld [vmem:[%s422 + $0x8] sm:$0xff]
        %v430 = vld [vmem:[%s422 + $0x10] sm:$0xff]
        %v431 = vld [vmem:[%s422 + $0x18] sm:$0xff]
        %v432 = vld [vmem:[%s422 + $0x20] sm:$0xff]
        %v433 = vld [vmem:[%s422 + $0x28] sm:$0xff]
        %v434 = vld [vmem:[%s422 + $0x30] sm:$0xff]
        %v435 = vld [vmem:[%s422 + $0x38] sm:$0xff]
        %v436 = vld [vmem:[%s1] sm:$0xff]
        %v437 = vld [vmem:[%s1 + $0x8] sm:$0xff]
        %v438 = vld [vmem:[%s1 + $0x10] sm:$0xff]
        %v439 = vld [vmem:[%s1 + $0x18] sm:$0xff]
        %v440 = vld [vmem:[%s1 + $0x20] sm:$0xff]
        %v441 = vld [vmem:[%s1 + $0x28] sm:$0xff]
        %v442 = vld [vmem:[%s1 + $0x30] sm:$0xff]
        %v443 = vld [vmem:[%s1 + $0x38] sm:$0xff]
        %v444 = vld [vmem:[%s1 + $0x40] sm:$0xff]
        %v445 = vld [vmem:[%s1 + $0x48] sm:$0xff]
        %v446 = vld [vmem:[%s1 + $0x50] sm:$0xff]
        %v447 = vld [vmem:[%s1 + $0x58] sm:$0xff]
        %v448 = vld [vmem:[%s1 + $0x60] sm:$0xff]
        %v449 = vld [vmem:[%s1 + $0x68] sm:$0xff]
        %v450 = vld [vmem:[%s1 + $0x70] sm:$0xff]
        %v451 = vld [vmem:[%s1 + $0x78] sm:$0xff]
        %v452 = vld [vmem:[%s1 + $0x80] sm:$0xff]
        %v453 = vld [vmem:[%s1 + $0x88] sm:$0xff]
        %v454 = vld [vmem:[%s1 + $0x90] sm:$0xff]
        %v455 = vld [vmem:[%s1 + $0x98] sm:$0xff]
        %v456 = vld [vmem:[%s1 + $0xa0] sm:$0xff]
        %v457 = vld [vmem:[%s1 + $0xa8] sm:$0xff]
        %v458 = vld [vmem:[%s1 + $0xb0] sm:$0xff]
        %v459 = vld [vmem:[%s1 + $0xb8] sm:$0xff]
        %v460 = vld [vmem:[%s1 + $0xc0] sm:$0xff]
        %v461 = vld [vmem:[%s1 + $0xc8] sm:$0xff]
        %v462 = vld [vmem:[%s1 + $0xd0] sm:$0xff]
        %v463 = vld [vmem:[%s1 + $0xd8] sm:$0xff]
        %v464 = vld [vmem:[%s1 + $0xe0] sm:$0xff]
        %v465 = vld [vmem:[%s1 + $0xe8] sm:$0xff]
        %v466 = vld [vmem:[%s1 + $0xf0] sm:$0xff]
        %v467 = vld [vmem:[%s1 + $0xf8] sm:$0xff]
        %v468 = vld [vmem:[%s1 + $0x100] sm:$0xff]
        %v469 = vld [vmem:[%s1 + $0x108] sm:$0xff]
        %v470 = vld [vmem:[%s1 + $0x110] sm:$0xff]
        %v471 = vld [vmem:[%s1 + $0x118] sm:$0xff]
        %v472 = vld [vmem:[%s1 + $0x120] sm:$0xff]
        %v473 = vld [vmem:[%s1 + $0x128] sm:$0xff]
        %v474 = vld [vmem:[%s1 + $0x130] sm:$0xff]
        %v475 = vld [vmem:[%s1 + $0x138] sm:$0xff]
        %v476 = vld [vmem:[%s1 + $0x140] sm:$0xff]
        %v477 = vld [vmem:[%s1 + $0x148] sm:$0xff]
        %v478 = vld [vmem:[%s1 + $0x150] sm:$0xff]
        %v479 = vld [vmem:[%s1 + $0x158] sm:$0xff]
        %v480 = vld [vmem:[%s1 + $0x160] sm:$0xff]
        %v481 = vld [vmem:[%s1 + $0x168] sm:$0xff]
        %v482 = vld [vmem:[%s1 + $0x170] sm:$0xff]
        %v483 = vld [vmem:[%s1 + $0x178] sm:$0xff]
        %v484 = vld [vmem:[%s1 + $0x180] sm:$0xff]
        %v485 = vld [vmem:[%s1 + $0x188] sm:$0xff]
        %v486 = vld [vmem:[%s1 + $0x190] sm:$0xff]
        %v487 = vld [vmem:[%s1 + $0x198] sm:$0xff]
        %v488 = vld [vmem:[%s1 + $0x1a0] sm:$0xff]
        %v489 = vld [vmem:[%s1 + $0x1a8] sm:$0xff]
        %v490 = vld [vmem:[%s1 + $0x1b0] sm:$0xff]
        %v491 = vld [vmem:[%s1 + $0x1b8] sm:$0xff]
        %v492 = vld [vmem:[%s1 + $0x1c0] sm:$0xff]
        %v493 = vld [vmem:[%s1 + $0x1c8] sm:$0xff]
        %v494 = vld [vmem:[%s1 + $0x1d0] sm:$0xff]
        %v495 = vld [vmem:[%s1 + $0x1d8] sm:$0xff]
        %v496 = vld [vmem:[%s1 + $0x1e0] sm:$0xff]
        %v497 = vld [vmem:[%s1 + $0x1e8] sm:$0xff]
        %v498 = vld [vmem:[%s1 + $0x1f0] sm:$0xff]
        %v499 = vld [vmem:[%s1 + $0x1f8] sm:$0xff]
        %500 = vmatprep.subr.mxu0 %v467
        %501 = vmatpush1.msra.mxu0 %v466
        %502 = vmatprep.subr.mxu0 %v465
        %503 = vmatpush1.msra.mxu0 %v464
        %504 = vmatprep.subr.mxu0 %v463
        %505 = vmatpush1.msra.mxu0 %v462
        %506 = vmatprep.subr.mxu0 %v461
        %507 = vmatpush1.msra.mxu0 %v460
        %508 = vmatprep.subr.mxu0 %v459
        %509 = vmatpush1.msra.mxu0 %v458
        %510 = vmatprep.subr.mxu0 %v457
        %511 = vmatpush1.msra.mxu0 %v456
        %512 = vmatprep.subr.mxu0 %v455
        %513 = vmatpush1.msra.mxu0 %v454
        %514 = vmatprep.subr.mxu0 %v453
        %515 = vmatpush1.msra.mxu0 %v452
        %516 = vmatprep.subr.mxu0 %v451
        %517 = vmatpush1.msra.mxu0 %v450
        %518 = vmatprep.subr.mxu0 %v449
        %519 = vmatpush1.msra.mxu0 %v448
        %520 = vmatprep.subr.mxu0 %v447
        %521 = vmatpush1.msra.mxu0 %v446
        %522 = vmatprep.subr.mxu0 %v445
        %523 = vmatpush1.msra.mxu0 %v444
        %524 = vmatprep.subr.mxu0 %v443
        %525 = vmatpush1.msra.mxu0 %v442
        %526 = vmatprep.subr.mxu0 %v441
        %527 = vmatpush1.msra.mxu0 %v440
        %528 = vmatprep.subr.mxu0 %v439
        %529 = vmatpush1.msra.mxu0 %v438
        %530 = vmatprep.subr.mxu0 %v437
        %531 = vmatpush1.msra.mxu0 %v436
        %532 = vmatprep.subr.mxu0 %v499
        %533 = vmatpush2.msra.mxu0 %v498
        %534 = vmatprep.subr.mxu0 %v497
        %535 = vmatpush2.msra.mxu0 %v496
        %536 = vmatprep.subr.mxu0 %v495
        %537 = vmatpush2.msra.mxu0 %v494
        %538 = vmatprep.subr.mxu0 %v493
        %539 = vmatpush2.msra.mxu0 %v492
        %540 = vmatprep.subr.mxu0 %v491
        %541 = vmatpush2.msra.mxu0 %v490
        %542 = vmatprep.subr.mxu0 %v489
        %543 = vmatpush2.msra.mxu0 %v488
        %544 = vmatprep.subr.mxu0 %v487
        %545 = vmatpush2.msra.mxu0 %v486
        %546 = vmatprep.subr.mxu0 %v485
        %547 = vmatpush2.msra.mxu0 %v484
        %548 = vmatprep.subr.mxu0 %v483
        %549 = vmatpush2.msra.mxu0 %v482
        %550 = vmatprep.subr.mxu0 %v481
        %551 = vmatpush2.msra.mxu0 %v480
        %552 = vmatprep.subr.mxu0 %v479
        %553 = vmatpush2.msra.mxu0 %v478
        %554 = vmatprep.subr.mxu0 %v477
        %555 = vmatpush2.msra.mxu0 %v476
        %556 = vmatprep.subr.mxu0 %v475
        %557 = vmatpush2.msra.mxu0 %v474
        %558 = vmatprep.subr.mxu0 %v473
        %559 = vmatpush2.msra.mxu0 %v472
        %560 = vmatprep.subr.mxu0 %v471
        %561 = vmatpush2.msra.mxu0 %v470
        %562 = vmatprep.subr.mxu0 %v469
        %563 = vmatpush2.msra.mxu0 %v468
        %564 = vmatprep.mubr.f32.mxu0 %v429
        %565 = vmatmul.mubr.f32.gmra.mxu0 %v428
        %v566 = vpop.f32.mrf.mxu0
        %v567 = vadd.f32 0.0, %v566
        %v568 = vpop.f32.mrf.mxu0
        %v569 = vadd.f32 0.0, %v568
        %570 = vmatprep.mubr.f32.mxu0 %v431
        %571 = vmatmul.mubr.f32.gmra.mxu0 %v430
        %v572 = vpop.f32.mrf.mxu0
        %v573 = vadd.f32 0.0, %v572
        %v574 = vpop.f32.mrf.mxu0
        %v575 = vadd.f32 0.0, %v574
        %576 = vmatprep.mubr.f32.mxu0 %v433
        %577 = vmatmul.mubr.f32.gmra.mxu0 %v432
        %v578 = vpop.f32.mrf.mxu0
        %v579 = vadd.f32 0.0, %v578
        %v580 = vpop.f32.mrf.mxu0
        %v581 = vadd.f32 0.0, %v580
        %582 = vmatprep.mubr.f32.mxu0 %v435
        %583 = vmatmul.mubr.f32.gmra.mxu0 %v434
        %v584 = vpop.f32.mrf.mxu0
        %v585 = vadd.f32 0.0, %v584
        %v586 = vpop.f32.mrf.mxu0
        %v587 = vadd.f32 0.0, %v586
        %588 = vdwg.mxu0
        %v589 = vsub.f32 %v428, %v567
        %v590 = vsub.f32 %v429, %v569
        %v591 = vsub.f32 %v430, %v573
        %v592 = vsub.f32 %v431, %v575
        %v593 = vsub.f32 %v432, %v579
        %v594 = vsub.f32 %v433, %v581
        %v595 = vsub.f32 %v434, %v585
        %v596 = vsub.f32 %v435, %v587
        %597 = vst [vmem:[#allocation2] sm:$0xff] %v589
        %598 = vst [vmem:[#allocation2 + $0x8] sm:$0xff] %v590
        %599 = vst [vmem:[#allocation2 + $0x10] sm:$0xff] %v591
        %600 = vst [vmem:[#allocation2 + $0x18] sm:$0xff] %v592
        %601 = vst [vmem:[#allocation2 + $0x20] sm:$0xff] %v593
        %602 = vst [vmem:[#allocation2 + $0x28] sm:$0xff] %v594
        %603 = vst [vmem:[#allocation2 + $0x30] sm:$0xff] %v595
        %604 = vst [vmem:[#allocation2 + $0x38] sm:$0xff] %v596
        %v605 = vmax.f32 %v589, %v593
        %v606 = vmax.f32 %v591, %v595
        %v607 = vmax.f32 %v605, %v606
        %v608 = vrot.slane %v607, 4
        %v609 = vmax.f32 %v607, %v608
        %v610 = vrot.slane %v609, 2
        %v611 = vmax.f32 %v609, %v610
        %v612 = vrot.slane %v611, 1
        %v613 = vmax.f32 %v611, %v612
        %v614 = vmax.f32 %v590, %v594
        %v615 = vmax.f32 %v592, %v596
        %v616 = vmax.f32 %v614, %v615
        %v617 = vrot.slane %v616, 4
        %v618 = vmax.f32 %v616, %v617
        %v619 = vrot.slane %v618, 2
        %v620 = vmax.f32 %v618, %v619
        %v621 = vrot.slane %v620, 1
        %v622 = vmax.f32 %v620, %v621
        %v623 = vadd.f32 %v589, %v591
        %v624 = vadd.f32 %v623, %v593
        %v625 = vadd.f32 %v624, %v595
        %v626 = vrot.slane %v625, 4
        %v627 = vadd.f32 %v625, %v626
        %v628 = vrot.slane %v627, 2
        %v629 = vadd.f32 %v627, %v628
        %v630 = vrot.slane %v629, 1
        %v631 = vadd.f32 %v629, %v630
        %v632 = vadd.f32 %v590, %v592
        %v633 = vadd.f32 %v632, %v594
        %v634 = vadd.f32 %v633, %v596
        %v635 = vrot.slane %v634, 4
        %v636 = vadd.f32 %v634, %v635
        %v637 = vrot.slane %v636, 2
        %v638 = vadd.f32 %v636, %v637
        %v639 = vrot.slane %v638, 1
        %v640 = vadd.f32 %v638, %v639
        %v641 = vmul.f32 %v631, 0.03125
        %v642 = vmul.f32 %v640, 0.03125
        %v643 = vld [vmem:[%s2] sm:$0xff]
        %v644 = vld [vmem:[%s2 + $0x8] sm:$0xff]
        %v645 = vld [vmem:[%s2 + $0x10] sm:$0xff]
        %v646 = vld [vmem:[%s2 + $0x18] sm:$0xff]
        %v647 = vld [vmem:[%s2 + $0x20] sm:$0xff]
        %v648 = vld [vmem:[%s2 + $0x28] sm:$0xff]
        %v649 = vld [vmem:[%s2 + $0x30] sm:$0xff]
        %v650 = vld [vmem:[%s2 + $0x38] sm:$0xff]
        %v651 = vld [vmem:[%s2 + $0x40] sm:$0xff]
        %v652 = vld [vmem:[%s2 + $0x48] sm:$0xff]
        %v653 = vld [vmem:[%s2 + $0x50] sm:$0xff]
        %v654 = vld [vmem:[%s2 + $0x58] sm:$0xff]
        %v655 = vld [vmem:[%s2 + $0x60] sm:$0xff]
        %v656 = vld [vmem:[%s2 + $0x68] sm:$0xff]
        %v657 = vld [vmem:[%s2 + $0x70] sm:$0xff]
        %v658 = vld [vmem:[%s2 + $0x78] sm:$0xff]
        %v659 = vld [vmem:[%s2 + $0x80] sm:$0xff]
        %v660 = vld [vmem:[%s2 + $0x88] sm:$0xff]
        %v661 = vld [vmem:[%s2 + $0x90] sm:$0xff]
        %v662 = vld [vmem:[%s2 + $0x98] sm:$0xff]
        %v663 = vld [vmem:[%s2 + $0xa0] sm:$0xff]
        %v664 = vld [vmem:[%s2 + $0xa8] sm:$0xff]
        %v665 = vld [vmem:[%s2 + $0xb0] sm:$0xff]
        %v666 = vld [vmem:[%s2 + $0xb8] sm:$0xff]
        %v667 = vld [vmem:[%s2 + $0xc0] sm:$0xff]
        %v668 = vld [vmem:[%s2 + $0xc8] sm:$0xff]
        %v669 = vld [vmem:[%s2 + $0xd0] sm:$0xff]
        %v670 = vld [vmem:[%s2 + $0xd8] sm:$0xff]
        %v671 = vld [vmem:[%s2 + $0xe0] sm:$0xff]
        %v672 = vld [vmem:[%s2 + $0xe8] sm:$0xff]
        %v673 = vld [vmem:[%s2 + $0xf0] sm:$0xff]
        %v674 = vld [vmem:[%s2 + $0xf8] sm:$0xff]
        %675 = vmatprep.subr.mxu0 0.0
        %676 = vmatpush1.msra.mxu0 %v658
        %677 = vmatprep.subr.mxu0 0.0
        %678 = vmatpush1.msra.mxu0 %v657
        %679 = vmatprep.subr.mxu0 0.0
        %680 = vmatpush1.msra.mxu0 %v656
        %681 = vmatprep.subr.mxu0 0.0
        %682 = vmatpush1.msra.mxu0 %v655
        %683 = vmatprep.subr.mxu0 0.0
        %684 = vmatpush1.msra.mxu0 %v654
        %685 = vmatprep.subr.mxu0 0.0
        %686 = vmatpush1.msra.mxu0 %v653
        %687 = vmatprep.subr.mxu0 0.0
        %688 = vmatpush1.msra.mxu0 %v652
        %689 = vmatprep.subr.mxu0 0.0
        %690 = vmatpush1.msra.mxu0 %v651
        %691 = vmatprep.subr.mxu0 0.0
        %692 = vmatpush1.msra.mxu0 %v650
        %693 = vmatprep.subr.mxu0 0.0
        %694 = vmatpush1.msra.mxu0 %v649
        %695 = vmatprep.subr.mxu0 0.0
        %696 = vmatpush1.msra.mxu0 %v648
        %697 = vmatprep.subr.mxu0 0.0
        %698 = vmatpush1.msra.mxu0 %v647
        %699 = vmatprep.subr.mxu0 0.0
        %700 = vmatpush1.msra.mxu0 %v646
        %701 = vmatprep.subr.mxu0 0.0
        %702 = vmatpush1.msra.mxu0 %v645
        %703 = vmatprep.subr.mxu0 0.0
        %704 = vmatpush1.msra.mxu0 %v644
        %705 = vmatprep.subr.mxu0 0.0
        %706 = vmatpush1.msra.mxu0 %v643
        %707 = vmatprep.subr.mxu0 0.0
        %708 = vmatpush2.msra.mxu0 %v674
        %709 = vmatprep.subr.mxu0 0.0
        %710 = vmatpush2.msra.mxu0 %v673
        %711 = vmatprep.subr.mxu0 0.0
        %712 = vmatpush2.msra.mxu0 %v672
        %713 = vmatprep.subr.mxu0 0.0
        %714 = vmatpush2.msra.mxu0 %v671
        %715 = vmatprep.subr.mxu0 0.0
        %716 = vmatpush2.msra.mxu0 %v670
        %717 = vmatprep.subr.mxu0 0.0
        %718 = vmatpush2.msra.mxu0 %v669
        %719 = vmatprep.subr.mxu0 0.0
        %720 = vmatpush2.msra.mxu0 %v668
        %721 = vmatprep.subr.mxu0 0.0
        %722 = vmatpush2.msra.mxu0 %v667
        %723 = vmatprep.subr.mxu0 0.0
        %724 = vmatpush2.msra.mxu0 %v666
        %725 = vmatprep.subr.mxu0 0.0
        %726 = vmatpush2.msra.mxu0 %v665
        %727 = vmatprep.subr.mxu0 0.0
        %728 = vmatpush2.msra.mxu0 %v664
        %729 = vmatprep.subr.mxu0 0.0
        %730 = vmatpush2.msra.mxu0 %v663
        %731 = vmatprep.subr.mxu0 0.0
        %732 = vmatpush2.msra.mxu0 %v662
        %733 = vmatprep.subr.mxu0 0.0
        %734 = vmatpush2.msra.mxu0 %v661
        %735 = vmatprep.subr.mxu0 0.0
        %736 = vmatpush2.msra.mxu0 %v660
        %737 = vmatprep.subr.mxu0 0.0
        %738 = vmatpush2.msra.mxu0 %v659
        %739 = vmatprep.mubr.f32.mxu0 %v590
        %740 = vmatmul.mubr.f32.gmra.mxu0 %v589
        %v741 = vpop.f32.mrf.mxu0
        %v742 = vadd.f32 0.0, %v741
        %v743 = vpop.f32.mrf.mxu0
        %744 = vmatprep.mubr.f32.mxu0 %v592
        %745 = vmatmul.mubr.f32.gmra.mxu0 %v591
        %v746 = vpop.f32.mrf.mxu0
        %v747 = vadd.f32 0.0, %v746
        %v748 = vpop.f32.mrf.mxu0
        %749 = vmatprep.mubr.f32.mxu0 %v594
        %750 = vmatmul.mubr.f32.gmra.mxu0 %v593
        %v751 = vpop.f32.mrf.mxu0
        %v752 = vadd.f32 0.0, %v751
        %v753 = vpop.f32.mrf.mxu0
        %754 = vmatprep.mubr.f32.mxu0 %v596
        %755 = vmatmul.mubr.f32.gmra.mxu0 %v595
        %v756 = vpop.f32.mrf.mxu0
        %v757 = vadd.f32 0.0, %v756
        %v758 = vpop.f32.mrf.mxu0
        %759 = vdwg.mxu0
        %v760 = vld [vmem:[%s3] sm:$0xff]
        %v761 = vld [vmem:[%s3 + $0x8] sm:$0xff]
        %v762 = vld [vmem:[%s3 + $0x10] sm:$0xff]
        %v763 = vld [vmem:[%s3 + $0x18] sm:$0xff]
        %v764 = vld [vmem:[%s3 + $0x20] sm:$0xff]
        %v765 = vld [vmem:[%s3 + $0x28] sm:$0xff]
        %v766 = vld [vmem:[%s3 + $0x30] sm:$0xff]
        %v767 = vld [vmem:[%s3 + $0x38] sm:$0xff]
        %v768 = vld [vmem:[%s3 + $0x40] sm:$0xff]
        %v769 = vld [vmem:[%s3 + $0x48] sm:$0xff]
        %v770 = vld [vmem:[%s3 + $0x50] sm:$0xff]
        %v771 = vld [vmem:[%s3 + $0x58] sm:$0xff]
        %v772 = vld [vmem:[%s3 + $0x60] sm:$0xff]
        %v773 = vld [vmem:[%s3 + $0x68] sm:$0xff]
        %v774 = vld [vmem:[%s3 + $0x70] sm:$0xff]
        %v775 = vld [vmem:[%s3 + $0x78] sm:$0xff]
        %v776 = vld [vmem:[%s3 + $0x80] sm:$0xff]
        %v777 = vld [vmem:[%s3 + $0x88] sm:$0xff]
        %v778 = vld [vmem:[%s3 + $0x90] sm:$0xff]
        %v779 = vld [vmem:[%s3 + $0x98] sm:$0xff]
        %v780 = vld [vmem:[%s3 + $0xa0] sm:$0xff]
        %v781 = vld [vmem:[%s3 + $0xa8] sm:$0xff]
        %v782 = vld [vmem:[%s3 + $0xb0] sm:$0xff]
        %v783 = vld [vmem:[%s3 + $0xb8] sm:$0xff]
        %v784 = vld [vmem:[%s3 + $0xc0] sm:$0xff]
        %v785 = vld [vmem:[%s3 + $0xc8] sm:$0xff]
        %v786 = vld [vmem:[%s3 + $0xd0] sm:$0xff]
        %v787 = vld [vmem:[%s3 + $0xd8] sm:$0xff]
        %v788 = vld [vmem:[%s3 + $0xe0] sm:$0xff]
        %v789 = vld [vmem:[%s3 + $0xe8] sm:$0xff]
        %v790 = vld [vmem:[%s3 + $0xf0] sm:$0xff]
        %v791 = vld [vmem:[%s3 + $0xf8] sm:$0xff]
        %792 = vmatprep.subr.mxu0 0.0
        %793 = vmatpush1.msra.mxu0 %v775
        %794 = vmatprep.subr.mxu0 0.0
        %795 = vmatpush1.msra.mxu0 %v774
        %796 = vmatprep.subr.mxu0 0.0
        %797 = vmatpush1.msra.mxu0 %v773
        %798 = vmatprep.subr.mxu0 0.0
        %799 = vmatpush1.msra.mxu0 %v772
        %800 = vmatprep.subr.mxu0 0.0
        %801 = vmatpush1.msra.mxu0 %v771
        %802 = vmatprep.subr.mxu0 0.0
        %803 = vmatpush1.msra.mxu0 %v770
        %804 = vmatprep.subr.mxu0 0.0
        %805 = vmatpush1.msra.mxu0 %v769
        %806 = vmatprep.subr.mxu0 0.0
        %807 = vmatpush1.msra.mxu0 %v768
        %808 = vmatprep.subr.mxu0 0.0
        %809 = vmatpush1.msra.mxu0 %v767
        %810 = vmatprep.subr.mxu0 0.0
        %811 = vmatpush1.msra.mxu0 %v766
        %812 = vmatprep.subr.mxu0 0.0
        %813 = vmatpush1.msra.mxu0 %v765
        %814 = vmatprep.subr.mxu0 0.0
        %815 = vmatpush1.msra.mxu0 %v764
        %816 = vmatprep.subr.mxu0 0.0
        %817 = vmatpush1.msra.mxu0 %v763
        %818 = vmatprep.subr.mxu0 0.0
        %819 = vmatpush1.msra.mxu0 %v762
        %820 = vmatprep.subr.mxu0 0.0
        %821 = vmatpush1.msra.mxu0 %v761
        %822 = vmatprep.subr.mxu0 0.0
        %823 = vmatpush1.msra.mxu0 %v760
        %824 = vmatprep.subr.mxu0 0.0
        %825 = vmatpush2.msra.mxu0 %v791
        %826 = vmatprep.subr.mxu0 0.0
        %827 = vmatpush2.msra.mxu0 %v790
        %828 = vmatprep.subr.mxu0 0.0
        %829 = vmatpush2.msra.mxu0 %v789
        %830 = vmatprep.subr.mxu0 0.0
        %831 = vmatpush2.msra.mxu0 %v788
        %832 = vmatprep.subr.mxu0 0.0
        %833 = vmatpush2.msra.mxu0 %v787
        %834 = vmatprep.subr.mxu0 0.0
        %835 = vmatpush2.msra.mxu0 %v786
        %836 = vmatprep.subr.mxu0 0.0
        %837 = vmatpush2.msra.mxu0 %v785
        %838 = vmatprep.subr.mxu0 0.0
        %839 = vmatpush2.msra.mxu0 %v784
        %840 = vmatprep.subr.mxu0 0.0
        %841 = vmatpush2.msra.mxu0 %v783
        %842 = vmatprep.subr.mxu0 0.0
        %843 = vmatpush2.msra.mxu0 %v782
        %844 = vmatprep.subr.mxu0 0.0
        %845 = vmatpush2.msra.mxu0 %v781
        %846 = vmatprep.subr.mxu0 0.0
        %847 = vmatpush2.msra.mxu0 %v780
        %848 = vmatprep.subr.mxu0 0.0
        %849 = vmatpush2.msra.mxu0 %v779
        %850 = vmatprep.subr.mxu0 0.0
        %851 = vmatpush2.msra.mxu0 %v778
        %852 = vmatprep.subr.mxu0 0.0
        %853 = vmatpush2.msra.mxu0 %v777
        %854 = vmatprep.subr.mxu0 0.0
        %855 = vmatpush2.msra.mxu0 %v776
        %856 = vmatprep.mubr.f32.mxu0 %v590
        %857 = vmatmul.mubr.f32.gmra.mxu0 %v589
        %v858 = vpop.f32.mrf.mxu0
        %v859 = vadd.f32 0.0, %v858
        %v860 = vpop.f32.mrf.mxu0
        %861 = vmatprep.mubr.f32.mxu0 %v592
        %862 = vmatmul.mubr.f32.gmra.mxu0 %v591
        %v863 = vpop.f32.mrf.mxu0
        %v864 = vadd.f32 0.0, %v863
        %v865 = vpop.f32.mrf.mxu0
        %866 = vmatprep.mubr.f32.mxu0 %v594
        %867 = vmatmul.mubr.f32.gmra.mxu0 %v593
        %v868 = vpop.f32.mrf.mxu0
        %v869 = vadd.f32 0.0, %v868
        %v870 = vpop.f32.mrf.mxu0
        %871 = vmatprep.mubr.f32.mxu0 %v596
        %872 = vmatmul.mubr.f32.gmra.mxu0 %v595
        %v873 = vpop.f32.mrf.mxu0
        %v874 = vadd.f32 0.0, %v873
        %v875 = vpop.f32.mrf.mxu0
        %876 = vdwg.mxu0
        %v877 = vlaneseq
        %v878 = vand.u32 %v877, 127
        %v879 = vld [vmem:[#allocation2] sm:$0xff]
        %v880 = vld [vmem:[#allocation2 + $0x10] sm:$0xff]
        %v881 = vld [vmem:[#allocation2 + $0x20] sm:$0xff]
        %v882 = vld [vmem:[#allocation2 + $0x30] sm:$0xff]
        %vm883 = vcmp.eq.s32.totalorder %v878, 0
        %vm884 = vcmask 130048
        %v885 = vsel %vm884, %v879, -inf
        %886 = vmax.xlane.f32.xlu0 %v885
        %v887 = vpop.xlane.xlu0 %886
        %v888 = vsel %vm884, %v880, -inf
        %889 = vmax.xlane.f32.xlu0 %v888
        %v890 = vpop.xlane.xlu0 %889
        %v891 = vsel %vm884, %v881, -inf
        %892 = vmax.xlane.f32.xlu0 %v891
        %v893 = vpop.xlane.xlu0 %892
        %v894 = vsel %vm884, %v882, -inf
        %895 = vmax.xlane.f32.xlu0 %v894
        %v896 = vpop.xlane.xlu0 %895
        %v897 = vsel %vm883, 1, 0
        %vm898 = vcmp.eq.s32.totalorder %v897, 1
        %v899 = vsel %vm898, %v887, 0.0
        %v900 = vsel %vm898, %v890, 0.0
        %v901 = vsel %vm898, %v893, 0.0
        %v902 = vsel %vm898, %v896, 0.0
        %907 = vrot.lane.b32.xlu0 %v879, 112
        %v908 = vpop.permute.xlu0 %907
        %909 = vrot.lane.b32.xlu0 %v880, 112
        %v910 = vpop.permute.xlu0 %909
        %911 = vrot.lane.b32.xlu0 %v881, 112
        %v912 = vpop.permute.xlu0 %911
        %913 = vrot.lane.b32.xlu0 %v882, 112
        %v914 = vpop.permute.xlu0 %913
        %v919 = vmax.f32 %v879, %v908
        %v920 = vmax.f32 %v880, %v910
        %v921 = vmax.f32 %v881, %v912
        %v922 = vmax.f32 %v882, %v914
        %vm923 = vcmp.eq.s32.totalorder %v878, 1
        %vm924 = vcmask 261248
        %v925 = vsel %vm924, %v879, -inf
        %926 = vmax.xlane.f32.xlu0 %v925
        %v927 = vpop.xlane.xlu0 %926
        %v928 = vsel %vm924, %v880, -inf
        %929 = vmax.xlane.f32.xlu0 %v928
        %v930 = vpop.xlane.xlu0 %929
        %v931 = vsel %vm924, %v881, -inf
        %932 = vmax.xlane.f32.xlu0 %v931
        %v933 = vpop.xlane.xlu0 %932
        %v934 = vsel %vm924, %v882, -inf
        %935 = vmax.xlane.f32.xlu0 %v934
        %v936 = vpop.xlane.xlu0 %935
        %v937 = vsel %vm923, 1, 0
        %vm938 = vcmp.eq.s32.totalorder %v937, 1
        %v939 = vsel %vm938, %v927, %v899
        %v940 = vsel %vm938, %v930, %v900
        %v941 = vsel %vm938, %v933, %v901
        %v942 = vsel %vm938, %v936, %v902
        %943 = vrot.lane.b32.xlu0 %v879, 96
        %v944 = vpop.permute.xlu0 %943
        %945 = vrot.lane.b32.xlu0 %v880, 96
        %v946 = vpop.permute.xlu0 %945
        %947 = vrot.lane.b32.xlu0 %v881, 96
        %v948 = vpop.permute.xlu0 %947
        %949 = vrot.lane.b32.xlu0 %v882, 96
        %v950 = vpop.permute.xlu0 %949
        %v955 = vmax.f32 %v919, %v944
        %v956 = vmax.f32 %v920, %v946
        %v957 = vmax.f32 %v921, %v948
        %v958 = vmax.f32 %v922, %v950
        %vm959 = vcmp.eq.s32.totalorder %v878, 2
        %vm960 = vcmask 392448
        %v961 = vsel %vm960, %v879, -inf
        %962 = vmax.xlane.f32.xlu0 %v961
        %v963 = vpop.xlane.xlu0 %962
        %v964 = vsel %vm960, %v880, -inf
        %965 = vmax.xlane.f32.xlu0 %v964
        %v966 = vpop.xlane.xlu0 %965
        %v967 = vsel %vm960, %v881, -inf
        %968 = vmax.xlane.f32.xlu0 %v967
        %v969 = vpop.xlane.xlu0 %968
        %v970 = vsel %vm960, %v882, -inf
        %971 = vmax.xlane.f32.xlu0 %v970
        %v972 = vpop.xlane.xlu0 %971
        %v973 = vsel %vm959, 1, 0
        %vm974 = vcmp.eq.s32.totalorder %v973, 1
        %v975 = vsel %vm974, %v963, %v939
        %v976 = vsel %vm974, %v966, %v940
        %v977 = vsel %vm974, %v969, %v941
        %v978 = vsel %vm974, %v972, %v942
        %979 = vrot.lane.b32.xlu0 %v879, 80
        %v980 = vpop.permute.xlu0 %979
        %981 = vrot.lane.b32.xlu0 %v880, 80
        %v982 = vpop.permute.xlu0 %981
        %983 = vrot.lane.b32.xlu0 %v881, 80
        %v984 = vpop.permute.xlu0 %983
        %985 = vrot.lane.b32.xlu0 %v882, 80
        %v986 = vpop.permute.xlu0 %985
        %v991 = vmax.f32 %v955, %v980
        %v992 = vmax.f32 %v956, %v982
        %v993 = vmax.f32 %v957, %v984
        %v994 = vmax.f32 %v958, %v986
        %vm995 = vcmp.eq.s32.totalorder %v878, 3
        %vm996 = vcmask 523648
        %v997 = vsel %vm996, %v879, -inf
        %998 = vmax.xlane.f32.xlu0 %v997
        %v999 = vpop.xlane.xlu0 %998
        %v1000 = vsel %vm996, %v880, -inf
        %1001 = vmax.xlane.f32.xlu0 %v1000
        %v1002 = vpop.xlane.xlu0 %1001
        %v1003 = vsel %vm996, %v881, -inf
        %1004 = vmax.xlane.f32.xlu0 %v1003
        %v1005 = vpop.xlane.xlu0 %1004
        %v1006 = vsel %vm996, %v882, -inf
        %1007 = vmax.xlane.f32.xlu0 %v1006
        %v1008 = vpop.xlane.xlu0 %1007
        %v1009 = vsel %vm995, 1, 0
        %vm1010 = vcmp.eq.s32.totalorder %v1009, 1
        %v1011 = vsel %vm1010, %v999, %v975
        %v1012 = vsel %vm1010, %v1002, %v976
        %v1013 = vsel %vm1010, %v1005, %v977
        %v1014 = vsel %vm1010, %v1008, %v978
        %1015 = vrot.lane.b32.xlu0 %v879, 64
        %v1016 = vpop.permute.xlu0 %1015
        %1017 = vrot.lane.b32.xlu0 %v880, 64
        %v1018 = vpop.permute.xlu0 %1017
        %1019 = vrot.lane.b32.xlu0 %v881, 64
        %v1020 = vpop.permute.xlu0 %1019
        %1021 = vrot.lane.b32.xlu0 %v882, 64
        %v1022 = vpop.permute.xlu0 %1021
        %v1027 = vmax.f32 %v991, %v1016
        %v1028 = vmax.f32 %v992, %v1018
        %v1029 = vmax.f32 %v993, %v1020
        %v1030 = vmax.f32 %v994, %v1022
        %vm1031 = vcmp.eq.s32.totalorder %v878, 4
        %vm1032 = vcmask 654848
        %v1033 = vsel %vm1032, %v879, -inf
        %1034 = vmax.xlane.f32.xlu0 %v1033
        %v1035 = vpop.xlane.xlu0 %1034
        %v1036 = vsel %vm1032, %v880, -inf
        %1037 = vmax.xlane.f32.xlu0 %v1036
        %v1038 = vpop.xlane.xlu0 %1037
        %v1039 = vsel %vm1032, %v881, -inf
        %1040 = vmax.xlane.f32.xlu0 %v1039
        %v1041 = vpop.xlane.xlu0 %1040
        %v1042 = vsel %vm1032, %v882, -inf
        %1043 = vmax.xlane.f32.xlu0 %v1042
        %v1044 = vpop.xlane.xlu0 %1043
        %v1045 = vsel %vm1031, 1, 0
        %vm1046 = vcmp.eq.s32.totalorder %v1045, 1
        %v1047 = vsel %vm1046, %v1035, %v1011
        %v1048 = vsel %vm1046, %v1038, %v1012
        %v1049 = vsel %vm1046, %v1041, %v1013
        %v1050 = vsel %vm1046, %v1044, %v1014
        %1051 = vrot.lane.b32.xlu0 %v879, 48
        %v1052 = vpop.permute.xlu0 %1051
        %1053 = vrot.lane.b32.xlu0 %v880, 48
        %v1054 = vpop.permute.xlu0 %1053
        %1055 = vrot.lane.b32.xlu0 %v881, 48
        %v1056 = vpop.permute.xlu0 %1055
        %1057 = vrot.lane.b32.xlu0 %v882, 48
        %v1058 = vpop.permute.xlu0 %1057
        %v1063 = vmax.f32 %v1027, %v1052
        %v1064 = vmax.f32 %v1028, %v1054
        %v1065 = vmax.f32 %v1029, %v1056
        %v1066 = vmax.f32 %v1030, %v1058
        %vm1067 = vcmp.eq.s32.totalorder %v878, 5
        %vm1068 = vcmask 786048
        %v1069 = vsel %vm1068, %v879, -inf
        %1070 = vmax.xlane.f32.xlu0 %v1069
        %v1071 = vpop.xlane.xlu0 %1070
        %v1072 = vsel %vm1068, %v880, -inf
        %1073 = vmax.xlane.f32.xlu0 %v1072
        %v1074 = vpop.xlane.xlu0 %1073
        %v1075 = vsel %vm1068, %v881, -inf
        %1076 = vmax.xlane.f32.xlu0 %v1075
        %v1077 = vpop.xlane.xlu0 %1076
        %v1078 = vsel %vm1068, %v882, -inf
        %1079 = vmax.xlane.f32.xlu0 %v1078
        %v1080 = vpop.xlane.xlu0 %1079
        %v1081 = vsel %vm1067, 1, 0
        %vm1082 = vcmp.eq.s32.totalorder %v1081, 1
        %v1083 = vsel %vm1082, %v1071, %v1047
        %v1084 = vsel %vm1082, %v1074, %v1048
        %v1085 = vsel %vm1082, %v1077, %v1049
        %v1086 = vsel %vm1082, %v1080, %v1050
        %1087 = vrot.lane.b32.xlu0 %v879, 32
        %v1088 = vpop.permute.xlu0 %1087
        %1089 = vrot.lane.b32.xlu0 %v880, 32
        %v1090 = vpop.permute.xlu0 %1089
        %1091 = vrot.lane.b32.xlu0 %v881, 32
        %v1092 = vpop.permute.xlu0 %1091
        %1093 = vrot.lane.b32.xlu0 %v882, 32
        %v1094 = vpop.permute.xlu0 %1093
        %v1099 = vmax.f32 %v1063, %v1088
        %v1100 = vmax.f32 %v1064, %v1090
        %v1101 = vmax.f32 %v1065, %v1092
        %v1102 = vmax.f32 %v1066, %v1094
        %vm1103 = vcmp.eq.s32.totalorder %v878, 6
        %vm1104 = vcmask 917248
        %v1105 = vsel %vm1104, %v879, -inf
        %1106 = vmax.xlane.f32.xlu0 %v1105
        %v1107 = vpop.xlane.xlu0 %1106
        %v1108 = vsel %vm1104, %v880, -inf
        %1109 = vmax.xlane.f32.xlu0 %v1108
        %v1110 = vpop.xlane.xlu0 %1109
        %v1111 = vsel %vm1104, %v881, -inf
        %1112 = vmax.xlane.f32.xlu0 %v1111
        %v1113 = vpop.xlane.xlu0 %1112
        %v1114 = vsel %vm1104, %v882, -inf
        %1115 = vmax.xlane.f32.xlu0 %v1114
        %v1116 = vpop.xlane.xlu0 %1115
        %v1117 = vsel %vm1103, 1, 0
        %vm1118 = vcmp.eq.s32.totalorder %v1117, 1
        %v1119 = vsel %vm1118, %v1107, %v1083
        %v1120 = vsel %vm1118, %v1110, %v1084
        %v1121 = vsel %vm1118, %v1113, %v1085
        %v1122 = vsel %vm1118, %v1116, %v1086
        %1123 = vrot.lane.b32.xlu0 %v879, 16
        %v1124 = vpop.permute.xlu0 %1123
        %1125 = vrot.lane.b32.xlu0 %v880, 16
        %v1126 = vpop.permute.xlu0 %1125
        %1127 = vrot.lane.b32.xlu0 %v881, 16
        %v1128 = vpop.permute.xlu0 %1127
        %1129 = vrot.lane.b32.xlu0 %v882, 16
        %v1130 = vpop.permute.xlu0 %1129
        %v1135 = vmax.f32 %v1099, %v1124
        %v1136 = vmax.f32 %v1100, %v1126
        %v1137 = vmax.f32 %v1101, %v1128
        %v1138 = vmax.f32 %v1102, %v1130
        %vm1139 = vcmp.eq.s32.totalorder %v878, 7
        %vm1140 = vcmask 1048448
        %v1141 = vsel %vm1140, %v879, -inf
        %1142 = vmax.xlane.f32.xlu0 %v1141
        %v1143 = vpop.xlane.xlu0 %1142
        %v1144 = vsel %vm1140, %v880, -inf
        %1145 = vmax.xlane.f32.xlu0 %v1144
        %v1146 = vpop.xlane.xlu0 %1145
        %v1147 = vsel %vm1140, %v881, -inf
        %1148 = vmax.xlane.f32.xlu0 %v1147
        %v1149 = vpop.xlane.xlu0 %1148
        %v1150 = vsel %vm1140, %v882, -inf
        %1151 = vmax.xlane.f32.xlu0 %v1150
        %v1152 = vpop.xlane.xlu0 %1151
        %v1153 = vsel %vm1139, 1, 0
        %vm1154 = vcmp.eq.s32.totalorder %v1153, 1
        %v1155 = vsel %vm1154, %v1143, %v1119
        %v1156 = vsel %vm1154, %v1146, %v1120
        %v1157 = vsel %vm1154, %v1149, %v1121
        %v1158 = vsel %vm1154, %v1152, %v1122
        %v1159 = vld [vmem:[#allocation2 + $0x8] sm:$0xff]
        %v1160 = vld [vmem:[#allocation2 + $0x18] sm:$0xff]
        %v1161 = vld [vmem:[#allocation2 + $0x28] sm:$0xff]
        %v1162 = vld [vmem:[#allocation2 + $0x38] sm:$0xff]
        %v1163 = vmax.f32 %v1135, %v1159
        %v1164 = vmax.f32 %v1136, %v1160
        %v1165 = vmax.f32 %v1137, %v1161
        %v1166 = vmax.f32 %v1138, %v1162
        %vm1167 = vcmp.eq.s32.totalorder %v878, 8
        %v1168 = vsel %vm884, %v1159, -inf
        %1169 = vmax.xlane.f32.xlu0 %v1168
        %v1170 = vpop.xlane.xlu0 %1169
        %v1171 = vsel %vm884, %v1160, -inf
        %1172 = vmax.xlane.f32.xlu0 %v1171
        %v1173 = vpop.xlane.xlu0 %1172
        %v1174 = vsel %vm884, %v1161, -inf
        %1175 = vmax.xlane.f32.xlu0 %v1174
        %v1176 = vpop.xlane.xlu0 %1175
        %v1177 = vsel %vm884, %v1162, -inf
        %1178 = vmax.xlane.f32.xlu0 %v1177
        %v1179 = vpop.xlane.xlu0 %1178
        %v1180 = vsel %vm1167, 1, 0
        %vm1181 = vcmp.eq.s32.totalorder %v1180, 1
        %v1182 = vsel %vm1181, %v1170, %v1155
        %v1183 = vsel %vm1181, %v1173, %v1156
        %v1184 = vsel %vm1181, %v1176, %v1157
        %v1185 = vsel %vm1181, %v1179, %v1158
        %1190 = vrot.lane.b32.xlu0 %v1159, 112
        %v1191 = vpop.permute.xlu0 %1190
        %1192 = vrot.lane.b32.xlu0 %v1160, 112
        %v1193 = vpop.permute.xlu0 %1192
        %1194 = vrot.lane.b32.xlu0 %v1161, 112
        %v1195 = vpop.permute.xlu0 %1194
        %1196 = vrot.lane.b32.xlu0 %v1162, 112
        %v1197 = vpop.permute.xlu0 %1196
        %v1202 = vmax.f32 %v1163, %v1191
        %v1203 = vmax.f32 %v1164, %v1193
        %v1204 = vmax.f32 %v1165, %v1195
        %v1205 = vmax.f32 %v1166, %v1197
        %vm1206 = vcmp.eq.s32.totalorder %v878, 9
        %v1207 = vsel %vm924, %v1159, -inf
        %1208 = vmax.xlane.f32.xlu0 %v1207
        %v1209 = vpop.xlane.xlu0 %1208
        %v1210 = vsel %vm924, %v1160, -inf
        %1211 = vmax.xlane.f32.xlu0 %v1210
        %v1212 = vpop.xlane.xlu0 %1211
        %v1213 = vsel %vm924, %v1161, -inf
        %1214 = vmax.xlane.f32.xlu0 %v1213
        %v1215 = vpop.xlane.xlu0 %1214
        %v1216 = vsel %vm924, %v1162, -inf
        %1217 = vmax.xlane.f32.xlu0 %v1216
        %v1218 = vpop.xlane.xlu0 %1217
        %v1219 = vsel %vm1206, 1, 0
        %vm1220 = vcmp.eq.s32.totalorder %v1219, 1
        %v1221 = vsel %vm1220, %v1209, %v1182
        %v1222 = vsel %vm1220, %v1212, %v1183
        %v1223 = vsel %vm1220, %v1215, %v1184
        %v1224 = vsel %vm1220, %v1218, %v1185
        %1225 = vrot.lane.b32.xlu0 %v1159, 96
        %v1226 = vpop.permute.xlu0 %1225
        %1227 = vrot.lane.b32.xlu0 %v1160, 96
        %v1228 = vpop.permute.xlu0 %1227
        %1229 = vrot.lane.b32.xlu0 %v1161, 96
        %v1230 = vpop.permute.xlu0 %1229
        %1231 = vrot.lane.b32.xlu0 %v1162, 96
        %v1232 = vpop.permute.xlu0 %1231
        %v1237 = vmax.f32 %v1202, %v1226
        %v1238 = vmax.f32 %v1203, %v1228
        %v1239 = vmax.f32 %v1204, %v1230
        %v1240 = vmax.f32 %v1205, %v1232
        %vm1241 = vcmp.eq.s32.totalorder %v878, 10
        %v1242 = vsel %vm960, %v1159, -inf
        %1243 = vmax.xlane.f32.xlu0 %v1242
        %v1244 = vpop.xlane.xlu0 %1243
        %v1245 = vsel %vm960, %v1160, -inf
        %1246 = vmax.xlane.f32.xlu0 %v1245
        %v1247 = vpop.xlane.xlu0 %1246
        %v1248 = vsel %vm960, %v1161, -inf
        %1249 = vmax.xlane.f32.xlu0 %v1248
        %v1250 = vpop.xlane.xlu0 %1249
        %v1251 = vsel %vm960, %v1162, -inf
        %1252 = vmax.xlane.f32.xlu0 %v1251
        %v1253 = vpop.xlane.xlu0 %1252
        %v1254 = vsel %vm1241, 1, 0
        %vm1255 = vcmp.eq.s32.totalorder %v1254, 1
        %v1256 = vsel %vm1255, %v1244, %v1221
        %v1257 = vsel %vm1255, %v1247, %v1222
        %v1258 = vsel %vm1255, %v1250, %v1223
        %v1259 = vsel %vm1255, %v1253, %v1224
        %1260 = vrot.lane.b32.xlu0 %v1159, 80
        %v1261 = vpop.permute.xlu0 %1260
        %1262 = vrot.lane.b32.xlu0 %v1160, 80
        %v1263 = vpop.permute.xlu0 %1262
        %1264 = vrot.lane.b32.xlu0 %v1161, 80
        %v1265 = vpop.permute.xlu0 %1264
        %1266 = vrot.lane.b32.xlu0 %v1162, 80
        %v1267 = vpop.permute.xlu0 %1266
        %v1272 = vmax.f32 %v1237, %v1261
        %v1273 = vmax.f32 %v1238, %v1263
        %v1274 = vmax.f32 %v1239, %v1265
        %v1275 = vmax.f32 %v1240, %v1267
        %vm1276 = vcmp.eq.s32.totalorder %v878, 11
        %v1277 = vsel %vm996, %v1159, -inf
        %1278 = vmax.xlane.f32.xlu0 %v1277
        %v1279 = vpop.xlane.xlu0 %1278
        %v1280 = vsel %vm996, %v1160, -inf
        %1281 = vmax.xlane.f32.xlu0 %v1280
        %v1282 = vpop.xlane.xlu0 %1281
        %v1283 = vsel %vm996, %v1161, -inf
        %1284 = vmax.xlane.f32.xlu0 %v1283
        %v1285 = vpop.xlane.xlu0 %1284
        %v1286 = vsel %vm996, %v1162, -inf
        %1287 = vmax.xlane.f32.xlu0 %v1286
        %v1288 = vpop.xlane.xlu0 %1287
        %v1289 = vsel %vm1276, 1, 0
        %vm1290 = vcmp.eq.s32.totalorder %v1289, 1
        %v1291 = vsel %vm1290, %v1279, %v1256
        %v1292 = vsel %vm1290, %v1282, %v1257
        %v1293 = vsel %vm1290, %v1285, %v1258
        %v1294 = vsel %vm1290, %v1288, %v1259
        %1295 = vrot.lane.b32.xlu0 %v1159, 64
        %v1296 = vpop.permute.xlu0 %1295
        %1297 = vrot.lane.b32.xlu0 %v1160, 64
        %v1298 = vpop.permute.xlu0 %1297
        %1299 = vrot.lane.b32.xlu0 %v1161, 64
        %v1300 = vpop.permute.xlu0 %1299
        %1301 = vrot.lane.b32.xlu0 %v1162, 64
        %v1302 = vpop.permute.xlu0 %1301
        %v1307 = vmax.f32 %v1272, %v1296
        %v1308 = vmax.f32 %v1273, %v1298
        %v1309 = vmax.f32 %v1274, %v1300
        %v1310 = vmax.f32 %v1275, %v1302
        %vm1311 = vcmp.eq.s32.totalorder %v878, 12
        %v1312 = vsel %vm1032, %v1159, -inf
        %1313 = vmax.xlane.f32.xlu0 %v1312
        %v1314 = vpop.xlane.xlu0 %1313
        %v1315 = vsel %vm1032, %v1160, -inf
        %1316 = vmax.xlane.f32.xlu0 %v1315
        %v1317 = vpop.xlane.xlu0 %1316
        %v1318 = vsel %vm1032, %v1161, -inf
        %1319 = vmax.xlane.f32.xlu0 %v1318
        %v1320 = vpop.xlane.xlu0 %1319
        %v1321 = vsel %vm1032, %v1162, -inf
        %1322 = vmax.xlane.f32.xlu0 %v1321
        %v1323 = vpop.xlane.xlu0 %1322
        %v1324 = vsel %vm1311, 1, 0
        %vm1325 = vcmp.eq.s32.totalorder %v1324, 1
        %v1326 = vsel %vm1325, %v1314, %v1291
        %v1327 = vsel %vm1325, %v1317, %v1292
        %v1328 = vsel %vm1325, %v1320, %v1293
        %v1329 = vsel %vm1325, %v1323, %v1294
        %1330 = vrot.lane.b32.xlu0 %v1159, 48
        %v1331 = vpop.permute.xlu0 %1330
        %1332 = vrot.lane.b32.xlu0 %v1160, 48
        %v1333 = vpop.permute.xlu0 %1332
        %1334 = vrot.lane.b32.xlu0 %v1161, 48
        %v1335 = vpop.permute.xlu0 %1334
        %1336 = vrot.lane.b32.xlu0 %v1162, 48
        %v1337 = vpop.permute.xlu0 %1336
        %v1342 = vmax.f32 %v1307, %v1331
        %v1343 = vmax.f32 %v1308, %v1333
        %v1344 = vmax.f32 %v1309, %v1335
        %v1345 = vmax.f32 %v1310, %v1337
        %vm1346 = vcmp.eq.s32.totalorder %v878, 13
        %v1347 = vsel %vm1068, %v1159, -inf
        %1348 = vmax.xlane.f32.xlu0 %v1347
        %v1349 = vpop.xlane.xlu0 %1348
        %v1350 = vsel %vm1068, %v1160, -inf
        %1351 = vmax.xlane.f32.xlu0 %v1350
        %v1352 = vpop.xlane.xlu0 %1351
        %v1353 = vsel %vm1068, %v1161, -inf
        %1354 = vmax.xlane.f32.xlu0 %v1353
        %v1355 = vpop.xlane.xlu0 %1354
        %v1356 = vsel %vm1068, %v1162, -inf
        %1357 = vmax.xlane.f32.xlu0 %v1356
        %v1358 = vpop.xlane.xlu0 %1357
        %v1359 = vsel %vm1346, 1, 0
        %vm1360 = vcmp.eq.s32.totalorder %v1359, 1
        %v1361 = vsel %vm1360, %v1349, %v1326
        %v1362 = vsel %vm1360, %v1352, %v1327
        %v1363 = vsel %vm1360, %v1355, %v1328
        %v1364 = vsel %vm1360, %v1358, %v1329
        %1365 = vrot.lane.b32.xlu0 %v1159, 32
        %v1366 = vpop.permute.xlu0 %1365
        %1367 = vrot.lane.b32.xlu0 %v1160, 32
        %v1368 = vpop.permute.xlu0 %1367
        %1369 = vrot.lane.b32.xlu0 %v1161, 32
        %v1370 = vpop.permute.xlu0 %1369
        %1371 = vrot.lane.b32.xlu0 %v1162, 32
        %v1372 = vpop.permute.xlu0 %1371
        %v1377 = vmax.f32 %v1342, %v1366
        %v1378 = vmax.f32 %v1343, %v1368
        %v1379 = vmax.f32 %v1344, %v1370
        %v1380 = vmax.f32 %v1345, %v1372
        %vm1381 = vcmp.eq.s32.totalorder %v878, 14
        %v1382 = vsel %vm1104, %v1159, -inf
        %1383 = vmax.xlane.f32.xlu0 %v1382
        %v1384 = vpop.xlane.xlu0 %1383
        %v1385 = vsel %vm1104, %v1160, -inf
        %1386 = vmax.xlane.f32.xlu0 %v1385
        %v1387 = vpop.xlane.xlu0 %1386
        %v1388 = vsel %vm1104, %v1161, -inf
        %1389 = vmax.xlane.f32.xlu0 %v1388
        %v1390 = vpop.xlane.xlu0 %1389
        %v1391 = vsel %vm1104, %v1162, -inf
        %1392 = vmax.xlane.f32.xlu0 %v1391
        %v1393 = vpop.xlane.xlu0 %1392
        %v1394 = vsel %vm1381, 1, 0
        %vm1395 = vcmp.eq.s32.totalorder %v1394, 1
        %v1396 = vsel %vm1395, %v1384, %v1361
        %v1397 = vsel %vm1395, %v1387, %v1362
        %v1398 = vsel %vm1395, %v1390, %v1363
        %v1399 = vsel %vm1395, %v1393, %v1364
        %1400 = vrot.lane.b32.xlu0 %v1159, 16
        %v1401 = vpop.permute.xlu0 %1400
        %1402 = vrot.lane.b32.xlu0 %v1160, 16
        %v1403 = vpop.permute.xlu0 %1402
        %1404 = vrot.lane.b32.xlu0 %v1161, 16
        %v1405 = vpop.permute.xlu0 %1404
        %1406 = vrot.lane.b32.xlu0 %v1162, 16
        %v1407 = vpop.permute.xlu0 %1406
        %v1412 = vmax.f32 %v1377, %v1401
        %v1413 = vmax.f32 %v1378, %v1403
        %v1414 = vmax.f32 %v1379, %v1405
        %v1415 = vmax.f32 %v1380, %v1407
        %vm1416 = vcmp.eq.s32.totalorder %v878, 15
        %v1417 = vsel %vm1140, %v1159, -inf
        %1418 = vmax.xlane.f32.xlu0 %v1417
        %v1419 = vpop.xlane.xlu0 %1418
        %v1420 = vsel %vm1140, %v1160, -inf
        %1421 = vmax.xlane.f32.xlu0 %v1420
        %v1422 = vpop.xlane.xlu0 %1421
        %v1423 = vsel %vm1140, %v1161, -inf
        %1424 = vmax.xlane.f32.xlu0 %v1423
        %v1425 = vpop.xlane.xlu0 %1424
        %v1426 = vsel %vm1140, %v1162, -inf
        %1427 = vmax.xlane.f32.xlu0 %v1426
        %v1428 = vpop.xlane.xlu0 %1427
        %v1429 = vsel %vm1416, 1, 0
        %vm1430 = vcmp.eq.s32.totalorder %v1429, 1
        %v1431 = vsel %vm1430, %v1419, %v1396
        %v1432 = vsel %vm1430, %v1422, %v1397
        %v1433 = vsel %vm1430, %v1425, %v1398
        %v1434 = vsel %vm1430, %v1428, %v1399
        %1439 = vrot.lane.b32.xlu0 %v742, 16
        %v1440 = vpop.permute.xlu0 %1439
        %1441 = vrot.lane.b32.xlu0 %v747, 16
        %v1442 = vpop.permute.xlu0 %1441
        %1443 = vrot.lane.b32.xlu0 %v752, 16
        %v1444 = vpop.permute.xlu0 %1443
        %1445 = vrot.lane.b32.xlu0 %v757, 16
        %v1446 = vpop.permute.xlu0 %1445
        %v1451 = vsel %vm884, %v1412, %v1440
        %v1452 = vsel %vm884, %v1413, %v1442
        %v1453 = vsel %vm884, %v1414, %v1444
        %v1454 = vsel %vm884, %v1415, %v1446
        %1459 = vrot.lane.b32.xlu0 %v859, 16
        %v1460 = vpop.permute.xlu0 %1459
        %1461 = vrot.lane.b32.xlu0 %v864, 16
        %v1462 = vpop.permute.xlu0 %1461
        %1463 = vrot.lane.b32.xlu0 %v869, 16
        %v1464 = vpop.permute.xlu0 %1463
        %1465 = vrot.lane.b32.xlu0 %v874, 16
        %v1466 = vpop.permute.xlu0 %1465
        %v1471 = vsel %vm884, %v1431, %v1460
        %v1472 = vsel %vm884, %v1432, %v1462
        %v1473 = vsel %vm884, %v1433, %v1464
        %v1474 = vsel %vm884, %v1434, %v1466
        %v1475 = vlaneseq
        %v1476 = vshrl.u32 %v1475, 7
        %v1477 = vsub.s32 0, %v1476
        %v1478 = vrot.slane %v613, %v1477
        %v1479 = vlaneseq
        %v1480 = vshrl.u32 %v1479, 7
        %v1481 = vsub.s32 0, %v1480
        %v1482 = vrot.slane %v622, %v1481
        %v1483 = vlaneseq
        %v1484 = vshrl.u32 %v1483, 7
        %v1485 = vsub.s32 0, %v1484
        %v1486 = vrot.slane %v641, %v1485
        %v1487 = vlaneseq
        %v1488 = vshrl.u32 %v1487, 7
        %v1489 = vsub.s32 0, %v1488
        %v1490 = vrot.slane %v642, %v1489
        %v1491 = vld [vmem:[%s6] sm:$0xff]
        %v1492 = vld [vmem:[%s6 + $0x8] sm:$0xff]
        %v1493 = vld [vmem:[%s6 + $0x10] sm:$0xff]
        %v1494 = vld [vmem:[%s6 + $0x18] sm:$0xff]
        %v1495 = vld [vmem:[%s6 + $0x20] sm:$0xff]
        %v1496 = vld [vmem:[%s6 + $0x28] sm:$0xff]
        %v1497 = vld [vmem:[%s6 + $0x30] sm:$0xff]
        %v1498 = vld [vmem:[%s6 + $0x38] sm:$0xff]
        %v1499 = vld [vmem:[%s6 + $0x40] sm:$0xff]
        %v1500 = vld [vmem:[%s6 + $0x48] sm:$0xff]
        %v1501 = vld [vmem:[%s6 + $0x50] sm:$0xff]
        %v1502 = vld [vmem:[%s6 + $0x58] sm:$0xff]
        %v1503 = vld [vmem:[%s6 + $0x60] sm:$0xff]
        %v1504 = vld [vmem:[%s6 + $0x68] sm:$0xff]
        %v1505 = vld [vmem:[%s6 + $0x70] sm:$0xff]
        %v1506 = vld [vmem:[%s6 + $0x78] sm:$0xff]
        %v1507 = vld [vmem:[%s6 + $0x80] sm:$0xff]
        %v1508 = vld [vmem:[%s6 + $0x88] sm:$0xff]
        %v1509 = vld [vmem:[%s6 + $0x90] sm:$0xff]
        %v1510 = vld [vmem:[%s6 + $0x98] sm:$0xff]
        %v1511 = vld [vmem:[%s6 + $0xa0] sm:$0xff]
        %v1512 = vld [vmem:[%s6 + $0xa8] sm:$0xff]
        %v1513 = vld [vmem:[%s6 + $0xb0] sm:$0xff]
        %v1514 = vld [vmem:[%s6 + $0xb8] sm:$0xff]
        %v1515 = vld [vmem:[%s6 + $0xc0] sm:$0xff]
        %v1516 = vld [vmem:[%s6 + $0xc8] sm:$0xff]
        %v1517 = vld [vmem:[%s6 + $0xd0] sm:$0xff]
        %v1518 = vld [vmem:[%s6 + $0xd8] sm:$0xff]
        %v1519 = vld [vmem:[%s6 + $0xe0] sm:$0xff]
        %v1520 = vld [vmem:[%s6 + $0xe8] sm:$0xff]
        %v1521 = vld [vmem:[%s6 + $0xf0] sm:$0xff]
        %v1522 = vld [vmem:[%s6 + $0xf8] sm:$0xff]
        %v1523 = vld [vmem:[%s6 + $0x100] sm:$0xff]
        %v1524 = vld [vmem:[%s6 + $0x108] sm:$0xff]
        %v1525 = vld [vmem:[%s6 + $0x110] sm:$0xff]
        %v1526 = vld [vmem:[%s6 + $0x118] sm:$0xff]
        %v1527 = vld [vmem:[%s6 + $0x120] sm:$0xff]
        %v1528 = vld [vmem:[%s6 + $0x128] sm:$0xff]
        %v1529 = vld [vmem:[%s6 + $0x130] sm:$0xff]
        %v1530 = vld [vmem:[%s6 + $0x138] sm:$0xff]
        %v1531 = vld [vmem:[%s6 + $0x140] sm:$0xff]
        %v1532 = vld [vmem:[%s6 + $0x148] sm:$0xff]
        %v1533 = vld [vmem:[%s6 + $0x150] sm:$0xff]
        %v1534 = vld [vmem:[%s6 + $0x158] sm:$0xff]
        %v1535 = vld [vmem:[%s6 + $0x160] sm:$0xff]
        %v1536 = vld [vmem:[%s6 + $0x168] sm:$0xff]
        %v1537 = vld [vmem:[%s6 + $0x170] sm:$0xff]
        %v1538 = vld [vmem:[%s6 + $0x178] sm:$0xff]
        %v1539 = vld [vmem:[%s6 + $0x180] sm:$0xff]
        %v1540 = vld [vmem:[%s6 + $0x188] sm:$0xff]
        %v1541 = vld [vmem:[%s6 + $0x190] sm:$0xff]
        %v1542 = vld [vmem:[%s6 + $0x198] sm:$0xff]
        %v1543 = vld [vmem:[%s6 + $0x1a0] sm:$0xff]
        %v1544 = vld [vmem:[%s6 + $0x1a8] sm:$0xff]
        %v1545 = vld [vmem:[%s6 + $0x1b0] sm:$0xff]
        %v1546 = vld [vmem:[%s6 + $0x1b8] sm:$0xff]
        %v1547 = vld [vmem:[%s6 + $0x1c0] sm:$0xff]
        %v1548 = vld [vmem:[%s6 + $0x1c8] sm:$0xff]
        %v1549 = vld [vmem:[%s6 + $0x1d0] sm:$0xff]
        %v1550 = vld [vmem:[%s6 + $0x1d8] sm:$0xff]
        %v1551 = vld [vmem:[%s6 + $0x1e0] sm:$0xff]
        %v1552 = vld [vmem:[%s6 + $0x1e8] sm:$0xff]
        %v1553 = vld [vmem:[%s6 + $0x1f0] sm:$0xff]
        %v1554 = vld [vmem:[%s6 + $0x1f8] sm:$0xff]
        %v1555 = vld [vmem:[%s6 + $0x200] sm:$0xff]
        %v1556 = vld [vmem:[%s6 + $0x208] sm:$0xff]
        %v1557 = vld [vmem:[%s6 + $0x210] sm:$0xff]
        %v1558 = vld [vmem:[%s6 + $0x218] sm:$0xff]
        %v1559 = vld [vmem:[%s6 + $0x220] sm:$0xff]
        %v1560 = vld [vmem:[%s6 + $0x228] sm:$0xff]
        %v1561 = vld [vmem:[%s6 + $0x230] sm:$0xff]
        %v1562 = vld [vmem:[%s6 + $0x238] sm:$0xff]
        %v1563 = vld [vmem:[%s6 + $0x240] sm:$0xff]
        %v1564 = vld [vmem:[%s6 + $0x248] sm:$0xff]
        %v1565 = vld [vmem:[%s6 + $0x250] sm:$0xff]
        %v1566 = vld [vmem:[%s6 + $0x258] sm:$0xff]
        %v1567 = vld [vmem:[%s6 + $0x260] sm:$0xff]
        %v1568 = vld [vmem:[%s6 + $0x268] sm:$0xff]
        %v1569 = vld [vmem:[%s6 + $0x270] sm:$0xff]
        %v1570 = vld [vmem:[%s6 + $0x278] sm:$0xff]
        %v1571 = vld [vmem:[%s6 + $0x280] sm:$0xff]
        %v1572 = vld [vmem:[%s6 + $0x288] sm:$0xff]
        %v1573 = vld [vmem:[%s6 + $0x290] sm:$0xff]
        %v1574 = vld [vmem:[%s6 + $0x298] sm:$0xff]
        %v1575 = vld [vmem:[%s6 + $0x2a0] sm:$0xff]
        %v1576 = vld [vmem:[%s6 + $0x2a8] sm:$0xff]
        %v1577 = vld [vmem:[%s6 + $0x2b0] sm:$0xff]
        %v1578 = vld [vmem:[%s6 + $0x2b8] sm:$0xff]
        %v1579 = vld [vmem:[%s6 + $0x2c0] sm:$0xff]
        %v1580 = vld [vmem:[%s6 + $0x2c8] sm:$0xff]
        %v1581 = vld [vmem:[%s6 + $0x2d0] sm:$0xff]
        %v1582 = vld [vmem:[%s6 + $0x2d8] sm:$0xff]
        %v1583 = vld [vmem:[%s6 + $0x2e0] sm:$0xff]
        %v1584 = vld [vmem:[%s6 + $0x2e8] sm:$0xff]
        %v1585 = vld [vmem:[%s6 + $0x2f0] sm:$0xff]
        %v1586 = vld [vmem:[%s6 + $0x2f8] sm:$0xff]
        %v1587 = vld [vmem:[%s6 + $0x300] sm:$0xff]
        %v1588 = vld [vmem:[%s6 + $0x308] sm:$0xff]
        %v1589 = vld [vmem:[%s6 + $0x310] sm:$0xff]
        %v1590 = vld [vmem:[%s6 + $0x318] sm:$0xff]
        %v1591 = vld [vmem:[%s6 + $0x320] sm:$0xff]
        %v1592 = vld [vmem:[%s6 + $0x328] sm:$0xff]
        %v1593 = vld [vmem:[%s6 + $0x330] sm:$0xff]
        %v1594 = vld [vmem:[%s6 + $0x338] sm:$0xff]
        %v1595 = vld [vmem:[%s6 + $0x340] sm:$0xff]
        %v1596 = vld [vmem:[%s6 + $0x348] sm:$0xff]
        %v1597 = vld [vmem:[%s6 + $0x350] sm:$0xff]
        %v1598 = vld [vmem:[%s6 + $0x358] sm:$0xff]
        %v1599 = vld [vmem:[%s6 + $0x360] sm:$0xff]
        %v1600 = vld [vmem:[%s6 + $0x368] sm:$0xff]
        %v1601 = vld [vmem:[%s6 + $0x370] sm:$0xff]
        %v1602 = vld [vmem:[%s6 + $0x378] sm:$0xff]
        %v1603 = vld [vmem:[%s6 + $0x380] sm:$0xff]
        %v1604 = vld [vmem:[%s6 + $0x388] sm:$0xff]
        %v1605 = vld [vmem:[%s6 + $0x390] sm:$0xff]
        %v1606 = vld [vmem:[%s6 + $0x398] sm:$0xff]
        %v1607 = vld [vmem:[%s6 + $0x3a0] sm:$0xff]
        %v1608 = vld [vmem:[%s6 + $0x3a8] sm:$0xff]
        %v1609 = vld [vmem:[%s6 + $0x3b0] sm:$0xff]
        %v1610 = vld [vmem:[%s6 + $0x3b8] sm:$0xff]
        %v1611 = vld [vmem:[%s6 + $0x3c0] sm:$0xff]
        %v1612 = vld [vmem:[%s6 + $0x3c8] sm:$0xff]
        %v1613 = vld [vmem:[%s6 + $0x3d0] sm:$0xff]
        %v1614 = vld [vmem:[%s6 + $0x3d8] sm:$0xff]
        %v1615 = vld [vmem:[%s6 + $0x3e0] sm:$0xff]
        %v1616 = vld [vmem:[%s6 + $0x3e8] sm:$0xff]
        %v1617 = vld [vmem:[%s6 + $0x3f0] sm:$0xff]
        %v1618 = vld [vmem:[%s6 + $0x3f8] sm:$0xff]
        %1619 = vmatprep.subr.mxu0 %v1522
        %1620 = vmatpush1.msra.mxu0 %v1521
        %1621 = vmatprep.subr.mxu0 %v1520
        %1622 = vmatpush1.msra.mxu0 %v1519
        %1623 = vmatprep.subr.mxu0 %v1518
        %1624 = vmatpush1.msra.mxu0 %v1517
        %1625 = vmatprep.subr.mxu0 %v1516
        %1626 = vmatpush1.msra.mxu0 %v1515
        %1627 = vmatprep.subr.mxu0 %v1514
        %1628 = vmatpush1.msra.mxu0 %v1513
        %1629 = vmatprep.subr.mxu0 %v1512
        %1630 = vmatpush1.msra.mxu0 %v1511
        %1631 = vmatprep.subr.mxu0 %v1510
        %1632 = vmatpush1.msra.mxu0 %v1509
        %1633 = vmatprep.subr.mxu0 %v1508
        %1634 = vmatpush1.msra.mxu0 %v1507
        %1635 = vmatprep.subr.mxu0 %v1506
        %1636 = vmatpush1.msra.mxu0 %v1505
        %1637 = vmatprep.subr.mxu0 %v1504
        %1638 = vmatpush1.msra.mxu0 %v1503
        %1639 = vmatprep.subr.mxu0 %v1502
        %1640 = vmatpush1.msra.mxu0 %v1501
        %1641 = vmatprep.subr.mxu0 %v1500
        %1642 = vmatpush1.msra.mxu0 %v1499
        %1643 = vmatprep.subr.mxu0 %v1498
        %1644 = vmatpush1.msra.mxu0 %v1497
        %1645 = vmatprep.subr.mxu0 %v1496
        %1646 = vmatpush1.msra.mxu0 %v1495
        %1647 = vmatprep.subr.mxu0 %v1494
        %1648 = vmatpush1.msra.mxu0 %v1493
        %1649 = vmatprep.subr.mxu0 %v1492
        %1650 = vmatpush1.msra.mxu0 %v1491
        %1651 = vmatprep.subr.mxu0 %v1554
        %1652 = vmatpush2.msra.mxu0 %v1553
        %1653 = vmatprep.subr.mxu0 %v1552
        %1654 = vmatpush2.msra.mxu0 %v1551
        %1655 = vmatprep.subr.mxu0 %v1550
        %1656 = vmatpush2.msra.mxu0 %v1549
        %1657 = vmatprep.subr.mxu0 %v1548
        %1658 = vmatpush2.msra.mxu0 %v1547
        %1659 = vmatprep.subr.mxu0 %v1546
        %1660 = vmatpush2.msra.mxu0 %v1545
        %1661 = vmatprep.subr.mxu0 %v1544
        %1662 = vmatpush2.msra.mxu0 %v1543
        %1663 = vmatprep.subr.mxu0 %v1542
        %1664 = vmatpush2.msra.mxu0 %v1541
        %1665 = vmatprep.subr.mxu0 %v1540
        %1666 = vmatpush2.msra.mxu0 %v1539
        %1667 = vmatprep.subr.mxu0 %v1538
        %1668 = vmatpush2.msra.mxu0 %v1537
        %1669 = vmatprep.subr.mxu0 %v1536
        %1670 = vmatpush2.msra.mxu0 %v1535
        %1671 = vmatprep.subr.mxu0 %v1534
        %1672 = vmatpush2.msra.mxu0 %v1533
        %1673 = vmatprep.subr.mxu0 %v1532
        %1674 = vmatpush2.msra.mxu0 %v1531
        %1675 = vmatprep.subr.mxu0 %v1530
        %1676 = vmatpush2.msra.mxu0 %v1529
        %1677 = vmatprep.subr.mxu0 %v1528
        %1678 = vmatpush2.msra.mxu0 %v1527
        %1679 = vmatprep.subr.mxu0 %v1526
        %1680 = vmatpush2.msra.mxu0 %v1525
        %1681 = vmatprep.subr.mxu0 %v1524
        %1682 = vmatpush2.msra.mxu0 %v1523
        %1683 = vmatprep.mubr.f32.mxu0 %v1482
        %1684 = vmatmul.mubr.f32.gmra.mxu0 %v1478
        %v1685 = vpop.f32.mrf.mxu0
        %v1686 = vadd.f32 0.0, %v1685
        %v1687 = vpop.f32.mrf.mxu0
        %v1688 = vadd.f32 0.0, %v1687
        %1689 = vdwg.mxu0
        %1690 = vmatprep.subr.mxu0 %v1586
        %1691 = vmatpush1.msra.mxu0 %v1585
        %1692 = vmatprep.subr.mxu0 %v1584
        %1693 = vmatpush1.msra.mxu0 %v1583
        %1694 = vmatprep.subr.mxu0 %v1582
        %1695 = vmatpush1.msra.mxu0 %v1581
        %1696 = vmatprep.subr.mxu0 %v1580
        %1697 = vmatpush1.msra.mxu0 %v1579
        %1698 = vmatprep.subr.mxu0 %v1578
        %1699 = vmatpush1.msra.mxu0 %v1577
        %1700 = vmatprep.subr.mxu0 %v1576
        %1701 = vmatpush1.msra.mxu0 %v1575
        %1702 = vmatprep.subr.mxu0 %v1574
        %1703 = vmatpush1.msra.mxu0 %v1573
        %1704 = vmatprep.subr.mxu0 %v1572
        %1705 = vmatpush1.msra.mxu0 %v1571
        %1706 = vmatprep.subr.mxu0 %v1570
        %1707 = vmatpush1.msra.mxu0 %v1569
        %1708 = vmatprep.subr.mxu0 %v1568
        %1709 = vmatpush1.msra.mxu0 %v1567
        %1710 = vmatprep.subr.mxu0 %v1566
        %1711 = vmatpush1.msra.mxu0 %v1565
        %1712 = vmatprep.subr.mxu0 %v1564
        %1713 = vmatpush1.msra.mxu0 %v1563
        %1714 = vmatprep.subr.mxu0 %v1562
        %1715 = vmatpush1.msra.mxu0 %v1561
        %1716 = vmatprep.subr.mxu0 %v1560
        %1717 = vmatpush1.msra.mxu0 %v1559
        %1718 = vmatprep.subr.mxu0 %v1558
        %1719 = vmatpush1.msra.mxu0 %v1557
        %1720 = vmatprep.subr.mxu0 %v1556
        %1721 = vmatpush1.msra.mxu0 %v1555
        %1722 = vmatprep.subr.mxu0 %v1618
        %1723 = vmatpush2.msra.mxu0 %v1617
        %1724 = vmatprep.subr.mxu0 %v1616
        %1725 = vmatpush2.msra.mxu0 %v1615
        %1726 = vmatprep.subr.mxu0 %v1614
        %1727 = vmatpush2.msra.mxu0 %v1613
        %1728 = vmatprep.subr.mxu0 %v1612
        %1729 = vmatpush2.msra.mxu0 %v1611
        %1730 = vmatprep.subr.mxu0 %v1610
        %1731 = vmatpush2.msra.mxu0 %v1609
        %1732 = vmatprep.subr.mxu0 %v1608
        %1733 = vmatpush2.msra.mxu0 %v1607
        %1734 = vmatprep.subr.mxu0 %v1606
        %1735 = vmatpush2.msra.mxu0 %v1605
        %1736 = vmatprep.subr.mxu0 %v1604
        %1737 = vmatpush2.msra.mxu0 %v1603
        %1738 = vmatprep.subr.mxu0 %v1602
        %1739 = vmatpush2.msra.mxu0 %v1601
        %1740 = vmatprep.subr.mxu0 %v1600
        %1741 = vmatpush2.msra.mxu0 %v1599
        %1742 = vmatprep.subr.mxu0 %v1598
        %1743 = vmatpush2.msra.mxu0 %v1597
        %1744 = vmatprep.subr.mxu0 %v1596
        %1745 = vmatpush2.msra.mxu0 %v1595
        %1746 = vmatprep.subr.mxu0 %v1594
        %1747 = vmatpush2.msra.mxu0 %v1593
        %1748 = vmatprep.subr.mxu0 %v1592
        %1749 = vmatpush2.msra.mxu0 %v1591
        %1750 = vmatprep.subr.mxu0 %v1590
        %1751 = vmatpush2.msra.mxu0 %v1589
        %1752 = vmatprep.subr.mxu0 %v1588
        %1753 = vmatpush2.msra.mxu0 %v1587
        %1754 = vmatprep.mubr.f32.mxu0 %v1490
        %1755 = vmatmul.mubr.f32.gmra.mxu0 %v1486
        %v1756 = vpop.f32.mrf.mxu0
        %v1757 = vadd.f32 %v1686, %v1756
        %v1758 = vpop.f32.mrf.mxu0
        %v1759 = vadd.f32 %v1688, %v1758
        %1760 = vdwg.mxu0
        %s1761 = sld [smem:[#allocation3]]
        %v1762 = vstv %s1761
        %v1763 = vadd.f32 %v1757, %v1762
        %v1764 = vadd.f32 %v1759, %v1762
        %v1765 = vxor.u32 %v1763, 2147483648
        %v1766 = vxor.u32 %v1764, 2147483648
        %v1767 = vmul.f32 %v1765, 1.442695
        %v1768 = vpow.pop %v1767
        %v1769 = vmul.f32 %v1766, 1.442695
        %v1770 = vpow.pop %v1769
        %v1771 = vadd.f32 %v1768, 1.0
        %v1772 = vadd.f32 %v1770, 1.0
        %v1773 = vrcp.pop %v1771
        %v1774 = vmul.f32 1.0, %v1773
        %v1775 = vrcp.pop %v1772
        %v1776 = vmul.f32 1.0, %v1775
        %s1777 = sld [smem:[#allocation3 + $0x1]]
        %vm1782 = vcmask 1042432
        %v1783 = vrot.slane %v1451, 5
        %v1784 = vrot.slane %v1452, 5
        %v1785 = vsel %vm1782, %v1783, %v1784
        %v1786 = vrot.slane %v1453, 5
        %v1787 = vsel %vm1782, %v1784, %v1786
        %v1788 = vrot.slane %v1454, 5
        %v1789 = vsel %vm1782, %v1786, %v1788
        %v1795 = vsel %vm1782, 0.0, %v1783
        %v1796 = vsel %vm1782, %v1788, 0.0
        %vm1799 = vcmask 1046528
        %v1800 = vrot.slane %v1795, 1
        %v1801 = vrot.slane %v1785, 1
        %v1802 = vsel %vm1799, %v1800, %v1801
        %v1803 = vrot.slane %v1787, 1
        %v1804 = vsel %vm1799, %v1801, %v1803
        %v1805 = vrot.slane %v1789, 1
        %v1806 = vsel %vm1799, %v1803, %v1805
        %v1807 = vrot.slane %v1796, 1
        %v1808 = vsel %vm1799, %v1805, %v1807
        %1809 = vrot.lane.b32.xlu0 %v1802, 32
        %v1810 = vpop.permute.xlu0 %1809
        %1811 = vrot.lane.b32.xlu0 %v1804, 32
        %v1812 = vpop.permute.xlu0 %1811
        %1813 = vrot.lane.b32.xlu0 %v1806, 32
        %v1814 = vpop.permute.xlu0 %1813
        %1815 = vrot.lane.b32.xlu0 %v1808, 32
        %v1816 = vpop.permute.xlu0 %1815
        %vm1821 = vcmask 1045504
        %v1822 = vrot.slane %v1795, 2
        %v1823 = vrot.slane %v1785, 2
        %v1824 = vsel %vm1821, %v1822, %v1823
        %v1825 = vrot.slane %v1787, 2
        %v1826 = vsel %vm1821, %v1823, %v1825
        %v1827 = vrot.slane %v1789, 2
        %v1828 = vsel %vm1821, %v1825, %v1827
        %v1829 = vrot.slane %v1796, 2
        %v1830 = vsel %vm1821, %v1827, %v1829
        %1831 = vrot.lane.b32.xlu0 %v1824, 64
        %v1832 = vpop.permute.xlu0 %1831
        %1833 = vrot.lane.b32.xlu0 %v1826, 64
        %v1834 = vpop.permute.xlu0 %1833
        %1835 = vrot.lane.b32.xlu0 %v1828, 64
        %v1836 = vpop.permute.xlu0 %1835
        %1837 = vrot.lane.b32.xlu0 %v1830, 64
        %v1838 = vpop.permute.xlu0 %1837
        %vm1843 = vcmask 1044480
        %v1844 = vrot.slane %v1795, 3
        %v1845 = vrot.slane %v1785, 3
        %v1846 = vsel %vm1843, %v1844, %v1845
        %v1847 = vrot.slane %v1787, 3
        %v1848 = vsel %vm1843, %v1845, %v1847
        %v1849 = vrot.slane %v1789, 3
        %v1850 = vsel %vm1843, %v1847, %v1849
        %v1851 = vrot.slane %v1796, 3
        %v1852 = vsel %vm1843, %v1849, %v1851
        %1853 = vrot.lane.b32.xlu0 %v1846, 96
        %v1854 = vpop.permute.xlu0 %1853
        %1855 = vrot.lane.b32.xlu0 %v1848, 96
        %v1856 = vpop.permute.xlu0 %1855
        %1857 = vrot.lane.b32.xlu0 %v1850, 96
        %v1858 = vpop.permute.xlu0 %1857
        %1859 = vrot.lane.b32.xlu0 %v1852, 96
        %v1860 = vpop.permute.xlu0 %1859
        %vm1865 = vcmask 1043456
        %v1866 = vrot.slane %v1795, 4
        %v1867 = vrot.slane %v1785, 4
        %v1868 = vsel %vm1865, %v1866, %v1867
        %v1869 = vrot.slane %v1787, 4
        %v1870 = vsel %vm1865, %v1867, %v1869
        %v1871 = vrot.slane %v1789, 4
        %v1872 = vsel %vm1865, %v1869, %v1871
        %v1873 = vrot.slane %v1796, 4
        %v1874 = vsel %vm1865, %v1871, %v1873
        %v1879 = vrot.slane %v1795, 5
        %v1880 = vrot.slane %v1785, 5
        %v1881 = vsel %vm1782, %v1879, %v1880
        %v1882 = vrot.slane %v1787, 5
        %v1883 = vsel %vm1782, %v1880, %v1882
        %v1884 = vrot.slane %v1789, 5
        %v1885 = vsel %vm1782, %v1882, %v1884
        %v1886 = vrot.slane %v1796, 5
        %v1887 = vsel %vm1782, %v1884, %v1886
        %1888 = vrot.lane.b32.xlu0 %v1881, 32
        %v1889 = vpop.permute.xlu0 %1888
        %1890 = vrot.lane.b32.xlu0 %v1883, 32
        %v1891 = vpop.permute.xlu0 %1890
        %1892 = vrot.lane.b32.xlu0 %v1885, 32
        %v1893 = vpop.permute.xlu0 %1892
        %1894 = vrot.lane.b32.xlu0 %v1887, 32
        %v1895 = vpop.permute.xlu0 %1894
        %vm1900 = vcmask 1041408
        %v1901 = vrot.slane %v1795, 6
        %v1902 = vrot.slane %v1785, 6
        %v1903 = vsel %vm1900, %v1901, %v1902
        %v1904 = vrot.slane %v1787, 6
        %v1905 = vsel %vm1900, %v1902, %v1904
        %v1906 = vrot.slane %v1789, 6
        %v1907 = vsel %vm1900, %v1904, %v1906
        %v1908 = vrot.slane %v1796, 6
        %v1909 = vsel %vm1900, %v1906, %v1908
        %1910 = vrot.lane.b32.xlu0 %v1903, 64
        %v1911 = vpop.permute.xlu0 %1910
        %1912 = vrot.lane.b32.xlu0 %v1905, 64
        %v1913 = vpop.permute.xlu0 %1912
        %1914 = vrot.lane.b32.xlu0 %v1907, 64
        %v1915 = vpop.permute.xlu0 %1914
        %1916 = vrot.lane.b32.xlu0 %v1909, 64
        %v1917 = vpop.permute.xlu0 %1916
        %vm1922 = vcmask 261120
        %v1923 = vsel %vm1922, %v1795, %v1810
        %v1924 = vsel %vm1922, %v1785, %v1812
        %v1925 = vsel %vm1922, %v1787, %v1814
        %v1926 = vsel %vm1922, %v1789, %v1816
        %vm1927 = vcmask 523264
        %v1928 = vsel %vm1927, %v1923, %v1832
        %v1929 = vsel %vm1927, %v1924, %v1834
        %v1930 = vsel %vm1927, %v1925, %v1836
        %v1931 = vsel %vm1927, %v1926, %v1838
        %vm1932 = vcmask 785408
        %v1933 = vsel %vm1932, %v1928, %v1854
        %v1934 = vsel %vm1932, %v1929, %v1856
        %v1935 = vsel %vm1932, %v1930, %v1858
        %v1936 = vsel %vm1932, %v1931, %v1860
        %v1937 = vsel %vm1922, %v1868, %v1889
        %v1938 = vsel %vm1922, %v1870, %v1891
        %v1939 = vsel %vm1922, %v1872, %v1893
        %v1940 = vsel %vm1922, %v1874, %v1895
        %v1941 = vsel %vm1927, %v1937, %v1911
        %v1942 = vsel %vm1927, %v1938, %v1913
        %v1943 = vsel %vm1927, %v1939, %v1915
        %v1944 = vsel %vm1927, %v1940, %v1917
        %v1945 = vld [vmem:[%s7] sm:$0xff]
        %v1946 = vld [vmem:[%s7 + $0x8] sm:$0xff]
        %v1947 = vld [vmem:[%s7 + $0x10] sm:$0xff]
        %v1948 = vld [vmem:[%s7 + $0x18] sm:$0xff]
        %v1949 = vld [vmem:[%s7 + $0x20] sm:$0xff]
        %v1950 = vld [vmem:[%s7 + $0x28] sm:$0xff]
        %v1951 = vld [vmem:[%s7 + $0x30] sm:$0xff]
        %v1952 = vld [vmem:[%s7 + $0x38] sm:$0xff]
        %v1953 = vld [vmem:[%s7 + $0x40] sm:$0xff]
        %v1954 = vld [vmem:[%s7 + $0x48] sm:$0xff]
        %v1955 = vld [vmem:[%s7 + $0x50] sm:$0xff]
        %v1956 = vld [vmem:[%s7 + $0x58] sm:$0xff]
        %v1957 = vld [vmem:[%s7 + $0x60] sm:$0xff]
        %v1958 = vld [vmem:[%s7 + $0x68] sm:$0xff]
        %v1959 = vld [vmem:[%s7 + $0x70] sm:$0xff]
        %v1960 = vld [vmem:[%s7 + $0x78] sm:$0xff]
        %v1961 = vld [vmem:[%s7 + $0x80] sm:$0xff]
        %v1962 = vld [vmem:[%s7 + $0x88] sm:$0xff]
        %v1963 = vld [vmem:[%s7 + $0x90] sm:$0xff]
        %v1964 = vld [vmem:[%s7 + $0x98] sm:$0xff]
        %v1965 = vld [vmem:[%s7 + $0xa0] sm:$0xff]
        %v1966 = vld [vmem:[%s7 + $0xa8] sm:$0xff]
        %v1967 = vld [vmem:[%s7 + $0xb0] sm:$0xff]
        %v1968 = vld [vmem:[%s7 + $0xb8] sm:$0xff]
        %v1969 = vld [vmem:[%s7 + $0xc0] sm:$0xff]
        %v1970 = vld [vmem:[%s7 + $0xc8] sm:$0xff]
        %v1971 = vld [vmem:[%s7 + $0xd0] sm:$0xff]
        %v1972 = vld [vmem:[%s7 + $0xd8] sm:$0xff]
        %v1973 = vstv %s1777
        %v1975 = vsel %vm1932, %v1941, 0
        %v1978 = vsel %vm1932, %v1942, 0
        %v1981 = vsel %vm1932, %v1943, 0
        %v1984 = vsel %vm1932, %v1944, 0
        %1986 = vmatprep.subr.mxu0 0.0
        %1987 = vmatpush1.msra.mxu0 %v1960
        %1988 = vmatprep.subr.mxu0 0.0
        %1989 = vmatpush1.msra.mxu0 %v1959
        %1990 = vmatprep.subr.mxu0 0.0
        %1991 = vmatpush1.msra.mxu0 %v1958
        %1992 = vmatprep.subr.mxu0 0.0
        %1993 = vmatpush1.msra.mxu0 %v1957
        %1994 = vmatprep.subr.mxu0 0.0
        %1995 = vmatpush1.msra.mxu0 %v1956
        %1996 = vmatprep.subr.mxu0 0.0
        %1997 = vmatpush1.msra.mxu0 %v1955
        %1998 = vmatprep.subr.mxu0 0.0
        %1999 = vmatpush1.msra.mxu0 %v1954
        %2000 = vmatprep.subr.mxu0 0.0
        %2001 = vmatpush1.msra.mxu0 %v1953
        %2002 = vmatprep.subr.mxu0 0.0
        %2003 = vmatpush1.msra.mxu0 %v1952
        %2004 = vmatprep.subr.mxu0 0.0
        %2005 = vmatpush1.msra.mxu0 %v1951
        %2006 = vmatprep.subr.mxu0 0.0
        %2007 = vmatpush1.msra.mxu0 %v1950
        %2008 = vmatprep.subr.mxu0 0.0
        %2009 = vmatpush1.msra.mxu0 %v1949
        %2010 = vmatprep.subr.mxu0 0.0
        %2011 = vmatpush1.msra.mxu0 %v1948
        %2012 = vmatprep.subr.mxu0 0.0
        %2013 = vmatpush1.msra.mxu0 %v1947
        %2014 = vmatprep.subr.mxu0 0.0
        %2015 = vmatpush1.msra.mxu0 %v1946
        %2016 = vmatprep.subr.mxu0 0.0
        %2017 = vmatpush1.msra.mxu0 %v1945
        %2018 = vmatprep.subr.mxu0 0.0
        %2019 = vmatpush2.msra.mxu0 0.0
        %2020 = vmatprep.subr.mxu0 0.0
        %2021 = vmatpush2.msra.mxu0 0.0
        %2022 = vmatprep.subr.mxu0 0.0
        %2023 = vmatpush2.msra.mxu0 0.0
        %2024 = vmatprep.subr.mxu0 0.0
        %2025 = vmatpush2.msra.mxu0 0.0
        %2026 = vmatprep.subr.mxu0 0.0
        %2027 = vmatpush2.msra.mxu0 %v1972
        %2028 = vmatprep.subr.mxu0 0.0
        %2029 = vmatpush2.msra.mxu0 %v1971
        %2030 = vmatprep.subr.mxu0 0.0
        %2031 = vmatpush2.msra.mxu0 %v1970
        %2032 = vmatprep.subr.mxu0 0.0
        %2033 = vmatpush2.msra.mxu0 %v1969
        %2034 = vmatprep.subr.mxu0 0.0
        %2035 = vmatpush2.msra.mxu0 %v1968
        %2036 = vmatprep.subr.mxu0 0.0
        %2037 = vmatpush2.msra.mxu0 %v1967
        %2038 = vmatprep.subr.mxu0 0.0
        %2039 = vmatpush2.msra.mxu0 %v1966
        %2040 = vmatprep.subr.mxu0 0.0
        %2041 = vmatpush2.msra.mxu0 %v1965
        %2042 = vmatprep.subr.mxu0 0.0
        %2043 = vmatpush2.msra.mxu0 %v1964
        %2044 = vmatprep.subr.mxu0 0.0
        %2045 = vmatpush2.msra.mxu0 %v1963
        %2046 = vmatprep.subr.mxu0 0.0
        %2047 = vmatpush2.msra.mxu0 %v1962
        %2048 = vmatprep.subr.mxu0 0.0
        %2049 = vmatpush2.msra.mxu0 %v1961
        %2050 = vmatprep.mubr.f32.mxu0 %v1975
        %2051 = vmatmul.mubr.f32.gmra.mxu0 %v1933
        %v2052 = vpop.f32.mrf.mxu0
        %v2053 = vadd.f32 %v1973, %v2052
        %v2054 = vpop.f32.mrf.mxu0
        %2055 = vmatprep.mubr.f32.mxu0 %v1978
        %2056 = vmatmul.mubr.f32.gmra.mxu0 %v1934
        %v2057 = vpop.f32.mrf.mxu0
        %v2058 = vadd.f32 %v1973, %v2057
        %v2059 = vpop.f32.mrf.mxu0
        %2060 = vmatprep.mubr.f32.mxu0 %v1981
        %2061 = vmatmul.mubr.f32.gmra.mxu0 %v1935
        %v2062 = vpop.f32.mrf.mxu0
        %v2063 = vadd.f32 %v1973, %v2062
        %v2064 = vpop.f32.mrf.mxu0
        %2065 = vmatprep.mubr.f32.mxu0 %v1984
        %2066 = vmatmul.mubr.f32.gmra.mxu0 %v1936
        %v2067 = vpop.f32.mrf.mxu0
        %v2068 = vadd.f32 %v1973, %v2067
        %v2069 = vpop.f32.mrf.mxu0
        %2070 = vdwg.mxu0
        %v2071 = vxor.u32 %v2053, 2147483648
        %v2072 = vxor.u32 %v2058, 2147483648
        %v2073 = vxor.u32 %v2063, 2147483648
        %v2074 = vxor.u32 %v2068, 2147483648
        %v2075 = vmul.f32 %v2071, 1.442695
        %v2076 = vpow.pop %v2075
        %v2077 = vmul.f32 %v2072, 1.442695
        %v2078 = vpow.pop %v2077
        %v2079 = vmul.f32 %v2073, 1.442695
        %v2080 = vpow.pop %v2079
        %v2081 = vmul.f32 %v2074, 1.442695
        %v2082 = vpow.pop %v2081
        %v2083 = vadd.f32 %v2076, 1.0
        %v2084 = vadd.f32 %v2078, 1.0
        %v2085 = vadd.f32 %v2080, 1.0
        %v2086 = vadd.f32 %v2082, 1.0
        %v2087 = vrcp.pop %v2083
        %v2088 = vmul.f32 1.0, %v2087
        %v2089 = vrcp.pop %v2084
        %v2090 = vmul.f32 1.0, %v2089
        %v2091 = vrcp.pop %v2085
        %v2092 = vmul.f32 1.0, %v2091
        %v2093 = vrcp.pop %v2086
        %v2094 = vmul.f32 1.0, %v2093
        %s2095 = sld [smem:[#allocation3 + $0x2]]
        %v2100 = vrot.slane %v1471, 5
        %v2101 = vrot.slane %v1472, 5
        %v2102 = vsel %vm1782, %v2100, %v2101
        %v2103 = vrot.slane %v1473, 5
        %v2104 = vsel %vm1782, %v2101, %v2103
        %v2105 = vrot.slane %v1474, 5
        %v2106 = vsel %vm1782, %v2103, %v2105
        %v2112 = vsel %vm1782, 0.0, %v2100
        %v2113 = vsel %vm1782, %v2105, 0.0
        %v2116 = vrot.slane %v2112, 1
        %v2117 = vrot.slane %v2102, 1
        %v2118 = vsel %vm1799, %v2116, %v2117
        %v2119 = vrot.slane %v2104, 1
        %v2120 = vsel %vm1799, %v2117, %v2119
        %v2121 = vrot.slane %v2106, 1
        %v2122 = vsel %vm1799, %v2119, %v2121
        %v2123 = vrot.slane %v2113, 1
        %v2124 = vsel %vm1799, %v2121, %v2123
        %2125 = vrot.lane.b32.xlu0 %v2118, 32
        %v2126 = vpop.permute.xlu0 %2125
        %2127 = vrot.lane.b32.xlu0 %v2120, 32
        %v2128 = vpop.permute.xlu0 %2127
        %2129 = vrot.lane.b32.xlu0 %v2122, 32
        %v2130 = vpop.permute.xlu0 %2129
        %2131 = vrot.lane.b32.xlu0 %v2124, 32
        %v2132 = vpop.permute.xlu0 %2131
        %v2137 = vrot.slane %v2112, 2
        %v2138 = vrot.slane %v2102, 2
        %v2139 = vsel %vm1821, %v2137, %v2138
        %v2140 = vrot.slane %v2104, 2
        %v2141 = vsel %vm1821, %v2138, %v2140
        %v2142 = vrot.slane %v2106, 2
        %v2143 = vsel %vm1821, %v2140, %v2142
        %v2144 = vrot.slane %v2113, 2
        %v2145 = vsel %vm1821, %v2142, %v2144
        %2146 = vrot.lane.b32.xlu0 %v2139, 64
        %v2147 = vpop.permute.xlu0 %2146
        %2148 = vrot.lane.b32.xlu0 %v2141, 64
        %v2149 = vpop.permute.xlu0 %2148
        %2150 = vrot.lane.b32.xlu0 %v2143, 64
        %v2151 = vpop.permute.xlu0 %2150
        %2152 = vrot.lane.b32.xlu0 %v2145, 64
        %v2153 = vpop.permute.xlu0 %2152
        %v2158 = vrot.slane %v2112, 3
        %v2159 = vrot.slane %v2102, 3
        %v2160 = vsel %vm1843, %v2158, %v2159
        %v2161 = vrot.slane %v2104, 3
        %v2162 = vsel %vm1843, %v2159, %v2161
        %v2163 = vrot.slane %v2106, 3
        %v2164 = vsel %vm1843, %v2161, %v2163
        %v2165 = vrot.slane %v2113, 3
        %v2166 = vsel %vm1843, %v2163, %v2165
        %2167 = vrot.lane.b32.xlu0 %v2160, 96
        %v2168 = vpop.permute.xlu0 %2167
        %2169 = vrot.lane.b32.xlu0 %v2162, 96
        %v2170 = vpop.permute.xlu0 %2169
        %2171 = vrot.lane.b32.xlu0 %v2164, 96
        %v2172 = vpop.permute.xlu0 %2171
        %2173 = vrot.lane.b32.xlu0 %v2166, 96
        %v2174 = vpop.permute.xlu0 %2173
        %v2179 = vrot.slane %v2112, 4
        %v2180 = vrot.slane %v2102, 4
        %v2181 = vsel %vm1865, %v2179, %v2180
        %v2182 = vrot.slane %v2104, 4
        %v2183 = vsel %vm1865, %v2180, %v2182
        %v2184 = vrot.slane %v2106, 4
        %v2185 = vsel %vm1865, %v2182, %v2184
        %v2186 = vrot.slane %v2113, 4
        %v2187 = vsel %vm1865, %v2184, %v2186
        %v2192 = vrot.slane %v2112, 5
        %v2193 = vrot.slane %v2102, 5
        %v2194 = vsel %vm1782, %v2192, %v2193
        %v2195 = vrot.slane %v2104, 5
        %v2196 = vsel %vm1782, %v2193, %v2195
        %v2197 = vrot.slane %v2106, 5
        %v2198 = vsel %vm1782, %v2195, %v2197
        %v2199 = vrot.slane %v2113, 5
        %v2200 = vsel %vm1782, %v2197, %v2199
        %2201 = vrot.lane.b32.xlu0 %v2194, 32
        %v2202 = vpop.permute.xlu0 %2201
        %2203 = vrot.lane.b32.xlu0 %v2196, 32
        %v2204 = vpop.permute.xlu0 %2203
        %2205 = vrot.lane.b32.xlu0 %v2198, 32
        %v2206 = vpop.permute.xlu0 %2205
        %2207 = vrot.lane.b32.xlu0 %v2200, 32
        %v2208 = vpop.permute.xlu0 %2207
        %v2213 = vrot.slane %v2112, 6
        %v2214 = vrot.slane %v2102, 6
        %v2215 = vsel %vm1900, %v2213, %v2214
        %v2216 = vrot.slane %v2104, 6
        %v2217 = vsel %vm1900, %v2214, %v2216
        %v2218 = vrot.slane %v2106, 6
        %v2219 = vsel %vm1900, %v2216, %v2218
        %v2220 = vrot.slane %v2113, 6
        %v2221 = vsel %vm1900, %v2218, %v2220
        %2222 = vrot.lane.b32.xlu0 %v2215, 64
        %v2223 = vpop.permute.xlu0 %2222
        %2224 = vrot.lane.b32.xlu0 %v2217, 64
        %v2225 = vpop.permute.xlu0 %2224
        %2226 = vrot.lane.b32.xlu0 %v2219, 64
        %v2227 = vpop.permute.xlu0 %2226
        %2228 = vrot.lane.b32.xlu0 %v2221, 64
        %v2229 = vpop.permute.xlu0 %2228
        %v2234 = vsel %vm1922, %v2112, %v2126
        %v2235 = vsel %vm1922, %v2102, %v2128
        %v2236 = vsel %vm1922, %v2104, %v2130
        %v2237 = vsel %vm1922, %v2106, %v2132
        %v2238 = vsel %vm1927, %v2234, %v2147
        %v2239 = vsel %vm1927, %v2235, %v2149
        %v2240 = vsel %vm1927, %v2236, %v2151
        %v2241 = vsel %vm1927, %v2237, %v2153
        %v2242 = vsel %vm1932, %v2238, %v2168
        %v2243 = vsel %vm1932, %v2239, %v2170
        %v2244 = vsel %vm1932, %v2240, %v2172
        %v2245 = vsel %vm1932, %v2241, %v2174
        %v2246 = vsel %vm1922, %v2181, %v2202
        %v2247 = vsel %vm1922, %v2183, %v2204
        %v2248 = vsel %vm1922, %v2185, %v2206
        %v2249 = vsel %vm1922, %v2187, %v2208
        %v2250 = vsel %vm1927, %v2246, %v2223
        %v2251 = vsel %vm1927, %v2247, %v2225
        %v2252 = vsel %vm1927, %v2248, %v2227
        %v2253 = vsel %vm1927, %v2249, %v2229
        %v2254 = vld [vmem:[%s8] sm:$0xff]
        %v2255 = vld [vmem:[%s8 + $0x8] sm:$0xff]
        %v2256 = vld [vmem:[%s8 + $0x10] sm:$0xff]
        %v2257 = vld [vmem:[%s8 + $0x18] sm:$0xff]
        %v2258 = vld [vmem:[%s8 + $0x20] sm:$0xff]
        %v2259 = vld [vmem:[%s8 + $0x28] sm:$0xff]
        %v2260 = vld [vmem:[%s8 + $0x30] sm:$0xff]
        %v2261 = vld [vmem:[%s8 + $0x38] sm:$0xff]
        %v2262 = vld [vmem:[%s8 + $0x40] sm:$0xff]
        %v2263 = vld [vmem:[%s8 + $0x48] sm:$0xff]
        %v2264 = vld [vmem:[%s8 + $0x50] sm:$0xff]
        %v2265 = vld [vmem:[%s8 + $0x58] sm:$0xff]
        %v2266 = vld [vmem:[%s8 + $0x60] sm:$0xff]
        %v2267 = vld [vmem:[%s8 + $0x68] sm:$0xff]
        %v2268 = vld [vmem:[%s8 + $0x70] sm:$0xff]
        %v2269 = vld [vmem:[%s8 + $0x78] sm:$0xff]
        %v2270 = vld [vmem:[%s8 + $0x80] sm:$0xff]
        %v2271 = vld [vmem:[%s8 + $0x88] sm:$0xff]
        %v2272 = vld [vmem:[%s8 + $0x90] sm:$0xff]
        %v2273 = vld [vmem:[%s8 + $0x98] sm:$0xff]
        %v2274 = vld [vmem:[%s8 + $0xa0] sm:$0xff]
        %v2275 = vld [vmem:[%s8 + $0xa8] sm:$0xff]
        %v2276 = vld [vmem:[%s8 + $0xb0] sm:$0xff]
        %v2277 = vld [vmem:[%s8 + $0xb8] sm:$0xff]
        %v2278 = vld [vmem:[%s8 + $0xc0] sm:$0xff]
        %v2279 = vld [vmem:[%s8 + $0xc8] sm:$0xff]
        %v2280 = vld [vmem:[%s8 + $0xd0] sm:$0xff]
        %v2281 = vld [vmem:[%s8 + $0xd8] sm:$0xff]
        %v2282 = vstv %s2095
        %v2284 = vsel %vm1932, %v2250, 0
        %v2287 = vsel %vm1932, %v2251, 0
        %v2290 = vsel %vm1932, %v2252, 0
        %v2293 = vsel %vm1932, %v2253, 0
        %2295 = vmatprep.subr.mxu0 0.0
        %2296 = vmatpush1.msra.mxu0 %v2269
        %2297 = vmatprep.subr.mxu0 0.0
        %2298 = vmatpush1.msra.mxu0 %v2268
        %2299 = vmatprep.subr.mxu0 0.0
        %2300 = vmatpush1.msra.mxu0 %v2267
        %2301 = vmatprep.subr.mxu0 0.0
        %2302 = vmatpush1.msra.mxu0 %v2266
        %2303 = vmatprep.subr.mxu0 0.0
        %2304 = vmatpush1.msra.mxu0 %v2265
        %2305 = vmatprep.subr.mxu0 0.0
        %2306 = vmatpush1.msra.mxu0 %v2264
        %2307 = vmatprep.subr.mxu0 0.0
        %2308 = vmatpush1.msra.mxu0 %v2263
        %2309 = vmatprep.subr.mxu0 0.0
        %2310 = vmatpush1.msra.mxu0 %v2262
        %2311 = vmatprep.subr.mxu0 0.0
        %2312 = vmatpush1.msra.mxu0 %v2261
        %2313 = vmatprep.subr.mxu0 0.0
        %2314 = vmatpush1.msra.mxu0 %v2260
        %2315 = vmatprep.subr.mxu0 0.0
        %2316 = vmatpush1.msra.mxu0 %v2259
        %2317 = vmatprep.subr.mxu0 0.0
        %2318 = vmatpush1.msra.mxu0 %v2258
        %2319 = vmatprep.subr.mxu0 0.0
        %2320 = vmatpush1.msra.mxu0 %v2257
        %2321 = vmatprep.subr.mxu0 0.0
        %2322 = vmatpush1.msra.mxu0 %v2256
        %2323 = vmatprep.subr.mxu0 0.0
        %2324 = vmatpush1.msra.mxu0 %v2255
        %2325 = vmatprep.subr.mxu0 0.0
        %2326 = vmatpush1.msra.mxu0 %v2254
        %2327 = vmatprep.subr.mxu0 0.0
        %2328 = vmatpush2.msra.mxu0 0.0
        %2329 = vmatprep.subr.mxu0 0.0
        %2330 = vmatpush2.msra.mxu0 0.0
        %2331 = vmatprep.subr.mxu0 0.0
        %2332 = vmatpush2.msra.mxu0 0.0
        %2333 = vmatprep.subr.mxu0 0.0
        %2334 = vmatpush2.msra.mxu0 0.0
        %2335 = vmatprep.subr.mxu0 0.0
        %2336 = vmatpush2.msra.mxu0 %v2281
        %2337 = vmatprep.subr.mxu0 0.0
        %2338 = vmatpush2.msra.mxu0 %v2280
        %2339 = vmatprep.subr.mxu0 0.0
        %2340 = vmatpush2.msra.mxu0 %v2279
        %2341 = vmatprep.subr.mxu0 0.0
        %2342 = vmatpush2.msra.mxu0 %v2278
        %2343 = vmatprep.subr.mxu0 0.0
        %2344 = vmatpush2.msra.mxu0 %v2277
        %2345 = vmatprep.subr.mxu0 0.0
        %2346 = vmatpush2.msra.mxu0 %v2276
        %2347 = vmatprep.subr.mxu0 0.0
        %2348 = vmatpush2.msra.mxu0 %v2275
        %2349 = vmatprep.subr.mxu0 0.0
        %2350 = vmatpush2.msra.mxu0 %v2274
        %2351 = vmatprep.subr.mxu0 0.0
        %2352 = vmatpush2.msra.mxu0 %v2273
        %2353 = vmatprep.subr.mxu0 0.0
        %2354 = vmatpush2.msra.mxu0 %v2272
        %2355 = vmatprep.subr.mxu0 0.0
        %2356 = vmatpush2.msra.mxu0 %v2271
        %2357 = vmatprep.subr.mxu0 0.0
        %2358 = vmatpush2.msra.mxu0 %v2270
        %2359 = vmatprep.mubr.f32.mxu0 %v2284
        %2360 = vmatmul.mubr.f32.gmra.mxu0 %v2242
        %v2361 = vpop.f32.mrf.mxu0
        %v2362 = vadd.f32 %v2282, %v2361
        %v2363 = vpop.f32.mrf.mxu0
        %2364 = vmatprep.mubr.f32.mxu0 %v2287
        %2365 = vmatmul.mubr.f32.gmra.mxu0 %v2243
        %v2366 = vpop.f32.mrf.mxu0
        %v2367 = vadd.f32 %v2282, %v2366
        %v2368 = vpop.f32.mrf.mxu0
        %2369 = vmatprep.mubr.f32.mxu0 %v2290
        %2370 = vmatmul.mubr.f32.gmra.mxu0 %v2244
        %v2371 = vpop.f32.mrf.mxu0
        %v2372 = vadd.f32 %v2282, %v2371
        %v2373 = vpop.f32.mrf.mxu0
        %2374 = vmatprep.mubr.f32.mxu0 %v2293
        %2375 = vmatmul.mubr.f32.gmra.mxu0 %v2245
        %v2376 = vpop.f32.mrf.mxu0
        %v2377 = vadd.f32 %v2282, %v2376
        %v2378 = vpop.f32.mrf.mxu0
        %2379 = vdwg.mxu0
        %v2380 = vxor.u32 %v2362, 2147483648
        %v2381 = vxor.u32 %v2367, 2147483648
        %v2382 = vxor.u32 %v2372, 2147483648
        %v2383 = vxor.u32 %v2377, 2147483648
        %v2384 = vmul.f32 %v2380, 1.442695
        %v2385 = vpow.pop %v2384
        %v2386 = vmul.f32 %v2381, 1.442695
        %v2387 = vpow.pop %v2386
        %v2388 = vmul.f32 %v2382, 1.442695
        %v2389 = vpow.pop %v2388
        %v2390 = vmul.f32 %v2383, 1.442695
        %v2391 = vpow.pop %v2390
        %v2392 = vadd.f32 %v2385, 1.0
        %v2393 = vadd.f32 %v2387, 1.0
        %v2394 = vadd.f32 %v2389, 1.0
        %v2395 = vadd.f32 %v2391, 1.0
        %v2396 = vrcp.pop %v2392
        %v2397 = vmul.f32 1.0, %v2396
        %v2398 = vrcp.pop %v2393
        %v2399 = vmul.f32 1.0, %v2398
        %v2400 = vrcp.pop %v2394
        %v2401 = vmul.f32 1.0, %v2400
        %v2402 = vrcp.pop %v2395
        %v2403 = vmul.f32 1.0, %v2402
        %v2404 = vld [vmem:[%s4] sm:$0xff]
        %v2405 = vld [vmem:[%s4 + $0x8] sm:$0xff]
        %v2406 = vld [vmem:[%s4 + $0x10] sm:$0xff]
        %v2407 = vld [vmem:[%s4 + $0x18] sm:$0xff]
        %v2409 = vsel %vm884, %v2088, 0
        %v2412 = vsel %vm884, %v2090, 0
        %v2415 = vsel %vm884, %v2092, 0
        %v2418 = vsel %vm884, %v2094, 0
        %2420 = vmatprep.subr.mxu0 0.0
        %2421 = vmatpush1.msra.mxu0 0.0
        %2422 = vmatprep.subr.mxu0 0.0
        %2423 = vmatpush1.msra.mxu0 0.0
        %2424 = vmatprep.subr.mxu0 0.0
        %2425 = vmatpush1.msra.mxu0 0.0
        %2426 = vmatprep.subr.mxu0 0.0
        %2427 = vmatpush1.msra.mxu0 0.0
        %2428 = vmatprep.subr.mxu0 0.0
        %2429 = vmatpush1.msra.mxu0 0.0
        %2430 = vmatprep.subr.mxu0 0.0
        %2431 = vmatpush1.msra.mxu0 0.0
        %2432 = vmatprep.subr.mxu0 0.0
        %2433 = vmatpush1.msra.mxu0 0.0
        %2434 = vmatprep.subr.mxu0 0.0
        %2435 = vmatpush1.msra.mxu0 0.0
        %2436 = vmatprep.subr.mxu0 0.0
        %2437 = vmatpush1.msra.mxu0 0.0
        %2438 = vmatprep.subr.mxu0 0.0
        %2439 = vmatpush1.msra.mxu0 0.0
        %2440 = vmatprep.subr.mxu0 0.0
        %2441 = vmatpush1.msra.mxu0 0.0
        %2442 = vmatprep.subr.mxu0 0.0
        %2443 = vmatpush1.msra.mxu0 0.0
        %2444 = vmatprep.subr.mxu0 0.0
        %2445 = vmatpush1.msra.mxu0 0.0
        %2446 = vmatprep.subr.mxu0 0.0
        %2447 = vmatpush1.msra.mxu0 0.0
        %2448 = vmatprep.subr.mxu0 %v2407
        %2449 = vmatpush1.msra.mxu0 %v2406
        %2450 = vmatprep.subr.mxu0 %v2405
        %2451 = vmatpush1.msra.mxu0 %v2404
        %2452 = vmatprep.subr.mxu0 0.0
        %2453 = vmatpush2.msra.mxu0 0.0
        %2454 = vmatprep.subr.mxu0 0.0
        %2455 = vmatpush2.msra.mxu0 0.0
        %2456 = vmatprep.subr.mxu0 0.0
        %2457 = vmatpush2.msra.mxu0 0.0
        %2458 = vmatprep.subr.mxu0 0.0
        %2459 = vmatpush2.msra.mxu0 0.0
        %2460 = vmatprep.subr.mxu0 0.0
        %2461 = vmatpush2.msra.mxu0 0.0
        %2462 = vmatprep.subr.mxu0 0.0
        %2463 = vmatpush2.msra.mxu0 0.0
        %2464 = vmatprep.subr.mxu0 0.0
        %2465 = vmatpush2.msra.mxu0 0.0
        %2466 = vmatprep.subr.mxu0 0.0
        %2467 = vmatpush2.msra.mxu0 0.0
        %2468 = vmatprep.subr.mxu0 0.0
        %2469 = vmatpush2.msra.mxu0 0.0
        %2470 = vmatprep.subr.mxu0 0.0
        %2471 = vmatpush2.msra.mxu0 0.0
        %2472 = vmatprep.subr.mxu0 0.0
        %2473 = vmatpush2.msra.mxu0 0.0
        %2474 = vmatprep.subr.mxu0 0.0
        %2475 = vmatpush2.msra.mxu0 0.0
        %2476 = vmatprep.subr.mxu0 0.0
        %2477 = vmatpush2.msra.mxu0 0.0
        %2478 = vmatprep.subr.mxu0 0.0
        %2479 = vmatpush2.msra.mxu0 0.0
        %2480 = vmatprep.subr.mxu0 0.0
        %2481 = vmatpush2.msra.mxu0 0.0
        %2482 = vmatprep.subr.mxu0 0.0
        %2483 = vmatpush2.msra.mxu0 0.0
        %2484 = vmatprep.mubr.f32.mxu0 0.0
        %2485 = vmatmul.mubr.f32.gmra.mxu0 %v2409
        %v2486 = vpop.f32.mrf.mxu0
        %v2487 = vadd.f32 0.0, %v2486
        %v2488 = vpop.f32.mrf.mxu0
        %v2489 = vadd.f32 0.0, %v2488
        %2490 = vmatprep.mubr.f32.mxu0 0.0
        %2491 = vmatmul.mubr.f32.gmra.mxu0 %v2412
        %v2492 = vpop.f32.mrf.mxu0
        %v2493 = vadd.f32 0.0, %v2492
        %v2494 = vpop.f32.mrf.mxu0
        %v2495 = vadd.f32 0.0, %v2494
        %2496 = vmatprep.mubr.f32.mxu0 0.0
        %2497 = vmatmul.mubr.f32.gmra.mxu0 %v2415
        %v2498 = vpop.f32.mrf.mxu0
        %v2499 = vadd.f32 0.0, %v2498
        %v2500 = vpop.f32.mrf.mxu0
        %v2501 = vadd.f32 0.0, %v2500
        %2502 = vmatprep.mubr.f32.mxu0 0.0
        %2503 = vmatmul.mubr.f32.gmra.mxu0 %v2418
        %v2504 = vpop.f32.mrf.mxu0
        %v2505 = vadd.f32 0.0, %v2504
        %v2506 = vpop.f32.mrf.mxu0
        %v2507 = vadd.f32 0.0, %v2506
        %2508 = vdwg.mxu0
        %v2509 = vlaneseq
        %v2510 = vshrl.u32 %v2509, 7
        %v2511 = vsub.s32 0, %v2510
        %v2512 = vrot.slane %v1774, %v2511
        %v2513 = vlaneseq
        %v2514 = vshrl.u32 %v2513, 7
        %v2515 = vsub.s32 0, %v2514
        %v2516 = vrot.slane %v1776, %v2515
        %v2517 = vadd.f32 %v2512, %v2487
        %v2518 = vadd.f32 %v2516, %v2489
        %v2519 = vadd.f32 %v2512, %v2493
        %v2520 = vadd.f32 %v2516, %v2495
        %v2521 = vadd.f32 %v2512, %v2499
        %v2522 = vadd.f32 %v2516, %v2501
        %v2523 = vadd.f32 %v2512, %v2505
        %v2524 = vadd.f32 %v2516, %v2507
        %v2525 = vld [vmem:[%s5] sm:$0xff]
        %v2526 = vld [vmem:[%s5 + $0x8] sm:$0xff]
        %v2527 = vld [vmem:[%s5 + $0x10] sm:$0xff]
        %v2528 = vld [vmem:[%s5 + $0x18] sm:$0xff]
        %v2530 = vsel %vm884, %v2397, 0
        %v2533 = vsel %vm884, %v2399, 0
        %v2536 = vsel %vm884, %v2401, 0
        %v2539 = vsel %vm884, %v2403, 0
        %2541 = vmatprep.subr.mxu0 0.0
        %2542 = vmatpush1.msra.mxu0 0.0
        %2543 = vmatprep.subr.mxu0 0.0
        %2544 = vmatpush1.msra.mxu0 0.0
        %2545 = vmatprep.subr.mxu0 0.0
        %2546 = vmatpush1.msra.mxu0 0.0
        %2547 = vmatprep.subr.mxu0 0.0
        %2548 = vmatpush1.msra.mxu0 0.0
        %2549 = vmatprep.subr.mxu0 0.0
        %2550 = vmatpush1.msra.mxu0 0.0
        %2551 = vmatprep.subr.mxu0 0.0
        %2552 = vmatpush1.msra.mxu0 0.0
        %2553 = vmatprep.subr.mxu0 0.0
        %2554 = vmatpush1.msra.mxu0 0.0
        %2555 = vmatprep.subr.mxu0 0.0
        %2556 = vmatpush1.msra.mxu0 0.0
        %2557 = vmatprep.subr.mxu0 0.0
        %2558 = vmatpush1.msra.mxu0 0.0
        %2559 = vmatprep.subr.mxu0 0.0
        %2560 = vmatpush1.msra.mxu0 0.0
        %2561 = vmatprep.subr.mxu0 0.0
        %2562 = vmatpush1.msra.mxu0 0.0
        %2563 = vmatprep.subr.mxu0 0.0
        %2564 = vmatpush1.msra.mxu0 0.0
        %2565 = vmatprep.subr.mxu0 0.0
        %2566 = vmatpush1.msra.mxu0 0.0
        %2567 = vmatprep.subr.mxu0 0.0
        %2568 = vmatpush1.msra.mxu0 0.0
        %2569 = vmatprep.subr.mxu0 %v2528
        %2570 = vmatpush1.msra.mxu0 %v2527
        %2571 = vmatprep.subr.mxu0 %v2526
        %2572 = vmatpush1.msra.mxu0 %v2525
        %2573 = vmatprep.subr.mxu0 0.0
        %2574 = vmatpush2.msra.mxu0 0.0
        %2575 = vmatprep.subr.mxu0 0.0
        %2576 = vmatpush2.msra.mxu0 0.0
        %2577 = vmatprep.subr.mxu0 0.0
        %2578 = vmatpush2.msra.mxu0 0.0
        %2579 = vmatprep.subr.mxu0 0.0
        %2580 = vmatpush2.msra.mxu0 0.0
        %2581 = vmatprep.subr.mxu0 0.0
        %2582 = vmatpush2.msra.mxu0 0.0
        %2583 = vmatprep.subr.mxu0 0.0
        %2584 = vmatpush2.msra.mxu0 0.0
        %2585 = vmatprep.subr.mxu0 0.0
        %2586 = vmatpush2.msra.mxu0 0.0
        %2587 = vmatprep.subr.mxu0 0.0
        %2588 = vmatpush2.msra.mxu0 0.0
        %2589 = vmatprep.subr.mxu0 0.0
        %2590 = vmatpush2.msra.mxu0 0.0
        %2591 = vmatprep.subr.mxu0 0.0
        %2592 = vmatpush2.msra.mxu0 0.0
        %2593 = vmatprep.subr.mxu0 0.0
        %2594 = vmatpush2.msra.mxu0 0.0
        %2595 = vmatprep.subr.mxu0 0.0
        %2596 = vmatpush2.msra.mxu0 0.0
        %2597 = vmatprep.subr.mxu0 0.0
        %2598 = vmatpush2.msra.mxu0 0.0
        %2599 = vmatprep.subr.mxu0 0.0
        %2600 = vmatpush2.msra.mxu0 0.0
        %2601 = vmatprep.subr.mxu0 0.0
        %2602 = vmatpush2.msra.mxu0 0.0
        %2603 = vmatprep.subr.mxu0 0.0
        %2604 = vmatpush2.msra.mxu0 0.0
        %2605 = vmatprep.mubr.f32.mxu0 0.0
        %2606 = vmatmul.mubr.f32.gmra.mxu0 %v2530
        %v2607 = vpop.f32.mrf.mxu0
        %v2608 = vadd.f32 0.0, %v2607
        %v2609 = vpop.f32.mrf.mxu0
        %v2610 = vadd.f32 0.0, %v2609
        %2611 = vmatprep.mubr.f32.mxu0 0.0
        %2612 = vmatmul.mubr.f32.gmra.mxu0 %v2533
        %v2613 = vpop.f32.mrf.mxu0
        %v2614 = vadd.f32 0.0, %v2613
        %v2615 = vpop.f32.mrf.mxu0
        %v2616 = vadd.f32 0.0, %v2615
        %2617 = vmatprep.mubr.f32.mxu0 0.0
        %2618 = vmatmul.mubr.f32.gmra.mxu0 %v2536
        %v2619 = vpop.f32.mrf.mxu0
        %v2620 = vadd.f32 0.0, %v2619
        %v2621 = vpop.f32.mrf.mxu0
        %v2622 = vadd.f32 0.0, %v2621
        %2623 = vmatprep.mubr.f32.mxu0 0.0
        %2624 = vmatmul.mubr.f32.gmra.mxu0 %v2539
        %v2625 = vpop.f32.mrf.mxu0
        %v2626 = vadd.f32 0.0, %v2625
        %v2627 = vpop.f32.mrf.mxu0
        %v2628 = vadd.f32 0.0, %v2627
        %2629 = vdwg.mxu0
        %v2630 = vadd.f32 %v2517, %v2608
        %v2631 = vadd.f32 %v2518, %v2610
        %v2632 = vadd.f32 %v2519, %v2614
        %v2633 = vadd.f32 %v2520, %v2616
        %v2634 = vadd.f32 %v2521, %v2620
        %v2635 = vadd.f32 %v2522, %v2622
        %v2636 = vadd.f32 %v2523, %v2626
        %v2637 = vadd.f32 %v2524, %v2628
        %v2638 = vld [vmem:[#allocation2] sm:$0xff]
        %v2639 = vld [vmem:[#allocation2 + $0x10] sm:$0xff]
        %v2640 = vld [vmem:[#allocation2 + $0x20] sm:$0xff]
        %v2641 = vld [vmem:[#allocation2 + $0x30] sm:$0xff]
        %v2642 = vmul.f32 %v2638, %v2630
        %v2643 = vmul.f32 %v1159, %v2631
        %v2644 = vmul.f32 %v2639, %v2632
        %v2645 = vmul.f32 %v1160, %v2633
        %v2646 = vmul.f32 %v2640, %v2634
        %v2647 = vmul.f32 %v1161, %v2635
        %v2648 = vmul.f32 %v2641, %v2636
        %v2649 = vmul.f32 %v1162, %v2637
        %v2650 = vld [vmem:[%s9] sm:$0xff]
        %v2651 = vld [vmem:[%s9 + $0x8] sm:$0xff]
        %v2652 = vld [vmem:[%s9 + $0x10] sm:$0xff]
        %v2653 = vld [vmem:[%s9 + $0x18] sm:$0xff]
        %v2654 = vld [vmem:[%s10] sm:$0xff]
        %v2655 = vld [vmem:[%s10 + $0x8] sm:$0xff]
        %v2656 = vld [vmem:[%s10 + $0x10] sm:$0xff]
        %v2657 = vld [vmem:[%s10 + $0x18] sm:$0xff]
        %2659 = vset.pattern.permute.xlu0 0
        %2660 = vperm.xlu0 %2659, %v2654
        %v2661 = vpop.permute.xlu0 %2660
        %2664 = vset.pattern.permute.xlu0 0
        %2665 = vperm.xlu0 %2664, %v2655
        %v2666 = vpop.permute.xlu0 %2665
        %2669 = vset.pattern.permute.xlu0 0
        %2670 = vperm.xlu0 %2669, %v2656
        %v2671 = vpop.permute.xlu0 %2670
        %2674 = vset.pattern.permute.xlu0 0
        %2675 = vperm.xlu0 %2674, %v2657
        %v2676 = vpop.permute.xlu0 %2675
        %v2679 = vsel %vm1922, %v2650, 0
        %v2682 = vsel %vm1922, %v2651, 0
        %v2685 = vsel %vm1922, %v2652, 0
        %v2688 = vsel %vm1922, %v2653, 0
        %2690 = vmatprep.subr.mxu0 0.0
        %2691 = vmatpush1.msra.mxu0 0.0
        %2692 = vmatprep.subr.mxu0 0.0
        %2693 = vmatpush1.msra.mxu0 0.0
        %2694 = vmatprep.subr.mxu0 0.0
        %2695 = vmatpush1.msra.mxu0 0.0
        %2696 = vmatprep.subr.mxu0 0.0
        %2697 = vmatpush1.msra.mxu0 0.0
        %2698 = vmatprep.subr.mxu0 0.0
        %2699 = vmatpush1.msra.mxu0 0.0
        %2700 = vmatprep.subr.mxu0 0.0
        %2701 = vmatpush1.msra.mxu0 0.0
        %2702 = vmatprep.subr.mxu0 0.0
        %2703 = vmatpush1.msra.mxu0 0.0
        %2704 = vmatprep.subr.mxu0 0.0
        %2705 = vmatpush1.msra.mxu0 0.0
        %2706 = vmatprep.subr.mxu0 0.0
        %2707 = vmatpush1.msra.mxu0 0.0
        %2708 = vmatprep.subr.mxu0 0.0
        %2709 = vmatpush1.msra.mxu0 0.0
        %2710 = vmatprep.subr.mxu0 0.0
        %2711 = vmatpush1.msra.mxu0 0.0
        %2712 = vmatprep.subr.mxu0 0.0
        %2713 = vmatpush1.msra.mxu0 0.0
        %2714 = vmatprep.subr.mxu0 %v2649
        %2715 = vmatpush1.msra.mxu0 %v2648
        %2716 = vmatprep.subr.mxu0 %v2647
        %2717 = vmatpush1.msra.mxu0 %v2646
        %2718 = vmatprep.subr.mxu0 %v2645
        %2719 = vmatpush1.msra.mxu0 %v2644
        %2720 = vmatprep.subr.mxu0 %v2643
        %2721 = vmatpush1.msra.mxu0 %v2642
        %2722 = vmatprep.subr.mxu0 0.0
        %2723 = vmatpush2.msra.mxu0 0.0
        %2724 = vmatprep.subr.mxu0 0.0
        %2725 = vmatpush2.msra.mxu0 0.0
        %2726 = vmatprep.subr.mxu0 0.0
        %2727 = vmatpush2.msra.mxu0 0.0
        %2728 = vmatprep.subr.mxu0 0.0
        %2729 = vmatpush2.msra.mxu0 0.0
        %2730 = vmatprep.subr.mxu0 0.0
        %2731 = vmatpush2.msra.mxu0 0.0
        %2732 = vmatprep.subr.mxu0 0.0
        %2733 = vmatpush2.msra.mxu0 0.0
        %2734 = vmatprep.subr.mxu0 0.0
        %2735 = vmatpush2.msra.mxu0 0.0
        %2736 = vmatprep.subr.mxu0 0.0
        %2737 = vmatpush2.msra.mxu0 0.0
        %2738 = vmatprep.subr.mxu0 0.0
        %2739 = vmatpush2.msra.mxu0 0.0
        %2740 = vmatprep.subr.mxu0 0.0
        %2741 = vmatpush2.msra.mxu0 0.0
        %2742 = vmatprep.subr.mxu0 0.0
        %2743 = vmatpush2.msra.mxu0 0.0
        %2744 = vmatprep.subr.mxu0 0.0
        %2745 = vmatpush2.msra.mxu0 0.0
        %2746 = vmatprep.subr.mxu0 0.0
        %2747 = vmatpush2.msra.mxu0 0.0
        %2748 = vmatprep.subr.mxu0 0.0
        %2749 = vmatpush2.msra.mxu0 0.0
        %2750 = vmatprep.subr.mxu0 0.0
        %2751 = vmatpush2.msra.mxu0 0.0
        %2752 = vmatprep.subr.mxu0 0.0
        %2753 = vmatpush2.msra.mxu0 0.0
        %2754 = vmatprep.mubr.f32.mxu0 0.0
        %2755 = vmatmul.mubr.f32.gmra.mxu0 %v2679
        %v2756 = vpop.f32.mrf.mxu0
        %v2757 = vadd.f32 %v2661, %v2756
        %v2758 = vpop.f32.mrf.mxu0
        %v2759 = vadd.f32 %v2661, %v2758
        %2760 = vmatprep.mubr.f32.mxu0 0.0
        %2761 = vmatmul.mubr.f32.gmra.mxu0 %v2682
        %v2762 = vpop.f32.mrf.mxu0
        %v2763 = vadd.f32 %v2666, %v2762
        %v2764 = vpop.f32.mrf.mxu0
        %v2765 = vadd.f32 %v2666, %v2764
        %2766 = vmatprep.mubr.f32.mxu0 0.0
        %2767 = vmatmul.mubr.f32.gmra.mxu0 %v2685
        %v2768 = vpop.f32.mrf.mxu0
        %v2769 = vadd.f32 %v2671, %v2768
        %v2770 = vpop.f32.mrf.mxu0
        %v2771 = vadd.f32 %v2671, %v2770
        %2772 = vmatprep.mubr.f32.mxu0 0.0
        %2773 = vmatmul.mubr.f32.gmra.mxu0 %v2688
        %v2774 = vpop.f32.mrf.mxu0
        %v2775 = vadd.f32 %v2676, %v2774
        %v2776 = vpop.f32.mrf.mxu0
        %v2777 = vadd.f32 %v2676, %v2776
        %2778 = vdwg.mxu0
        %v2779 = vld [vmem:[%s422] sm:$0xff]
        %v2780 = vld [vmem:[%s422 + $0x8] sm:$0xff]
        %v2781 = vld [vmem:[%s422 + $0x10] sm:$0xff]
        %v2782 = vld [vmem:[%s422 + $0x18] sm:$0xff]
        %v2783 = vld [vmem:[%s422 + $0x20] sm:$0xff]
        %v2784 = vld [vmem:[%s422 + $0x28] sm:$0xff]
        %v2785 = vld [vmem:[%s422 + $0x30] sm:$0xff]
        %v2786 = vld [vmem:[%s422 + $0x38] sm:$0xff]
        %v2787 = vmax.f32 %v2757, 0.0
        %v2788 = vmax.f32 %v2759, 0.0
        %v2789 = vmax.f32 %v2763, 0.0
        %v2790 = vmax.f32 %v2765, 0.0
        %v2791 = vmax.f32 %v2769, 0.0
        %v2792 = vmax.f32 %v2771, 0.0
        %v2793 = vmax.f32 %v2775, 0.0
        %v2794 = vmax.f32 %v2777, 0.0
        %v2795 = vadd.f32 %v2779, %v2787
        %v2796 = vadd.f32 %v2780, %v2788
        %v2797 = vadd.f32 %v2781, %v2789
        %v2798 = vadd.f32 %v2782, %v2790
        %v2799 = vadd.f32 %v2783, %v2791
        %v2800 = vadd.f32 %v2784, %v2792
        %v2801 = vadd.f32 %v2785, %v2793
        %v2802 = vadd.f32 %v2786, %v2794
        %2803 = vst [vmem:[%s427] sm:$0xff] %v2795
        %2804 = vst [vmem:[%s427 + $0x8] sm:$0xff] %v2796
        %2805 = vst [vmem:[%s427 + $0x10] sm:$0xff] %v2797
        %2806 = vst [vmem:[%s427 + $0x18] sm:$0xff] %v2798
        %2807 = vst [vmem:[%s427 + $0x20] sm:$0xff] %v2799
        %2808 = vst [vmem:[%s427 + $0x28] sm:$0xff] %v2800
        %2809 = vst [vmem:[%s427 + $0x30] sm:$0xff] %v2801
        %2810 = vst [vmem:[%s427 + $0x38] sm:$0xff] %v2802
        %p2811 = scmp.lt.s32.totalorder %s24, 1
        %s2812 = scalar_select %p2811, %s24, 1
        %s2813 = smul.addr %s2812, 8
        %s2814 = smul.addr %s2813, 8
        %s2815 = scalar_lea.vmem %s12, %s2814
        // Predicated region
        $region73: #{res_ta_forward.1} parent=67 // pred_check
          %p2816 = pneg %p299
        $region74: #{res_ta_forward.1} parent=67 // pred_check_branch
          %2818 = sbr.rel (%p2816) target = $region76
        $region75: #{res_ta_forward.1} parent=67 // pred_region
          _
        $region76: #{res_ta_forward.1} parent=67 // pred_fallthru
          _
      $region68: #{res_ta_forward.1} parent=5 // pred_fallthru
        _
      %p2819 = scmp.le.s32.totalorder 2, %s19
      // Predicated region
      $region77: #{res_ta_forward.1} parent=5 // pred_check
        %p2820 = pneg %p2819
      $region78: #{res_ta_forward.1} parent=5 // pred_check_branch
        %2822 = sbr.rel (%p2820) target = $region80
      $region79: #{res_ta_forward.1} parent=5 // pred_region
        %s2823 = ssub.s32 %s19, 2
        // Predicated region
        $region81: #{res_ta_forward.1} parent=79 // pred_check
          %p2824 = pneg %p305
        $region82: #{res_ta_forward.1} parent=79 // pred_check_branch
          %2826 = sbr.rel (%p2824) target = $region84
        $region83: #{res_ta_forward.1} parent=79 // pred_region
          %p2827 = scmp.lt.s32.totalorder %s25, 1
          %s2828 = scalar_select %p2827, %s25, 1
          %s2829 = smul.addr %s2828, 8
          %s2830 = smul.addr %s2829, 8
          %s2831 = scalar_lea.vmem %s12, %s2830
        $region84: #{res_ta_forward.1} parent=79 // pred_fallthru
          _
      $region80: #{res_ta_forward.1} parent=5 // pred_fallthru
        _
    $region6: #{res_ta_forward.1} parent=1 // loop_footer
      %s23 = sadd.s32 1, %s19
    $region7: #{res_ta_forward.1} parent=1 // loop_footer_branch
      %18 = sbr.rel target = $region3
    $region8: #{res_ta_forward.1} parent=1 // loop_exit
      _
    %2832 = vsyncpa [#allocation4], 1
    %s2833 = scalar_lea.sflag [#allocation4], 1
    %2834 = vsyncpa %s2833, 1

</llo_original>
